<compile_context>
chip_gen: v5e
topology: v5e:2x2
jax: 0.10.0
libtpu: 0.0.40
codegen_flags: <defaults>
</compile_context>

<pallas_src>
import jax
import jax.numpy as jnp
from jax import lax
from jax.experimental import pallas as pl
from jax.experimental.pallas import tpu as pltpu

SIZE_EMBEDDING = 152  # matches `size_embedding` in the reference module

# tile targets (sized for v7x's 64 MiB/TC VMEM; v5e/v6e have more headroom)
TN_TARGET = 512    # node tile (sublane-aligned)
TE_TARGET = 1024   # edge tile (lane-aligned)

_VMEM_LIMIT = 48 * 1024 * 1024


def _rup(x, m):
    return (x + m - 1) // m * m


def _pad2(a, rows, cols):
    return jnp.pad(a, ((0, rows - a.shape[0]), (0, cols - a.shape[1])))


def _tile_edges(n, target=TE_TARGET, align=128):
    """(tile, padded_total) with tile % 128 == 0 and padded % tile == 0."""
    n_al = _rup(max(n, 1), align)
    if n_al <= target:
        return n_al, n_al
    return target, _rup(n_al, target)


def _tile_nodes(n, target=TN_TARGET, align=8):
    """Node tiling; guarantees >=2 tiles when possible (v7x megacore)."""
    n_al = _rup(max(n, 1), align)
    tn = min(target, n_al)
    if n_al // tn < 2 and n_al >= 2 * align:
        tn = _rup((n_al + 1) // 2, align)
    return tn, _rup(n_al, tn)


# ---------------------------------------------------------------------------
# Kernel A: per-edge messages (computed exactly once per edge)
# ---------------------------------------------------------------------------
def message_kernel(hsrc_ref, ef_ref, wmn_ref, wme_ref, m_ref):
    m = (jnp.dot(hsrc_ref[...], wmn_ref[...], preferred_element_type=jnp.float32)
         + jnp.dot(ef_ref[...], wme_ref[...], preferred_element_type=jnp.float32))
    # bias b_m is applied (degree-gated) in the aggregation finalize
    m_ref[...] = m.astype(m_ref.dtype)


# ---------------------------------------------------------------------------
# Kernel B: mean aggregation (one-hot scatter matmul) + node update + relu
# ---------------------------------------------------------------------------
def agg_update_kernel(dst_ref, invdeg_ref, m_ref, h_ref,
                      bm_ref, wah_ref, wan_ref, ba_ref,
                      out_ref, acc_ref):
    i = pl.program_id(0)                    # node-tile index ("parallel")
    e = pl.program_id(1)                    # edge-tile index (reduction axis)
    tn = acc_ref.shape[0]

    @pl.when(e == 0)
    def _():
        acc_ref[...] = jnp.zeros_like(acc_ref)

    # (TN, TE) one-hot built from a (TN,1) column iota vs the (1,TE) dst row;
    # broadcasting produces the boolean directly (no (TN,TE) int32 iota).
    node_col = i * tn + lax.broadcasted_iota(jnp.int32, (tn, 1), 0)
    onehot = (node_col == dst_ref[...]).astype(jnp.bfloat16)        # (TN, TE)
    acc_ref[...] += jnp.dot(onehot, m_ref[...],
                            preferred_element_type=jnp.float32)

    @pl.when(e == pl.num_programs(1) - 1)
    def _():
        inv = invdeg_ref[...]                            # (TN, 1); 0 if deg==0
        gate = (inv > 0.0).astype(jnp.float32)           # (TN, 1)
        # mean over incoming edges; b_m folded in here, gated so isolated
        # nodes keep h_neigh = 0 (matches DGL mean-of-empty == 0).
        h_neigh = acc_ref[...] * inv + bm_ref[...] * gate
        z = (jnp.dot(h_ref[...], wah_ref[...],
                     preferred_element_type=jnp.float32)
             + jnp.dot(h_neigh.astype(jnp.bfloat16), wan_ref[...],
                       preferred_element_type=jnp.float32)
             + ba_ref[...])
        out_ref[...] = jnp.maximum(z, 0.0).astype(out_ref.dtype)


# ---------------------------------------------------------------------------
# One fused SAGE layer = message kernel + aggregate/update kernel
# ---------------------------------------------------------------------------
def sage_layer(h_pad, ef_pad, dst_row, inv_deg, src_pad,
               wmn, wme, bm, wah, wan, ba, *, tn, te, out_dtype):
    """h_pad:(N_pad,din_p) bf16, ef_pad:(E_pad,edim_p) bf16 -> (N_pad,dout_p)."""
    n_pad, din_p = h_pad.shape
    e_pad, edim_p = ef_pad.shape
    dout_p = wmn.shape[1]

    # src-gather of node features (graph glue).
    # TODO(synk): move in-kernel via scalar-prefetched src indices / DMA gather.
    hsrc = jnp.take(h_pad, src_pad, axis=0)                # (E_pad, din_p) bf16

    # ---- Kernel A: messages, once per edge ----
    m = pl.pallas_call(
        message_kernel,
        out_shape=jax.ShapeDtypeStruct((e_pad, dout_p), jnp.bfloat16),
        grid=(e_pad // te,),
        in_specs=[
            pl.BlockSpec((te, din_p), lambda e: (e, 0)),            # h[src]
            pl.BlockSpec((te, edim_p), lambda e: (e, 0)),           # e feats
            pl.BlockSpec((din_p, dout_p), lambda e: (0, 0)),        # Wm_node
            pl.BlockSpec((edim_p, dout_p), lambda e: (0, 0)),       # Wm_edge
        ],
        out_specs=pl.BlockSpec((te, dout_p), lambda e: (e, 0)),
        compiler_params=pltpu.CompilerParams(
            dimension_semantics=("parallel",),
            vmem_limit_bytes=_VMEM_LIMIT,
        ),
    )(hsrc, ef_pad, wmn, wme)

    # ---- Kernel B: one-hot scatter-mean + node update ----
    grid = (n_pad // tn, e_pad // te)
    return pl.pallas_call(
        agg_update_kernel,
        out_shape=jax.ShapeDtypeStruct((n_pad, dout_p), out_dtype),
        grid_spec=pltpu.PrefetchScalarGridSpec(
            num_scalar_prefetch=0,
            grid=grid,
            in_specs=[
                pl.BlockSpec((1, te), lambda i, e: (0, e)),            # dst ids
                pl.BlockSpec((tn, 1), lambda i, e: (i, 0)),            # 1/deg
                pl.BlockSpec((te, dout_p), lambda i, e: (e, 0)),       # messages
                pl.BlockSpec((tn, din_p), lambda i, e: (i, 0)),        # h (self)
                pl.BlockSpec((1, dout_p), lambda i, e: (0, 0)),        # b_m
                pl.BlockSpec((din_p, dout_p), lambda i, e: (0, 0)),    # Wa_h
                pl.BlockSpec((dout_p, dout_p), lambda i, e: (0, 0)),   # Wa_n
                pl.BlockSpec((1, dout_p), lambda i, e: (0, 0)),        # b_a
            ],
            out_specs=pl.BlockSpec((tn, dout_p), lambda i, e: (i, 0)),
            scratch_shapes=[pltpu.VMEM((tn, dout_p), jnp.float32)],
        ),
        compiler_params=pltpu.CompilerParams(
            dimension_semantics=("parallel", "arbitrary"),
            vmem_limit_bytes=_VMEM_LIMIT,
        ),
    )(dst_row, inv_deg, m, h_pad, bm, wah, wan, ba)


# ---------------------------------------------------------------------------
# Parameter init (PyTorch nn.Linear-style), padded + bf16-cast once at init
# ---------------------------------------------------------------------------
def init_linear(key, d_in, d_out):
    kw, kb = jax.random.split(key)
    bound = 1.0 / (d_in ** 0.5)
    w = jax.random.uniform(kw, (d_in, d_out), jnp.float32, -bound, bound)
    b = jax.random.uniform(kb, (d_out,), jnp.float32, -bound, bound)
    return w, b


def _layer_dims(ndim_in, ndim_out):
    return [(ndim_in, SIZE_EMBEDDING),
            (SIZE_EMBEDDING, SIZE_EMBEDDING),
            (SIZE_EMBEDDING, ndim_out)]


def init_sage_params(key, ndim_in, ndim_out, edim):
    params = []
    for din, dout in _layer_dims(ndim_in, ndim_out):
        key, k1, k2 = jax.random.split(key, 3)
        # W_msg : Linear(din + edim, dout) -> split into node / edge halves
        wm, bm = init_linear(k1, din + edim, dout)
        wm_node, wm_edge = wm[:din], wm[din:]
        # W_apply : Linear(din + dout, dout) -> split into self / neighbor halves
        wa, ba = init_linear(k2, din + dout, dout)
        wa_h, wa_n = wa[:din], wa[din:]

        din_p, edim_p, dout_p = _rup(din, 128), _rup(edim, 128), _rup(dout, 128)
        params.append((
            _pad2(wm_node, din_p, dout_p).astype(jnp.bfloat16),
            _pad2(wm_edge, edim_p, dout_p).astype(jnp.bfloat16),
            _pad2(bm.reshape(1, dout), 1, dout_p),                 # f32 bias
            _pad2(wa_h, din_p, dout_p).astype(jnp.bfloat16),
            _pad2(wa_n, dout_p, dout_p).astype(jnp.bfloat16),
            _pad2(ba.reshape(1, dout), 1, dout_p),                 # f32 bias
        ))
    return params


# ---------------------------------------------------------------------------
# Full SAGE forward
# ---------------------------------------------------------------------------
def sage_forward(params, nfeats, efeats, src, dst, ndim_out):
    """nfeats:(N,1,ndim_in), efeats:(E,1,edim) -> (N, ndim_out)."""
    n_nodes = nfeats.shape[0]
    n_edges = efeats.shape[0]
    h = nfeats.reshape(n_nodes, -1).astype(jnp.float32)
    ef = efeats.reshape(n_edges, -1).astype(jnp.float32)

    tn, n_pad = _tile_nodes(n_nodes)
    te, e_pad = _tile_edges(n_edges)

    # padded / cast-once graph tensors (shared by all three layers)
    edim_p = _rup(ef.shape[1], 128)
    ef_pad = _pad2(ef, e_pad, edim_p).astype(jnp.bfloat16)
    dst_row = jnp.full((1, e_pad), -1, jnp.int32).at[0, :n_edges].set(
        dst.astype(jnp.int32))                      # padded edges -> dst = -1
    src_pad = jnp.zeros((e_pad,), jnp.int32).at[:n_edges].set(
        src.astype(jnp.int32))
    deg = jnp.zeros((n_nodes,), jnp.float32).at[dst].add(1.0)
    inv_deg = jnp.where(deg > 0.0, 1.0 / jnp.maximum(deg, 1.0), 0.0)
    inv_deg = _pad2(inv_deg.reshape(n_nodes, 1), n_pad, 1)

    n_layers = len(params)
    h = h.astype(jnp.bfloat16)
    for li, (wmn, wme, bm, wah, wan, ba) in enumerate(params):
        # Dropout between layers is identity in eval-mode inference.
        din_p = wmn.shape[0]
        h = _pad2(h, n_pad, din_p)                  # no-op after the 1st layer
        out_dtype = jnp.float32 if li == n_layers - 1 else jnp.bfloat16
        h = sage_layer(h, ef_pad, dst_row, inv_deg, src_pad,
                       wmn, wme, bm, wah, wan, ba,
                       tn=tn, te=te, out_dtype=out_dtype)

    # final nfeats.sum(1): middle dim is singleton -> identity; strip padding.
    return h[:n_nodes, :ndim_out]


# pure-JAX f32 reference (same padded/bf16-rounded weight values, sliced back)
def sage_reference(params, nfeats, efeats, src, dst, ndim_in, ndim_out, edim):
    n_nodes = nfeats.shape[0]
    h = nfeats.reshape(n_nodes, -1).astype(jnp.float32)
    ef = efeats.reshape(efeats.shape[0], -1).astype(jnp.float32)
    deg = jnp.zeros((n_nodes,), jnp.float32).at[dst].add(1.0)
    for (wmn, wme, bm, wah, wan, ba), (din, dout) in zip(
            params, _layer_dims(ndim_in, ndim_out)):
        wmn_f = wmn[:din, :dout].astype(jnp.float32)
        wme_f = wme[:edim, :dout].astype(jnp.float32)
        wah_f = wah[:din, :dout].astype(jnp.float32)
        wan_f = wan[:dout, :dout].astype(jnp.float32)
        bm_f, ba_f = bm[0, :dout], ba[0, :dout]
        m = h[src] @ wmn_f + ef @ wme_f + bm_f
        agg = jnp.zeros((n_nodes, dout), jnp.float32).at[dst].add(m)
        h_neigh = agg / jnp.maximum(deg, 1.0)[:, None]
        h = jax.nn.relu(h @ wah_f + h_neigh @ wan_f + ba_f)
    return h


# ---------------------------------------------------------------------------
if __name__ == "__main__":
    key = jax.random.PRNGKey(0)

    # small graph consistent with the module's 3-D feature convention
    n_nodes, n_edges = 8, 16
    ndim_in, edim, ndim_out = 16, 16, 8

    k_nf, k_ef, k_src, k_dst, k_par = jax.random.split(key, 5)
    nfeats = jax.random.normal(k_nf, (n_nodes, 1, ndim_in), jnp.float32)
    efeats = jax.random.normal(k_ef, (n_edges, 1, edim), jnp.float32)
    src = jax.random.randint(k_src, (n_edges,), 0, n_nodes)
    dst = jax.random.randint(k_dst, (n_edges,), 0, n_nodes)

    params = init_sage_params(k_par, ndim_in, ndim_out, edim)

    fwd = jax.jit(lambda p, nf, e, s, d: sage_forward(p, nf, e, s, d, ndim_out))
    out = jax.block_until_ready(fwd(params, nfeats, efeats, src, dst))
    assert out.shape == (n_nodes, ndim_out)

    ref = sage_reference(params, nfeats, efeats, src, dst,
                         ndim_in, ndim_out, edim)
    assert jnp.allclose(out, ref, rtol=1e-1, atol=1e-1), "mismatch vs reference"

    print("KERNEL_OK")
</pallas_src>

<mosaic_0001>
module attributes {stable_mosaic.version = 11 : i64} {
  func.func @message_kernel(%arg0: i32, %arg1: memref<128x128xbf16, #tpu.memory_space<vmem>>, %arg2: memref<128x128xbf16, #tpu.memory_space<vmem>>, %arg3: memref<128x256xbf16, #tpu.memory_space<vmem>>, %arg4: memref<128x256xbf16, #tpu.memory_space<vmem>>, %arg5: memref<128x256xbf16, #tpu.memory_space<vmem>>) attributes {dimension_semantics = [#tpu.dimension_semantics<parallel>], iteration_bounds = array<i64: 1>, scalar_prefetch = 0 : i64, scratch_operands = 0 : i64, tpu.core_type = #tpu.core_type<tc>, window_params = [{transform_indices = @transform_0, window_bounds = array<i64: 128, 128>}, {transform_indices = @transform_1, window_bounds = array<i64: 128, 128>}, {pipeline_mode = #tpu.pipeline_mode<synchronous>, transform_indices = @transform_2, window_bounds = array<i64: 128, 256>}, {pipeline_mode = #tpu.pipeline_mode<synchronous>, transform_indices = @transform_3, window_bounds = array<i64: 128, 256>}, {transform_indices = @transform_4, window_bounds = array<i64: 128, 256>}]} {
    %c0 = arith.constant 0 : index
    %c0_0 = arith.constant 0 : index
    %0 = vector.load %arg1[%c0, %c0_0] : memref<128x128xbf16, #tpu.memory_space<vmem>>, vector<128x128xbf16>
    %c0_1 = arith.constant 0 : index
    %c0_2 = arith.constant 0 : index
    %1 = vector.load %arg3[%c0_1, %c0_2] : memref<128x256xbf16, #tpu.memory_space<vmem>>, vector<128x256xbf16>
    %cst = arith.constant dense<0.000000e+00> : vector<128x256xf32>
    %2 = tpu.matmul %0, %1, %cst {dimension_numbers = #tpu.dot_dimension_numbers<[1], [0], [0], [1], [0, 0, 1, 1], [], []>} : vector<128x128xbf16>, vector<128x256xbf16>, vector<128x256xf32> -> vector<128x256xf32>
    %c0_3 = arith.constant 0 : index
    %c0_4 = arith.constant 0 : index
    %3 = vector.load %arg2[%c0_3, %c0_4] : memref<128x128xbf16, #tpu.memory_space<vmem>>, vector<128x128xbf16>
    %c0_5 = arith.constant 0 : index
    %c0_6 = arith.constant 0 : index
    %4 = vector.load %arg4[%c0_5, %c0_6] : memref<128x256xbf16, #tpu.memory_space<vmem>>, vector<128x256xbf16>
    %cst_7 = arith.constant dense<0.000000e+00> : vector<128x256xf32>
    %5 = tpu.matmul %3, %4, %cst_7 {dimension_numbers = #tpu.dot_dimension_numbers<[1], [0], [0], [1], [0, 0, 1, 1], [], []>} : vector<128x128xbf16>, vector<128x256xbf16>, vector<128x256xf32> -> vector<128x256xf32>
    %6 = arith.addf %2, %5 : vector<128x256xf32>
    %7 = arith.truncf %6 : vector<128x256xf32> to vector<128x256xbf16>
    %c0_8 = arith.constant 0 : index
    %c0_9 = arith.constant 0 : index
    %8 = vector.load %arg5[%c0_8, %c0_9] : memref<128x256xbf16, #tpu.memory_space<vmem>>, vector<128x256xbf16>
    tpu.vector_store %arg5[%c0_8, %c0_9], %7 {strides = array<i32>} : memref<128x256xbf16, #tpu.memory_space<vmem>>, vector<128x256xbf16>,
    return
  }
  func.func @transform_0(%arg0: i32) -> (i32, i32) {
    %c0_i32 = arith.constant 0 : i32
    %c0_i32_0 = arith.constant 0 : i32
    return %arg0, %c0_i32 : i32, i32
  }
  func.func @transform_1(%arg0: i32) -> (i32, i32) {
    %c0_i32 = arith.constant 0 : i32
    %c0_i32_0 = arith.constant 0 : i32
    return %arg0, %c0_i32 : i32, i32
  }
  func.func @transform_2(%arg0: i32) -> (i32, i32) {
    %c0_i32 = arith.constant 0 : i32
    %c0_i32_0 = arith.constant 0 : i32
    %c0_i32_1 = arith.constant 0 : i32
    return %c0_i32, %c0_i32_0 : i32, i32
  }
  func.func @transform_3(%arg0: i32) -> (i32, i32) {
    %c0_i32 = arith.constant 0 : i32
    %c0_i32_0 = arith.constant 0 : i32
    %c0_i32_1 = arith.constant 0 : i32
    return %c0_i32, %c0_i32_0 : i32, i32
  }
  func.func @transform_4(%arg0: i32) -> (i32, i32) {
    %c0_i32 = arith.constant 0 : i32
    %c0_i32_0 = arith.constant 0 : i32
    return %arg0, %c0_i32 : i32, i32
  }
}

module attributes {stable_mosaic.version = 11 : i64} {
  func.func @agg_update_kernel(%arg0: i32, %arg1: i32, %arg2: memref<1x128xi32, #tpu.memory_space<vmem>>, %arg3: memref<8x1xf32, #tpu.memory_space<vmem>>, %arg4: memref<128x256xbf16, #tpu.memory_space<vmem>>, %arg5: memref<8x128xbf16, #tpu.memory_space<vmem>>, %arg6: memref<1x256xf32, #tpu.memory_space<vmem>>, %arg7: memref<128x256xbf16, #tpu.memory_space<vmem>>, %arg8: memref<256x256xbf16, #tpu.memory_space<vmem>>, %arg9: memref<1x256xf32, #tpu.memory_space<vmem>>, %arg10: memref<8x256xbf16, #tpu.memory_space<vmem>>, %arg11: memref<8x256xf32, #tpu.memory_space<vmem>>) attributes {dimension_semantics = [#tpu.dimension_semantics<parallel>, #tpu.dimension_semantics<arbitrary>], iteration_bounds = array<i64: 1, 1>, scalar_prefetch = 0 : i64, scratch_operands = 1 : i64, tpu.core_type = #tpu.core_type<tc>, window_params = [{transform_indices = @transform_0, window_bounds = array<i64: 1, 128>}, {transform_indices = @transform_1, window_bounds = array<i64: 8, 1>}, {transform_indices = @transform_2, window_bounds = array<i64: 128, 256>}, {transform_indices = @transform_3, window_bounds = array<i64: 8, 128>}, {pipeline_mode = #tpu.pipeline_mode<synchronous>, transform_indices = @transform_4, window_bounds = array<i64: 1, 256>}, {pipeline_mode = #tpu.pipeline_mode<synchronous>, transform_indices = @transform_5, window_bounds = array<i64: 128, 256>}, {pipeline_mode = #tpu.pipeline_mode<synchronous>, transform_indices = @transform_6, window_bounds = array<i64: 256, 256>}, {pipeline_mode = #tpu.pipeline_mode<synchronous>, transform_indices = @transform_7, window_bounds = array<i64: 1, 256>}, {transform_indices = @transform_8, window_bounds = array<i64: 8, 256>}]} {
    %c0_i32 = arith.constant 0 : i32
    %0 = arith.cmpi eq, %arg1, %c0_i32 : i32
    %1 = arith.extui %0 : i1 to i32
    %c0_i32_0 = arith.constant 0 : i32
    %2 = arith.cmpi ne, %1, %c0_i32_0 : i32
    scf.if %2 {
      %cst_10 = arith.constant 0.000000e+00 : f32
      %22 = vector.broadcast %cst_10 : f32 to vector<8x256xf32>
      %c0_11 = arith.constant 0 : index
      %c0_12 = arith.constant 0 : index
      %23 = vector.load %arg11[%c0_11, %c0_12] : memref<8x256xf32, #tpu.memory_space<vmem>>, vector<8x256xf32>
      tpu.vector_store %arg11[%c0_11, %c0_12], %22 {strides = array<i32>} : memref<8x256xf32, #tpu.memory_space<vmem>>, vector<8x256xf32>,
    } else {
    }
    %c8_i32 = arith.constant 8 : i32
    %3 = arith.muli %arg0, %c8_i32 : i32
    %4 = tpu.iota {dimensions = array<i32: 0>} : vector<8x1xi32>
    %5 = vector.broadcast %3 : i32 to vector<8x1xi32>
    %6 = arith.addi %5, %4 : vector<8x1xi32>
    %c0 = arith.constant 0 : index
    %c0_1 = arith.constant 0 : index
    %7 = vector.load %arg2[%c0, %c0_1] : memref<1x128xi32, #tpu.memory_space<vmem>>, vector<1x128xi32>
    %8 = vector.broadcast %6 : vector<8x1xi32> to vector<8x128xi32>
    %9 = vector.broadcast %7 : vector<1x128xi32> to vector<8x128xi32>
    %10 = arith.cmpi eq, %8, %9 : vector<8x128xi32>
    %11 = arith.extui %10 : vector<8x128xi1> to vector<8x128xi32>
    %12 = arith.sitofp %11 : vector<8x128xi32> to vector<8x128xf32>
    %13 = arith.truncf %12 : vector<8x128xf32> to vector<8x128xbf16>
    %c0_2 = arith.constant 0 : index
    %c0_3 = arith.constant 0 : index
    %14 = vector.load %arg11[%c0_2, %c0_3] : memref<8x256xf32, #tpu.memory_space<vmem>>, vector<8x256xf32>
    %c0_4 = arith.constant 0 : index
    %c0_5 = arith.constant 0 : index
    %15 = vector.load %arg4[%c0_4, %c0_5] : memref<128x256xbf16, #tpu.memory_space<vmem>>, vector<128x256xbf16>
    %cst = arith.constant dense<0.000000e+00> : vector<8x256xf32>
    %16 = tpu.matmul %13, %15, %cst {dimension_numbers = #tpu.dot_dimension_numbers<[1], [0], [0], [1], [0, 0, 1, 1], [], []>} : vector<8x128xbf16>, vector<128x256xbf16>, vector<8x256xf32> -> vector<8x256xf32>
    %17 = arith.addf %14, %16 : vector<8x256xf32>
    %c0_6 = arith.constant 0 : index
    %c0_7 = arith.constant 0 : index
    %18 = vector.load %arg11[%c0_6, %c0_7] : memref<8x256xf32, #tpu.memory_space<vmem>>, vector<8x256xf32>
    tpu.vector_store %arg11[%c0_6, %c0_7], %17 {strides = array<i32>} : memref<8x256xf32, #tpu.memory_space<vmem>>, vector<8x256xf32>,
    %c0_i32_8 = arith.constant 0 : i32
    %19 = arith.cmpi eq, %arg1, %c0_i32_8 : i32
    %20 = arith.extui %19 : i1 to i32
    %c0_i32_9 = arith.constant 0 : i32
    %21 = arith.cmpi ne, %20, %c0_i32_9 : i32
    scf.if %21 {
      %c0_10 = arith.constant 0 : index
      %c0_11 = arith.constant 0 : index
      %22 = vector.load %arg3[%c0_10, %c0_11] : memref<8x1xf32, #tpu.memory_space<vmem>>, vector<8x1xf32>
      %cst_12 = arith.constant 0.000000e+00 : f32
      %23 = vector.broadcast %cst_12 : f32 to vector<8x1xf32>
      %24 = arith.cmpf ogt, %22, %23 : vector<8x1xf32>
      %25 = arith.extui %24 : vector<8x1xi1> to vector<8x1xi32>
      %26 = arith.sitofp %25 : vector<8x1xi32> to vector<8x1xf32>
      %c0_13 = arith.constant 0 : index
      %c0_14 = arith.constant 0 : index
      %27 = vector.load %arg11[%c0_13, %c0_14] : memref<8x256xf32, #tpu.memory_space<vmem>>, vector<8x256xf32>
      %28 = vector.broadcast %22 : vector<8x1xf32> to vector<8x256xf32>
      %29 = arith.mulf %27, %28 : vector<8x256xf32>
      %c0_15 = arith.constant 0 : index
      %c0_16 = arith.constant 0 : index
      %30 = vector.load %arg6[%c0_15, %c0_16] : memref<1x256xf32, #tpu.memory_space<vmem>>, vector<1x256xf32>
      %31 = vector.broadcast %30 : vector<1x256xf32> to vector<8x256xf32>
      %32 = vector.broadcast %26 : vector<8x1xf32> to vector<8x256xf32>
      %33 = arith.mulf %31, %32 : vector<8x256xf32>
      %34 = arith.addf %29, %33 : vector<8x256xf32>
      %c0_17 = arith.constant 0 : index
      %c0_18 = arith.constant 0 : index
      %35 = vector.load %arg5[%c0_17, %c0_18] : memref<8x128xbf16, #tpu.memory_space<vmem>>, vector<8x128xbf16>
      %c0_19 = arith.constant 0 : index
      %c0_20 = arith.constant 0 : index
      %36 = vector.load %arg7[%c0_19, %c0_20] : memref<128x256xbf16, #tpu.memory_space<vmem>>, vector<128x256xbf16>
      %cst_21 = arith.constant dense<0.000000e+00> : vector<8x256xf32>
      %37 = tpu.matmul %35, %36, %cst_21 {dimension_numbers = #tpu.dot_dimension_numbers<[1], [0], [0], [1], [0, 0, 1, 1], [], []>} : vector<8x128xbf16>, vector<128x256xbf16>, vector<8x256xf32> -> vector<8x256xf32>
      %38 = arith.truncf %34 : vector<8x256xf32> to vector<8x256xbf16>
      %c0_22 = arith.constant 0 : index
      %c0_23 = arith.constant 0 : index
      %39 = vector.load %arg8[%c0_22, %c0_23] : memref<256x256xbf16, #tpu.memory_space<vmem>>, vector<256x256xbf16>
      %cst_24 = arith.constant dense<0.000000e+00> : vector<8x256xf32>
      %40 = tpu.matmul %38, %39, %cst_24 {dimension_numbers = #tpu.dot_dimension_numbers<[1], [0], [0], [1], [0, 0, 1, 1], [], []>} : vector<8x256xbf16>, vector<256x256xbf16>, vector<8x256xf32> -> vector<8x256xf32>
      %41 = arith.addf %37, %40 : vector<8x256xf32>
      %c0_25 = arith.constant 0 : index
      %c0_26 = arith.constant 0 : index
      %42 = vector.load %arg9[%c0_25, %c0_26] : memref<1x256xf32, #tpu.memory_space<vmem>>, vector<1x256xf32>
      %43 = vector.broadcast %42 : vector<1x256xf32> to vector<8x256xf32>
      %44 = arith.addf %41, %43 : vector<8x256xf32>
      %cst_27 = arith.constant 0.000000e+00 : f32
      %45 = vector.broadcast %cst_27 : f32 to vector<8x256xf32>
      %46 = arith.maximumf %44, %45 : vector<8x256xf32>
      %47 = arith.truncf %46 : vector<8x256xf32> to vector<8x256xbf16>
      %c0_28 = arith.constant 0 : index
      %c0_29 = arith.constant 0 : index
      %48 = vector.load %arg10[%c0_28, %c0_29] : memref<8x256xbf16, #tpu.memory_space<vmem>>, vector<8x256xbf16>
      tpu.vector_store %arg10[%c0_28, %c0_29], %47 {strides = array<i32>} : memref<8x256xbf16, #tpu.memory_space<vmem>>, vector<8x256xbf16>,
    } else {
    }
    return
  }
  func.func @transform_0(%arg0: i32, %arg1: i32) -> (i32, i32) {
    %c0_i32 = arith.constant 0 : i32
    %c0_i32_0 = arith.constant 0 : i32
    return %c0_i32, %arg1 : i32, i32
  }
  func.func @transform_1(%arg0: i32, %arg1: i32) -> (i32, i32) {
    %c0_i32 = arith.constant 0 : i32
    %c0_i32_0 = arith.constant 0 : i32
    return %arg0, %c0_i32 : i32, i32
  }
  func.func @transform_2(%arg0: i32, %arg1: i32) -> (i32, i32) {
    %c0_i32 = arith.constant 0 : i32
    %c0_i32_0 = arith.constant 0 : i32
    return %arg1, %c0_i32 : i32, i32
  }
  func.func @transform_3(%arg0: i32, %arg1: i32) -> (i32, i32) {
    %c0_i32 = arith.constant 0 : i32
    %c0_i32_0 = arith.constant 0 : i32
    return %arg0, %c0_i32 : i32, i32
  }
  func.func @transform_4(%arg0: i32, %arg1: i32) -> (i32, i32) {
    %c0_i32 = arith.constant 0 : i32
    %c0_i32_0 = arith.constant 0 : i32
    %c0_i32_1 = arith.constant 0 : i32
    return %c0_i32, %c0_i32_0 : i32, i32
  }
  func.func @transform_5(%arg0: i32, %arg1: i32) -> (i32, i32) {
    %c0_i32 = arith.constant 0 : i32
    %c0_i32_0 = arith.constant 0 : i32
    %c0_i32_1 = arith.constant 0 : i32
    return %c0_i32, %c0_i32_0 : i32, i32
  }
  func.func @transform_6(%arg0: i32, %arg1: i32) -> (i32, i32) {
    %c0_i32 = arith.constant 0 : i32
    %c0_i32_0 = arith.constant 0 : i32
    %c0_i32_1 = arith.constant 0 : i32
    return %c0_i32, %c0_i32_0 : i32, i32
  }
  func.func @transform_7(%arg0: i32, %arg1: i32) -> (i32, i32) {
    %c0_i32 = arith.constant 0 : i32
    %c0_i32_0 = arith.constant 0 : i32
    %c0_i32_1 = arith.constant 0 : i32
    return %c0_i32, %c0_i32_0 : i32, i32
  }
  func.func @transform_8(%arg0: i32, %arg1: i32) -> (i32, i32) {
    %c0_i32 = arith.constant 0 : i32
    %c0_i32_0 = arith.constant 0 : i32
    return %arg0, %c0_i32 : i32, i32
  }
}

module attributes {stable_mosaic.version = 11 : i64} {
  func.func @message_kernel(%arg0: i32, %arg1: memref<128x256xbf16, #tpu.memory_space<vmem>>, %arg2: memref<128x128xbf16, #tpu.memory_space<vmem>>, %arg3: memref<256x256xbf16, #tpu.memory_space<vmem>>, %arg4: memref<128x256xbf16, #tpu.memory_space<vmem>>, %arg5: memref<128x256xbf16, #tpu.memory_space<vmem>>) attributes {dimension_semantics = [#tpu.dimension_semantics<parallel>], iteration_bounds = array<i64: 1>, scalar_prefetch = 0 : i64, scratch_operands = 0 : i64, tpu.core_type = #tpu.core_type<tc>, window_params = [{transform_indices = @transform_0, window_bounds = array<i64: 128, 256>}, {transform_indices = @transform_1, window_bounds = array<i64: 128, 128>}, {pipeline_mode = #tpu.pipeline_mode<synchronous>, transform_indices = @transform_2, window_bounds = array<i64: 256, 256>}, {pipeline_mode = #tpu.pipeline_mode<synchronous>, transform_indices = @transform_3, window_bounds = array<i64: 128, 256>}, {transform_indices = @transform_4, window_bounds = array<i64: 128, 256>}]} {
    %c0 = arith.constant 0 : index
    %c0_0 = arith.constant 0 : index
    %0 = vector.load %arg1[%c0, %c0_0] : memref<128x256xbf16, #tpu.memory_space<vmem>>, vector<128x256xbf16>
    %c0_1 = arith.constant 0 : index
    %c0_2 = arith.constant 0 : index
    %1 = vector.load %arg3[%c0_1, %c0_2] : memref<256x256xbf16, #tpu.memory_space<vmem>>, vector<256x256xbf16>
    %cst = arith.constant dense<0.000000e+00> : vector<128x256xf32>
    %2 = tpu.matmul %0, %1, %cst {dimension_numbers = #tpu.dot_dimension_numbers<[1], [0], [0], [1], [0, 0, 1, 1], [], []>} : vector<128x256xbf16>, vector<256x256xbf16>, vector<128x256xf32> -> vector<128x256xf32>
    %c0_3 = arith.constant 0 : index
    %c0_4 = arith.constant 0 : index
    %3 = vector.load %arg2[%c0_3, %c0_4] : memref<128x128xbf16, #tpu.memory_space<vmem>>, vector<128x128xbf16>
    %c0_5 = arith.constant 0 : index
    %c0_6 = arith.constant 0 : index
    %4 = vector.load %arg4[%c0_5, %c0_6] : memref<128x256xbf16, #tpu.memory_space<vmem>>, vector<128x256xbf16>
    %cst_7 = arith.constant dense<0.000000e+00> : vector<128x256xf32>
    %5 = tpu.matmul %3, %4, %cst_7 {dimension_numbers = #tpu.dot_dimension_numbers<[1], [0], [0], [1], [0, 0, 1, 1], [], []>} : vector<128x128xbf16>, vector<128x256xbf16>, vector<128x256xf32> -> vector<128x256xf32>
    %6 = arith.addf %2, %5 : vector<128x256xf32>
    %7 = arith.truncf %6 : vector<128x256xf32> to vector<128x256xbf16>
    %c0_8 = arith.constant 0 : index
    %c0_9 = arith.constant 0 : index
    %8 = vector.load %arg5[%c0_8, %c0_9] : memref<128x256xbf16, #tpu.memory_space<vmem>>, vector<128x256xbf16>
    tpu.vector_store %arg5[%c0_8, %c0_9], %7 {strides = array<i32>} : memref<128x256xbf16, #tpu.memory_space<vmem>>, vector<128x256xbf16>,
    return
  }
  func.func @transform_0(%arg0: i32) -> (i32, i32) {
    %c0_i32 = arith.constant 0 : i32
    %c0_i32_0 = arith.constant 0 : i32
    return %arg0, %c0_i32 : i32, i32
  }
  func.func @transform_1(%arg0: i32) -> (i32, i32) {
    %c0_i32 = arith.constant 0 : i32
    %c0_i32_0 = arith.constant 0 : i32
    return %arg0, %c0_i32 : i32, i32
  }
  func.func @transform_2(%arg0: i32) -> (i32, i32) {
    %c0_i32 = arith.constant 0 : i32
    %c0_i32_0 = arith.constant 0 : i32
    %c0_i32_1 = arith.constant 0 : i32
    return %c0_i32, %c0_i32_0 : i32, i32
  }
  func.func @transform_3(%arg0: i32) -> (i32, i32) {
    %c0_i32 = arith.constant 0 : i32
    %c0_i32_0 = arith.constant 0 : i32
    %c0_i32_1 = arith.constant 0 : i32
    return %c0_i32, %c0_i32_0 : i32, i32
  }
  func.func @transform_4(%arg0: i32) -> (i32, i32) {
    %c0_i32 = arith.constant 0 : i32
    %c0_i32_0 = arith.constant 0 : i32
    return %arg0, %c0_i32 : i32, i32
  }
}

module attributes {stable_mosaic.version = 11 : i64} {
  func.func @agg_update_kernel(%arg0: i32, %arg1: i32, %arg2: memref<1x128xi32, #tpu.memory_space<vmem>>, %arg3: memref<8x1xf32, #tpu.memory_space<vmem>>, %arg4: memref<128x256xbf16, #tpu.memory_space<vmem>>, %arg5: memref<8x256xbf16, #tpu.memory_space<vmem>>, %arg6: memref<1x256xf32, #tpu.memory_space<vmem>>, %arg7: memref<256x256xbf16, #tpu.memory_space<vmem>>, %arg8: memref<256x256xbf16, #tpu.memory_space<vmem>>, %arg9: memref<1x256xf32, #tpu.memory_space<vmem>>, %arg10: memref<8x256xbf16, #tpu.memory_space<vmem>>, %arg11: memref<8x256xf32, #tpu.memory_space<vmem>>) attributes {dimension_semantics = [#tpu.dimension_semantics<parallel>, #tpu.dimension_semantics<arbitrary>], iteration_bounds = array<i64: 1, 1>, scalar_prefetch = 0 : i64, scratch_operands = 1 : i64, tpu.core_type = #tpu.core_type<tc>, window_params = [{transform_indices = @transform_0, window_bounds = array<i64: 1, 128>}, {transform_indices = @transform_1, window_bounds = array<i64: 8, 1>}, {transform_indices = @transform_2, window_bounds = array<i64: 128, 256>}, {transform_indices = @transform_3, window_bounds = array<i64: 8, 256>}, {pipeline_mode = #tpu.pipeline_mode<synchronous>, transform_indices = @transform_4, window_bounds = array<i64: 1, 256>}, {pipeline_mode = #tpu.pipeline_mode<synchronous>, transform_indices = @transform_5, window_bounds = array<i64: 256, 256>}, {pipeline_mode = #tpu.pipeline_mode<synchronous>, transform_indices = @transform_6, window_bounds = array<i64: 256, 256>}, {pipeline_mode = #tpu.pipeline_mode<synchronous>, transform_indices = @transform_7, window_bounds = array<i64: 1, 256>}, {transform_indices = @transform_8, window_bounds = array<i64: 8, 256>}]} {
    %c0_i32 = arith.constant 0 : i32
    %0 = arith.cmpi eq, %arg1, %c0_i32 : i32
    %1 = arith.extui %0 : i1 to i32
    %c0_i32_0 = arith.constant 0 : i32
    %2 = arith.cmpi ne, %1, %c0_i32_0 : i32
    scf.if %2 {
      %cst_10 = arith.constant 0.000000e+00 : f32
      %22 = vector.broadcast %cst_10 : f32 to vector<8x256xf32>
      %c0_11 = arith.constant 0 : index
      %c0_12 = arith.constant 0 : index
      %23 = vector.load %arg11[%c0_11, %c0_12] : memref<8x256xf32, #tpu.memory_space<vmem>>, vector<8x256xf32>
      tpu.vector_store %arg11[%c0_11, %c0_12], %22 {strides = array<i32>} : memref<8x256xf32, #tpu.memory_space<vmem>>, vector<8x256xf32>,
    } else {
    }
    %c8_i32 = arith.constant 8 : i32
    %3 = arith.muli %arg0, %c8_i32 : i32
    %4 = tpu.iota {dimensions = array<i32: 0>} : vector<8x1xi32>
    %5 = vector.broadcast %3 : i32 to vector<8x1xi32>
    %6 = arith.addi %5, %4 : vector<8x1xi32>
    %c0 = arith.constant 0 : index
    %c0_1 = arith.constant 0 : index
    %7 = vector.load %arg2[%c0, %c0_1] : memref<1x128xi32, #tpu.memory_space<vmem>>, vector<1x128xi32>
    %8 = vector.broadcast %6 : vector<8x1xi32> to vector<8x128xi32>
    %9 = vector.broadcast %7 : vector<1x128xi32> to vector<8x128xi32>
    %10 = arith.cmpi eq, %8, %9 : vector<8x128xi32>
    %11 = arith.extui %10 : vector<8x128xi1> to vector<8x128xi32>
    %12 = arith.sitofp %11 : vector<8x128xi32> to vector<8x128xf32>
    %13 = arith.truncf %12 : vector<8x128xf32> to vector<8x128xbf16>
    %c0_2 = arith.constant 0 : index
    %c0_3 = arith.constant 0 : index
    %14 = vector.load %arg11[%c0_2, %c0_3] : memref<8x256xf32, #tpu.memory_space<vmem>>, vector<8x256xf32>
    %c0_4 = arith.constant 0 : index
    %c0_5 = arith.constant 0 : index
    %15 = vector.load %arg4[%c0_4, %c0_5] : memref<128x256xbf16, #tpu.memory_space<vmem>>, vector<128x256xbf16>
    %cst = arith.constant dense<0.000000e+00> : vector<8x256xf32>
    %16 = tpu.matmul %13, %15, %cst {dimension_numbers = #tpu.dot_dimension_numbers<[1], [0], [0], [1], [0, 0, 1, 1], [], []>} : vector<8x128xbf16>, vector<128x256xbf16>, vector<8x256xf32> -> vector<8x256xf32>
    %17 = arith.addf %14, %16 : vector<8x256xf32>
    %c0_6 = arith.constant 0 : index
    %c0_7 = arith.constant 0 : index
    %18 = vector.load %arg11[%c0_6, %c0_7] : memref<8x256xf32, #tpu.memory_space<vmem>>, vector<8x256xf32>
    tpu.vector_store %arg11[%c0_6, %c0_7], %17 {strides = array<i32>} : memref<8x256xf32, #tpu.memory_space<vmem>>, vector<8x256xf32>,
    %c0_i32_8 = arith.constant 0 : i32
    %19 = arith.cmpi eq, %arg1, %c0_i32_8 : i32
    %20 = arith.extui %19 : i1 to i32
    %c0_i32_9 = arith.constant 0 : i32
    %21 = arith.cmpi ne, %20, %c0_i32_9 : i32
    scf.if %21 {
      %c0_10 = arith.constant 0 : index
      %c0_11 = arith.constant 0 : index
      %22 = vector.load %arg3[%c0_10, %c0_11] : memref<8x1xf32, #tpu.memory_space<vmem>>, vector<8x1xf32>
      %cst_12 = arith.constant 0.000000e+00 : f32
      %23 = vector.broadcast %cst_12 : f32 to vector<8x1xf32>
      %24 = arith.cmpf ogt, %22, %23 : vector<8x1xf32>
      %25 = arith.extui %24 : vector<8x1xi1> to vector<8x1xi32>
      %26 = arith.sitofp %25 : vector<8x1xi32> to vector<8x1xf32>
      %c0_13 = arith.constant 0 : index
      %c0_14 = arith.constant 0 : index
      %27 = vector.load %arg11[%c0_13, %c0_14] : memref<8x256xf32, #tpu.memory_space<vmem>>, vector<8x256xf32>
      %28 = vector.broadcast %22 : vector<8x1xf32> to vector<8x256xf32>
      %29 = arith.mulf %27, %28 : vector<8x256xf32>
      %c0_15 = arith.constant 0 : index
      %c0_16 = arith.constant 0 : index
      %30 = vector.load %arg6[%c0_15, %c0_16] : memref<1x256xf32, #tpu.memory_space<vmem>>, vector<1x256xf32>
      %31 = vector.broadcast %30 : vector<1x256xf32> to vector<8x256xf32>
      %32 = vector.broadcast %26 : vector<8x1xf32> to vector<8x256xf32>
      %33 = arith.mulf %31, %32 : vector<8x256xf32>
      %34 = arith.addf %29, %33 : vector<8x256xf32>
      %c0_17 = arith.constant 0 : index
      %c0_18 = arith.constant 0 : index
      %35 = vector.load %arg5[%c0_17, %c0_18] : memref<8x256xbf16, #tpu.memory_space<vmem>>, vector<8x256xbf16>
      %c0_19 = arith.constant 0 : index
      %c0_20 = arith.constant 0 : index
      %36 = vector.load %arg7[%c0_19, %c0_20] : memref<256x256xbf16, #tpu.memory_space<vmem>>, vector<256x256xbf16>
      %cst_21 = arith.constant dense<0.000000e+00> : vector<8x256xf32>
      %37 = tpu.matmul %35, %36, %cst_21 {dimension_numbers = #tpu.dot_dimension_numbers<[1], [0], [0], [1], [0, 0, 1, 1], [], []>} : vector<8x256xbf16>, vector<256x256xbf16>, vector<8x256xf32> -> vector<8x256xf32>
      %38 = arith.truncf %34 : vector<8x256xf32> to vector<8x256xbf16>
      %c0_22 = arith.constant 0 : index
      %c0_23 = arith.constant 0 : index
      %39 = vector.load %arg8[%c0_22, %c0_23] : memref<256x256xbf16, #tpu.memory_space<vmem>>, vector<256x256xbf16>
      %cst_24 = arith.constant dense<0.000000e+00> : vector<8x256xf32>
      %40 = tpu.matmul %38, %39, %cst_24 {dimension_numbers = #tpu.dot_dimension_numbers<[1], [0], [0], [1], [0, 0, 1, 1], [], []>} : vector<8x256xbf16>, vector<256x256xbf16>, vector<8x256xf32> -> vector<8x256xf32>
      %41 = arith.addf %37, %40 : vector<8x256xf32>
      %c0_25 = arith.constant 0 : index
      %c0_26 = arith.constant 0 : index
      %42 = vector.load %arg9[%c0_25, %c0_26] : memref<1x256xf32, #tpu.memory_space<vmem>>, vector<1x256xf32>
      %43 = vector.broadcast %42 : vector<1x256xf32> to vector<8x256xf32>
      %44 = arith.addf %41, %43 : vector<8x256xf32>
      %cst_27 = arith.constant 0.000000e+00 : f32
      %45 = vector.broadcast %cst_27 : f32 to vector<8x256xf32>
      %46 = arith.maximumf %44, %45 : vector<8x256xf32>
      %47 = arith.truncf %46 : vector<8x256xf32> to vector<8x256xbf16>
      %c0_28 = arith.constant 0 : index
      %c0_29 = arith.constant 0 : index
      %48 = vector.load %arg10[%c0_28, %c0_29] : memref<8x256xbf16, #tpu.memory_space<vmem>>, vector<8x256xbf16>
      tpu.vector_store %arg10[%c0_28, %c0_29], %47 {strides = array<i32>} : memref<8x256xbf16, #tpu.memory_space<vmem>>, vector<8x256xbf16>,
    } else {
    }
    return
  }
  func.func @transform_0(%arg0: i32, %arg1: i32) -> (i32, i32) {
    %c0_i32 = arith.constant 0 : i32
    %c0_i32_0 = arith.constant 0 : i32
    return %c0_i32, %arg1 : i32, i32
  }
  func.func @transform_1(%arg0: i32, %arg1: i32) -> (i32, i32) {
    %c0_i32 = arith.constant 0 : i32
    %c0_i32_0 = arith.constant 0 : i32
    return %arg0, %c0_i32 : i32, i32
  }
  func.func @transform_2(%arg0: i32, %arg1: i32) -> (i32, i32) {
    %c0_i32 = arith.constant 0 : i32
    %c0_i32_0 = arith.constant 0 : i32
    return %arg1, %c0_i32 : i32, i32
  }
  func.func @transform_3(%arg0: i32, %arg1: i32) -> (i32, i32) {
    %c0_i32 = arith.constant 0 : i32
    %c0_i32_0 = arith.constant 0 : i32
    return %arg0, %c0_i32 : i32, i32
  }
  func.func @transform_4(%arg0: i32, %arg1: i32) -> (i32, i32) {
    %c0_i32 = arith.constant 0 : i32
    %c0_i32_0 = arith.constant 0 : i32
    %c0_i32_1 = arith.constant 0 : i32
    return %c0_i32, %c0_i32_0 : i32, i32
  }
  func.func @transform_5(%arg0: i32, %arg1: i32) -> (i32, i32) {
    %c0_i32 = arith.constant 0 : i32
    %c0_i32_0 = arith.constant 0 : i32
    %c0_i32_1 = arith.constant 0 : i32
    return %c0_i32, %c0_i32_0 : i32, i32
  }
  func.func @transform_6(%arg0: i32, %arg1: i32) -> (i32, i32) {
    %c0_i32 = arith.constant 0 : i32
    %c0_i32_0 = arith.constant 0 : i32
    %c0_i32_1 = arith.constant 0 : i32
    return %c0_i32, %c0_i32_0 : i32, i32
  }
  func.func @transform_7(%arg0: i32, %arg1: i32) -> (i32, i32) {
    %c0_i32 = arith.constant 0 : i32
    %c0_i32_0 = arith.constant 0 : i32
    %c0_i32_1 = arith.constant 0 : i32
    return %c0_i32, %c0_i32_0 : i32, i32
  }
  func.func @transform_8(%arg0: i32, %arg1: i32) -> (i32, i32) {
    %c0_i32 = arith.constant 0 : i32
    %c0_i32_0 = arith.constant 0 : i32
    return %arg0, %c0_i32 : i32, i32
  }
}

module attributes {stable_mosaic.version = 11 : i64} {
  func.func @message_kernel(%arg0: i32, %arg1: memref<128x256xbf16, #tpu.memory_space<vmem>>, %arg2: memref<128x128xbf16, #tpu.memory_space<vmem>>, %arg3: memref<256x128xbf16, #tpu.memory_space<vmem>>, %arg4: memref<128x128xbf16, #tpu.memory_space<vmem>>, %arg5: memref<128x128xbf16, #tpu.memory_space<vmem>>) attributes {dimension_semantics = [#tpu.dimension_semantics<parallel>], iteration_bounds = array<i64: 1>, scalar_prefetch = 0 : i64, scratch_operands = 0 : i64, tpu.core_type = #tpu.core_type<tc>, window_params = [{transform_indices = @transform_0, window_bounds = array<i64: 128, 256>}, {transform_indices = @transform_1, window_bounds = array<i64: 128, 128>}, {pipeline_mode = #tpu.pipeline_mode<synchronous>, transform_indices = @transform_2, window_bounds = array<i64: 256, 128>}, {pipeline_mode = #tpu.pipeline_mode<synchronous>, transform_indices = @transform_3, window_bounds = array<i64: 128, 128>}, {transform_indices = @transform_4, window_bounds = array<i64: 128, 128>}]} {
    %c0 = arith.constant 0 : index
    %c0_0 = arith.constant 0 : index
    %0 = vector.load %arg1[%c0, %c0_0] : memref<128x256xbf16, #tpu.memory_space<vmem>>, vector<128x256xbf16>
    %c0_1 = arith.constant 0 : index
    %c0_2 = arith.constant 0 : index
    %1 = vector.load %arg3[%c0_1, %c0_2] : memref<256x128xbf16, #tpu.memory_space<vmem>>, vector<256x128xbf16>
    %cst = arith.constant dense<0.000000e+00> : vector<128x128xf32>
    %2 = tpu.matmul %0, %1, %cst {dimension_numbers = #tpu.dot_dimension_numbers<[1], [0], [0], [1], [0, 0, 1, 1], [], []>} : vector<128x256xbf16>, vector<256x128xbf16>, vector<128x128xf32> -> vector<128x128xf32>
    %c0_3 = arith.constant 0 : index
    %c0_4 = arith.constant 0 : index
    %3 = vector.load %arg2[%c0_3, %c0_4] : memref<128x128xbf16, #tpu.memory_space<vmem>>, vector<128x128xbf16>
    %c0_5 = arith.constant 0 : index
    %c0_6 = arith.constant 0 : index
    %4 = vector.load %arg4[%c0_5, %c0_6] : memref<128x128xbf16, #tpu.memory_space<vmem>>, vector<128x128xbf16>
    %cst_7 = arith.constant dense<0.000000e+00> : vector<128x128xf32>
    %5 = tpu.matmul %3, %4, %cst_7 {dimension_numbers = #tpu.dot_dimension_numbers<[1], [0], [0], [1], [0, 0, 1, 1], [], []>} : vector<128x128xbf16>, vector<128x128xbf16>, vector<128x128xf32> -> vector<128x128xf32>
    %6 = arith.addf %2, %5 : vector<128x128xf32>
    %7 = arith.truncf %6 : vector<128x128xf32> to vector<128x128xbf16>
    %c0_8 = arith.constant 0 : index
    %c0_9 = arith.constant 0 : index
    %8 = vector.load %arg5[%c0_8, %c0_9] : memref<128x128xbf16, #tpu.memory_space<vmem>>, vector<128x128xbf16>
    tpu.vector_store %arg5[%c0_8, %c0_9], %7 {strides = array<i32>} : memref<128x128xbf16, #tpu.memory_space<vmem>>, vector<128x128xbf16>,
    return
  }
  func.func @transform_0(%arg0: i32) -> (i32, i32) {
    %c0_i32 = arith.constant 0 : i32
    %c0_i32_0 = arith.constant 0 : i32
    return %arg0, %c0_i32 : i32, i32
  }
  func.func @transform_1(%arg0: i32) -> (i32, i32) {
    %c0_i32 = arith.constant 0 : i32
    %c0_i32_0 = arith.constant 0 : i32
    return %arg0, %c0_i32 : i32, i32
  }
  func.func @transform_2(%arg0: i32) -> (i32, i32) {
    %c0_i32 = arith.constant 0 : i32
    %c0_i32_0 = arith.constant 0 : i32
    %c0_i32_1 = arith.constant 0 : i32
    return %c0_i32, %c0_i32_0 : i32, i32
  }
  func.func @transform_3(%arg0: i32) -> (i32, i32) {
    %c0_i32 = arith.constant 0 : i32
    %c0_i32_0 = arith.constant 0 : i32
    %c0_i32_1 = arith.constant 0 : i32
    return %c0_i32, %c0_i32_0 : i32, i32
  }
  func.func @transform_4(%arg0: i32) -> (i32, i32) {
    %c0_i32 = arith.constant 0 : i32
    %c0_i32_0 = arith.constant 0 : i32
    return %arg0, %c0_i32 : i32, i32
  }
}

module attributes {stable_mosaic.version = 11 : i64} {
  func.func @agg_update_kernel(%arg0: i32, %arg1: i32, %arg2: memref<1x128xi32, #tpu.memory_space<vmem>>, %arg3: memref<8x1xf32, #tpu.memory_space<vmem>>, %arg4: memref<128x128xbf16, #tpu.memory_space<vmem>>, %arg5: memref<8x256xbf16, #tpu.memory_space<vmem>>, %arg6: memref<1x128xf32, #tpu.memory_space<vmem>>, %arg7: memref<256x128xbf16, #tpu.memory_space<vmem>>, %arg8: memref<128x128xbf16, #tpu.memory_space<vmem>>, %arg9: memref<1x128xf32, #tpu.memory_space<vmem>>, %arg10: memref<8x128xf32, #tpu.memory_space<vmem>>, %arg11: memref<8x128xf32, #tpu.memory_space<vmem>>) attributes {dimension_semantics = [#tpu.dimension_semantics<parallel>, #tpu.dimension_semantics<arbitrary>], iteration_bounds = array<i64: 1, 1>, scalar_prefetch = 0 : i64, scratch_operands = 1 : i64, tpu.core_type = #tpu.core_type<tc>, window_params = [{transform_indices = @transform_0, window_bounds = array<i64: 1, 128>}, {transform_indices = @transform_1, window_bounds = array<i64: 8, 1>}, {transform_indices = @transform_2, window_bounds = array<i64: 128, 128>}, {transform_indices = @transform_3, window_bounds = array<i64: 8, 256>}, {pipeline_mode = #tpu.pipeline_mode<synchronous>, transform_indices = @transform_4, window_bounds = array<i64: 1, 128>}, {pipeline_mode = #tpu.pipeline_mode<synchronous>, transform_indices = @transform_5, window_bounds = array<i64: 256, 128>}, {pipeline_mode = #tpu.pipeline_mode<synchronous>, transform_indices = @transform_6, window_bounds = array<i64: 128, 128>}, {pipeline_mode = #tpu.pipeline_mode<synchronous>, transform_indices = @transform_7, window_bounds = array<i64: 1, 128>}, {transform_indices = @transform_8, window_bounds = array<i64: 8, 128>}]} {
    %c0_i32 = arith.constant 0 : i32
    %0 = arith.cmpi eq, %arg1, %c0_i32 : i32
    %1 = arith.extui %0 : i1 to i32
    %c0_i32_0 = arith.constant 0 : i32
    %2 = arith.cmpi ne, %1, %c0_i32_0 : i32
    scf.if %2 {
      %cst_10 = arith.constant 0.000000e+00 : f32
      %22 = vector.broadcast %cst_10 : f32 to vector<8x128xf32>
      %c0_11 = arith.constant 0 : index
      %c0_12 = arith.constant 0 : index
      %23 = vector.load %arg11[%c0_11, %c0_12] : memref<8x128xf32, #tpu.memory_space<vmem>>, vector<8x128xf32>
      tpu.vector_store %arg11[%c0_11, %c0_12], %22 {strides = array<i32>} : memref<8x128xf32, #tpu.memory_space<vmem>>, vector<8x128xf32>,
    } else {
    }
    %c8_i32 = arith.constant 8 : i32
    %3 = arith.muli %arg0, %c8_i32 : i32
    %4 = tpu.iota {dimensions = array<i32: 0>} : vector<8x1xi32>
    %5 = vector.broadcast %3 : i32 to vector<8x1xi32>
    %6 = arith.addi %5, %4 : vector<8x1xi32>
    %c0 = arith.constant 0 : index
    %c0_1 = arith.constant 0 : index
    %7 = vector.load %arg2[%c0, %c0_1] : memref<1x128xi32, #tpu.memory_space<vmem>>, vector<1x128xi32>
    %8 = vector.broadcast %6 : vector<8x1xi32> to vector<8x128xi32>
    %9 = vector.broadcast %7 : vector<1x128xi32> to vector<8x128xi32>
    %10 = arith.cmpi eq, %8, %9 : vector<8x128xi32>
    %11 = arith.extui %10 : vector<8x128xi1> to vector<8x128xi32>
    %12 = arith.sitofp %11 : vector<8x128xi32> to vector<8x128xf32>
    %13 = arith.truncf %12 : vector<8x128xf32> to vector<8x128xbf16>
    %c0_2 = arith.constant 0 : index
    %c0_3 = arith.constant 0 : index
    %14 = vector.load %arg11[%c0_2, %c0_3] : memref<8x128xf32, #tpu.memory_space<vmem>>, vector<8x128xf32>
    %c0_4 = arith.constant 0 : index
    %c0_5 = arith.constant 0 : index
    %15 = vector.load %arg4[%c0_4, %c0_5] : memref<128x128xbf16, #tpu.memory_space<vmem>>, vector<128x128xbf16>
    %cst = arith.constant dense<0.000000e+00> : vector<8x128xf32>
    %16 = tpu.matmul %13, %15, %cst {dimension_numbers = #tpu.dot_dimension_numbers<[1], [0], [0], [1], [0, 0, 1, 1], [], []>} : vector<8x128xbf16>, vector<128x128xbf16>, vector<8x128xf32> -> vector<8x128xf32>
    %17 = arith.addf %14, %16 : vector<8x128xf32>
    %c0_6 = arith.constant 0 : index
    %c0_7 = arith.constant 0 : index
    %18 = vector.load %arg11[%c0_6, %c0_7] : memref<8x128xf32, #tpu.memory_space<vmem>>, vector<8x128xf32>
    tpu.vector_store %arg11[%c0_6, %c0_7], %17 {strides = array<i32>} : memref<8x128xf32, #tpu.memory_space<vmem>>, vector<8x128xf32>,
    %c0_i32_8 = arith.constant 0 : i32
    %19 = arith.cmpi eq, %arg1, %c0_i32_8 : i32
    %20 = arith.extui %19 : i1 to i32
    %c0_i32_9 = arith.constant 0 : i32
    %21 = arith.cmpi ne, %20, %c0_i32_9 : i32
    scf.if %21 {
      %c0_10 = arith.constant 0 : index
      %c0_11 = arith.constant 0 : index
      %22 = vector.load %arg3[%c0_10, %c0_11] : memref<8x1xf32, #tpu.memory_space<vmem>>, vector<8x1xf32>
      %cst_12 = arith.constant 0.000000e+00 : f32
      %23 = vector.broadcast %cst_12 : f32 to vector<8x1xf32>
      %24 = arith.cmpf ogt, %22, %23 : vector<8x1xf32>
      %25 = arith.extui %24 : vector<8x1xi1> to vector<8x1xi32>
      %26 = arith.sitofp %25 : vector<8x1xi32> to vector<8x1xf32>
      %c0_13 = arith.constant 0 : index
      %c0_14 = arith.constant 0 : index
      %27 = vector.load %arg11[%c0_13, %c0_14] : memref<8x128xf32, #tpu.memory_space<vmem>>, vector<8x128xf32>
      %28 = vector.broadcast %22 : vector<8x1xf32> to vector<8x128xf32>
      %29 = arith.mulf %27, %28 : vector<8x128xf32>
      %c0_15 = arith.constant 0 : index
      %c0_16 = arith.constant 0 : index
      %30 = vector.load %arg6[%c0_15, %c0_16] : memref<1x128xf32, #tpu.memory_space<vmem>>, vector<1x128xf32>
      %31 = vector.broadcast %30 : vector<1x128xf32> to vector<8x128xf32>
      %32 = vector.broadcast %26 : vector<8x1xf32> to vector<8x128xf32>
      %33 = arith.mulf %31, %32 : vector<8x128xf32>
      %34 = arith.addf %29, %33 : vector<8x128xf32>
      %c0_17 = arith.constant 0 : index
      %c0_18 = arith.constant 0 : index
      %35 = vector.load %arg5[%c0_17, %c0_18] : memref<8x256xbf16, #tpu.memory_space<vmem>>, vector<8x256xbf16>
      %c0_19 = arith.constant 0 : index
      %c0_20 = arith.constant 0 : index
      %36 = vector.load %arg7[%c0_19, %c0_20] : memref<256x128xbf16, #tpu.memory_space<vmem>>, vector<256x128xbf16>
      %cst_21 = arith.constant dense<0.000000e+00> : vector<8x128xf32>
      %37 = tpu.matmul %35, %36, %cst_21 {dimension_numbers = #tpu.dot_dimension_numbers<[1], [0], [0], [1], [0, 0, 1, 1], [], []>} : vector<8x256xbf16>, vector<256x128xbf16>, vector<8x128xf32> -> vector<8x128xf32>
      %38 = arith.truncf %34 : vector<8x128xf32> to vector<8x128xbf16>
      %c0_22 = arith.constant 0 : index
      %c0_23 = arith.constant 0 : index
      %39 = vector.load %arg8[%c0_22, %c0_23] : memref<128x128xbf16, #tpu.memory_space<vmem>>, vector<128x128xbf16>
      %cst_24 = arith.constant dense<0.000000e+00> : vector<8x128xf32>
      %40 = tpu.matmul %38, %39, %cst_24 {dimension_numbers = #tpu.dot_dimension_numbers<[1], [0], [0], [1], [0, 0, 1, 1], [], []>} : vector<8x128xbf16>, vector<128x128xbf16>, vector<8x128xf32> -> vector<8x128xf32>
      %41 = arith.addf %37, %40 : vector<8x128xf32>
      %c0_25 = arith.constant 0 : index
      %c0_26 = arith.constant 0 : index
      %42 = vector.load %arg9[%c0_25, %c0_26] : memref<1x128xf32, #tpu.memory_space<vmem>>, vector<1x128xf32>
      %43 = vector.broadcast %42 : vector<1x128xf32> to vector<8x128xf32>
      %44 = arith.addf %41, %43 : vector<8x128xf32>
      %cst_27 = arith.constant 0.000000e+00 : f32
      %45 = vector.broadcast %cst_27 : f32 to vector<8x128xf32>
      %46 = arith.maximumf %44, %45 : vector<8x128xf32>
      %c0_28 = arith.constant 0 : index
      %c0_29 = arith.constant 0 : index
      %47 = vector.load %arg10[%c0_28, %c0_29] : memref<8x128xf32, #tpu.memory_space<vmem>>, vector<8x128xf32>
      tpu.vector_store %arg10[%c0_28, %c0_29], %46 {strides = array<i32>} : memref<8x128xf32, #tpu.memory_space<vmem>>, vector<8x128xf32>,
    } else {
    }
    return
  }
  func.func @transform_0(%arg0: i32, %arg1: i32) -> (i32, i32) {
    %c0_i32 = arith.constant 0 : i32
    %c0_i32_0 = arith.constant 0 : i32
    return %c0_i32, %arg1 : i32, i32
  }
  func.func @transform_1(%arg0: i32, %arg1: i32) -> (i32, i32) {
    %c0_i32 = arith.constant 0 : i32
    %c0_i32_0 = arith.constant 0 : i32
    return %arg0, %c0_i32 : i32, i32
  }
  func.func @transform_2(%arg0: i32, %arg1: i32) -> (i32, i32) {
    %c0_i32 = arith.constant 0 : i32
    %c0_i32_0 = arith.constant 0 : i32
    return %arg1, %c0_i32 : i32, i32
  }
  func.func @transform_3(%arg0: i32, %arg1: i32) -> (i32, i32) {
    %c0_i32 = arith.constant 0 : i32
    %c0_i32_0 = arith.constant 0 : i32
    return %arg0, %c0_i32 : i32, i32
  }
  func.func @transform_4(%arg0: i32, %arg1: i32) -> (i32, i32) {
    %c0_i32 = arith.constant 0 : i32
    %c0_i32_0 = arith.constant 0 : i32
    %c0_i32_1 = arith.constant 0 : i32
    return %c0_i32, %c0_i32_0 : i32, i32
  }
  func.func @transform_5(%arg0: i32, %arg1: i32) -> (i32, i32) {
    %c0_i32 = arith.constant 0 : i32
    %c0_i32_0 = arith.constant 0 : i32
    %c0_i32_1 = arith.constant 0 : i32
    return %c0_i32, %c0_i32_0 : i32, i32
  }
  func.func @transform_6(%arg0: i32, %arg1: i32) -> (i32, i32) {
    %c0_i32 = arith.constant 0 : i32
    %c0_i32_0 = arith.constant 0 : i32
    %c0_i32_1 = arith.constant 0 : i32
    return %c0_i32, %c0_i32_0 : i32, i32
  }
  func.func @transform_7(%arg0: i32, %arg1: i32) -> (i32, i32) {
    %c0_i32 = arith.constant 0 : i32
    %c0_i32_0 = arith.constant 0 : i32
    %c0_i32_1 = arith.constant 0 : i32
    return %c0_i32, %c0_i32_0 : i32, i32
  }
  func.func @transform_8(%arg0: i32, %arg1: i32) -> (i32, i32) {
    %c0_i32 = arith.constant 0 : i32
    %c0_i32_0 = arith.constant 0 : i32
    return %arg0, %c0_i32 : i32, i32
  }
}

</mosaic_0001>

<llo_original>
// kernel: _lambda_.6
$region0: #{_lambda_.6}
  #allocation0 [shape = 'u32[]', space=smem, size = 0x4, offset = 0x4, fixed_abs, tag = 'smem constant byte address 0x4 - core index']
  #allocation1 [shape = 'u32[72,128]{1,0:T(1,128)}', space=vmem, size = 0x9000, scoped, tag = 'internal scratch']
  %s0 = inlined_call_operand.vmem [shape: bf16[128,128], index: 0, kind: input, shape index: {}]
  %s1 = inlined_call_operand.vmem [shape: bf16[128,128], index: 1, kind: input, shape index: {}]
  %s2 = inlined_call_operand.vmem [shape: bf16[128,256], index: 2, kind: input, shape index: {}]
  %s3 = inlined_call_operand.vmem [shape: bf16[128,256], index: 3, kind: input, shape index: {}]
  %s4 = inlined_call_operand.vmem [shape: bf16[128,256], index: 4, kind: output, shape index: {}]
  %s5 = sld [smem:[#allocation0]]
  $region26: #{_lambda_.6} parent=0
    _
  %s7 = ssub.s32 1, %s5
  %s8 = scalar_select 0, %s7, %s5
  // Predicated region
  $region2: #{_lambda_.6} parent=0 // pred_check
    _
  $region3: #{_lambda_.6} parent=0 // pred_check_branch
    %10 = sbr.rel (0) target = $region5
  $region4: #{_lambda_.6} parent=0 // pred_region
    _
  $region5: #{_lambda_.6} parent=0 // pred_fallthru
    _
  // Predicated region
  $region6: #{_lambda_.6} parent=0 // pred_check
    _
  $region7: #{_lambda_.6} parent=0 // pred_check_branch
    %12 = sbr.rel (0) target = $region9
  $region8: #{_lambda_.6} parent=0 // pred_region
    _
  $region9: #{_lambda_.6} parent=0 // pred_fallthru
    _
  // Predicated region
  $region10: #{_lambda_.6} parent=0 // pred_check
    _
  $region11: #{_lambda_.6} parent=0 // pred_check_branch
    %14 = sbr.rel (0) target = $region13
  $region12: #{_lambda_.6} parent=0 // pred_region
    _
  $region13: #{_lambda_.6} parent=0 // pred_fallthru
    _
  // Predicated region
  $region14: #{_lambda_.6} parent=0 // pred_check
    _
  $region15: #{_lambda_.6} parent=0 // pred_check_branch
    %16 = sbr.rel (0) target = $region17
  $region16: #{_lambda_.6} parent=0 // pred_region
    _
  $region17: #{_lambda_.6} parent=0 // pred_fallthru
    _
  %v17 = vld [vmem:[%s0] sm:$0xf]
  %v18 = vld [vmem:[%s0 + $0x4] sm:$0xf]
  %v19 = vld [vmem:[%s0 + $0x8] sm:$0xf]
  %v20 = vld [vmem:[%s0 + $0xc] sm:$0xf]
  %v21 = vld [vmem:[%s0 + $0x10] sm:$0xf]
  %v22 = vld [vmem:[%s0 + $0x14] sm:$0xf]
  %v23 = vld [vmem:[%s0 + $0x18] sm:$0xf]
  %v24 = vld [vmem:[%s0 + $0x1c] sm:$0xf]
  %v25 = vld [vmem:[%s0 + $0x20] sm:$0xf]
  %v26 = vld [vmem:[%s0 + $0x24] sm:$0xf]
  %v27 = vld [vmem:[%s0 + $0x28] sm:$0xf]
  %v28 = vld [vmem:[%s0 + $0x2c] sm:$0xf]
  %v29 = vld [vmem:[%s0 + $0x30] sm:$0xf]
  %v30 = vld [vmem:[%s0 + $0x34] sm:$0xf]
  %v31 = vld [vmem:[%s0 + $0x38] sm:$0xf]
  %v32 = vld [vmem:[%s0 + $0x3c] sm:$0xf]
  %v33 = vld [vmem:[%s2] sm:$0xff]
  %v34 = vld [vmem:[%s2 + $0x8] sm:$0xff]
  %v35 = vld [vmem:[%s2 + $0x10] sm:$0xff]
  %v36 = vld [vmem:[%s2 + $0x18] sm:$0xff]
  %v37 = vld [vmem:[%s2 + $0x20] sm:$0xff]
  %v38 = vld [vmem:[%s2 + $0x28] sm:$0xff]
  %v39 = vld [vmem:[%s2 + $0x30] sm:$0xff]
  %v40 = vld [vmem:[%s2 + $0x38] sm:$0xff]
  %v41 = vld [vmem:[%s2 + $0x40] sm:$0xff]
  %v42 = vld [vmem:[%s2 + $0x48] sm:$0xff]
  %v43 = vld [vmem:[%s2 + $0x50] sm:$0xff]
  %v44 = vld [vmem:[%s2 + $0x58] sm:$0xff]
  %v45 = vld [vmem:[%s2 + $0x60] sm:$0xff]
  %v46 = vld [vmem:[%s2 + $0x68] sm:$0xff]
  %v47 = vld [vmem:[%s2 + $0x70] sm:$0xff]
  %v48 = vld [vmem:[%s2 + $0x78] sm:$0xff]
  %v49 = vld [vmem:[%s1] sm:$0xf]
  %v50 = vld [vmem:[%s1 + $0x4] sm:$0xf]
  %v51 = vld [vmem:[%s1 + $0x8] sm:$0xf]
  %v52 = vld [vmem:[%s1 + $0xc] sm:$0xf]
  %v53 = vld [vmem:[%s1 + $0x10] sm:$0xf]
  %v54 = vld [vmem:[%s1 + $0x14] sm:$0xf]
  %v55 = vld [vmem:[%s1 + $0x18] sm:$0xf]
  %v56 = vld [vmem:[%s1 + $0x1c] sm:$0xf]
  %v57 = vld [vmem:[%s1 + $0x20] sm:$0xf]
  %v58 = vld [vmem:[%s1 + $0x24] sm:$0xf]
  %v59 = vld [vmem:[%s1 + $0x28] sm:$0xf]
  %v60 = vld [vmem:[%s1 + $0x2c] sm:$0xf]
  %v61 = vld [vmem:[%s1 + $0x30] sm:$0xf]
  %v62 = vld [vmem:[%s1 + $0x34] sm:$0xf]
  %v63 = vld [vmem:[%s1 + $0x38] sm:$0xf]
  %v64 = vld [vmem:[%s1 + $0x3c] sm:$0xf]
  %v65 = vld [vmem:[%s3] sm:$0xff]
  %v66 = vld [vmem:[%s3 + $0x8] sm:$0xff]
  %v67 = vld [vmem:[%s3 + $0x10] sm:$0xff]
  %v68 = vld [vmem:[%s3 + $0x18] sm:$0xff]
  %v69 = vld [vmem:[%s3 + $0x20] sm:$0xff]
  %v70 = vld [vmem:[%s3 + $0x28] sm:$0xff]
  %v71 = vld [vmem:[%s3 + $0x30] sm:$0xff]
  %v72 = vld [vmem:[%s3 + $0x38] sm:$0xff]
  %v73 = vld [vmem:[%s3 + $0x40] sm:$0xff]
  %v74 = vld [vmem:[%s3 + $0x48] sm:$0xff]
  %v75 = vld [vmem:[%s3 + $0x50] sm:$0xff]
  %v76 = vld [vmem:[%s3 + $0x58] sm:$0xff]
  %v77 = vld [vmem:[%s3 + $0x60] sm:$0xff]
  %v78 = vld [vmem:[%s3 + $0x68] sm:$0xff]
  %v79 = vld [vmem:[%s3 + $0x70] sm:$0xff]
  %v80 = vld [vmem:[%s3 + $0x78] sm:$0xff]
  %v97 = vunpack.c.l.b16 %v49
  %v98 = vunpack.c.l.b16 %v50
  %v99 = vunpack.c.l.b16 %v51
  %v100 = vunpack.c.l.b16 %v52
  %v101 = vunpack.c.l.b16 %v53
  %v102 = vunpack.c.l.b16 %v54
  %v103 = vunpack.c.l.b16 %v55
  %v104 = vunpack.c.l.b16 %v56
  %v105 = vunpack.c.l.b16 %v57
  %v106 = vunpack.c.l.b16 %v58
  %v107 = vunpack.c.l.b16 %v59
  %v108 = vunpack.c.l.b16 %v60
  %v109 = vunpack.c.l.b16 %v61
  %v110 = vunpack.c.l.b16 %v62
  %v111 = vunpack.c.l.b16 %v63
  %v112 = vunpack.c.l.b16 %v64
  %v113 = vpack.c.b16 %v98, %v97
  %v114 = vpack.c.b16 %v100, %v99
  %v115 = vpack.c.b16 %v102, %v101
  %v116 = vpack.c.b16 %v104, %v103
  %v117 = vpack.c.b16 %v106, %v105
  %v118 = vpack.c.b16 %v108, %v107
  %v119 = vpack.c.b16 %v110, %v109
  %v120 = vpack.c.b16 %v112, %v111
  %v145 = vunpack.c.l.b16 %v65
  %v146 = vunpack.c.h.b16 %v65
  %v147 = vunpack.c.l.b16 %v66
  %v148 = vunpack.c.h.b16 %v66
  %v149 = vunpack.c.l.b16 %v67
  %v150 = vunpack.c.h.b16 %v67
  %v151 = vunpack.c.l.b16 %v68
  %v152 = vunpack.c.h.b16 %v68
  %v153 = vunpack.c.l.b16 %v69
  %v154 = vunpack.c.h.b16 %v69
  %v155 = vunpack.c.l.b16 %v70
  %v156 = vunpack.c.h.b16 %v70
  %v157 = vunpack.c.l.b16 %v71
  %v158 = vunpack.c.h.b16 %v71
  %v159 = vunpack.c.l.b16 %v72
  %v160 = vunpack.c.h.b16 %v72
  %v161 = vunpack.c.l.b16 %v73
  %v162 = vunpack.c.h.b16 %v73
  %v163 = vunpack.c.l.b16 %v74
  %v164 = vunpack.c.h.b16 %v74
  %v165 = vunpack.c.l.b16 %v75
  %v166 = vunpack.c.h.b16 %v75
  %v167 = vunpack.c.l.b16 %v76
  %v168 = vunpack.c.h.b16 %v76
  %v169 = vunpack.c.l.b16 %v77
  %v170 = vunpack.c.h.b16 %v77
  %v171 = vunpack.c.l.b16 %v78
  %v172 = vunpack.c.h.b16 %v78
  %v173 = vunpack.c.l.b16 %v79
  %v174 = vunpack.c.h.b16 %v79
  %v175 = vunpack.c.l.b16 %v80
  %v176 = vunpack.c.h.b16 %v80
  %v177 = vpack.c.b16 %v147, %v145
  %v178 = vpack.c.b16 %v148, %v146
  %v179 = vpack.c.b16 %v151, %v149
  %v180 = vpack.c.b16 %v152, %v150
  %v181 = vpack.c.b16 %v155, %v153
  %v182 = vpack.c.b16 %v156, %v154
  %v183 = vpack.c.b16 %v159, %v157
  %v184 = vpack.c.b16 %v160, %v158
  %v185 = vpack.c.b16 %v163, %v161
  %v186 = vpack.c.b16 %v164, %v162
  %v187 = vpack.c.b16 %v167, %v165
  %v188 = vpack.c.b16 %v168, %v166
  %v189 = vpack.c.b16 %v171, %v169
  %v190 = vpack.c.b16 %v172, %v170
  %v191 = vpack.c.b16 %v175, %v173
  %v192 = vpack.c.b16 %v176, %v174
  %209 = vmatpush.bf16.msra.mxu0 %v191
  %210 = vmatpush.bf16.msra.mxu0 %v189
  %211 = vmatpush.bf16.msra.mxu0 %v187
  %212 = vmatpush.bf16.msra.mxu0 %v185
  %213 = vmatpush.bf16.msra.mxu0 %v183
  %214 = vmatpush.bf16.msra.mxu0 %v181
  %215 = vmatpush.bf16.msra.mxu0 %v179
  %216 = vmatpush.bf16.msra.mxu0 %v177
  %217 = vmatmul.bf16.gmra.mxu0 %v113
  %v218 = vpop.f32.mrf.mxu0
  %v219 = vadd.f32 0.0, %v218
  %v220 = vpop.f32.mrf.mxu0
  %v221 = vadd.f32 0.0, %v220
  %222 = vmatmul.bf16.gmra.mxu0 %v114
  %v223 = vpop.f32.mrf.mxu0
  %v224 = vadd.f32 0.0, %v223
  %v225 = vpop.f32.mrf.mxu0
  %v226 = vadd.f32 0.0, %v225
  %227 = vmatmul.bf16.gmra.mxu0 %v115
  %v228 = vpop.f32.mrf.mxu0
  %v229 = vadd.f32 0.0, %v228
  %v230 = vpop.f32.mrf.mxu0
  %v231 = vadd.f32 0.0, %v230
  %232 = vmatmul.bf16.gmra.mxu0 %v116
  %v233 = vpop.f32.mrf.mxu0
  %v234 = vadd.f32 0.0, %v233
  %v235 = vpop.f32.mrf.mxu0
  %v236 = vadd.f32 0.0, %v235
  %237 = vmatmul.bf16.gmra.mxu0 %v117
  %v238 = vpop.f32.mrf.mxu0
  %v239 = vadd.f32 0.0, %v238
  %v240 = vpop.f32.mrf.mxu0
  %v241 = vadd.f32 0.0, %v240
  %242 = vmatmul.bf16.gmra.mxu0 %v118
  %v243 = vpop.f32.mrf.mxu0
  %v244 = vadd.f32 0.0, %v243
  %v245 = vpop.f32.mrf.mxu0
  %v246 = vadd.f32 0.0, %v245
  %247 = vmatmul.bf16.gmra.mxu0 %v119
  %v248 = vpop.f32.mrf.mxu0
  %v249 = vadd.f32 0.0, %v248
  %v250 = vpop.f32.mrf.mxu0
  %v251 = vadd.f32 0.0, %v250
  %252 = vmatmul.bf16.gmra.mxu0 %v120
  %v253 = vpop.f32.mrf.mxu0
  %v254 = vadd.f32 0.0, %v253
  %v255 = vpop.f32.mrf.mxu0
  %v256 = vadd.f32 0.0, %v255
  %257 = vdwg.mxu0
  %258 = vmatpush.bf16.msra.mxu0 %v192
  %259 = vmatpush.bf16.msra.mxu0 %v190
  %260 = vmatpush.bf16.msra.mxu0 %v188
  %261 = vmatpush.bf16.msra.mxu0 %v186
  %262 = vmatpush.bf16.msra.mxu0 %v184
  %263 = vmatpush.bf16.msra.mxu0 %v182
  %264 = vmatpush.bf16.msra.mxu0 %v180
  %265 = vmatpush.bf16.msra.mxu0 %v178
  %266 = vmatmul.bf16.gmra.mxu0 %v113
  %v267 = vpop.f32.mrf.mxu0
  %v268 = vadd.f32 0.0, %v267
  %v269 = vpop.f32.mrf.mxu0
  %v270 = vadd.f32 0.0, %v269
  %271 = vmatmul.bf16.gmra.mxu0 %v114
  %v272 = vpop.f32.mrf.mxu0
  %v273 = vadd.f32 0.0, %v272
  %v274 = vpop.f32.mrf.mxu0
  %v275 = vadd.f32 0.0, %v274
  %276 = vmatmul.bf16.gmra.mxu0 %v115
  %v277 = vpop.f32.mrf.mxu0
  %v278 = vadd.f32 0.0, %v277
  %v279 = vpop.f32.mrf.mxu0
  %v280 = vadd.f32 0.0, %v279
  %281 = vmatmul.bf16.gmra.mxu0 %v116
  %v282 = vpop.f32.mrf.mxu0
  %v283 = vadd.f32 0.0, %v282
  %v284 = vpop.f32.mrf.mxu0
  %v285 = vadd.f32 0.0, %v284
  %286 = vmatmul.bf16.gmra.mxu0 %v117
  %v287 = vpop.f32.mrf.mxu0
  %v288 = vadd.f32 0.0, %v287
  %v289 = vpop.f32.mrf.mxu0
  %v290 = vadd.f32 0.0, %v289
  %291 = vmatmul.bf16.gmra.mxu0 %v118
  %v292 = vpop.f32.mrf.mxu0
  %v293 = vadd.f32 0.0, %v292
  %v294 = vpop.f32.mrf.mxu0
  %v295 = vadd.f32 0.0, %v294
  %296 = vmatmul.bf16.gmra.mxu0 %v119
  %v297 = vpop.f32.mrf.mxu0
  %v298 = vadd.f32 0.0, %v297
  %v299 = vpop.f32.mrf.mxu0
  %v300 = vadd.f32 0.0, %v299
  %301 = vmatmul.bf16.gmra.mxu0 %v120
  %v302 = vpop.f32.mrf.mxu0
  %v303 = vadd.f32 0.0, %v302
  %v304 = vpop.f32.mrf.mxu0
  %v305 = vadd.f32 0.0, %v304
  %306 = vdwg.mxu0
  %v323 = vunpack.c.l.b16 %v17
  %v324 = vunpack.c.l.b16 %v18
  %v325 = vunpack.c.l.b16 %v19
  %v326 = vunpack.c.l.b16 %v20
  %v327 = vunpack.c.l.b16 %v21
  %v328 = vunpack.c.l.b16 %v22
  %v329 = vunpack.c.l.b16 %v23
  %v330 = vunpack.c.l.b16 %v24
  %v331 = vunpack.c.l.b16 %v25
  %v332 = vunpack.c.l.b16 %v26
  %v333 = vunpack.c.l.b16 %v27
  %v334 = vunpack.c.l.b16 %v28
  %v335 = vunpack.c.l.b16 %v29
  %v336 = vunpack.c.l.b16 %v30
  %v337 = vunpack.c.l.b16 %v31
  %v338 = vunpack.c.l.b16 %v32
  %v339 = vpack.c.b16 %v324, %v323
  %v340 = vpack.c.b16 %v326, %v325
  %v341 = vpack.c.b16 %v328, %v327
  %v342 = vpack.c.b16 %v330, %v329
  %v343 = vpack.c.b16 %v332, %v331
  %v344 = vpack.c.b16 %v334, %v333
  %v345 = vpack.c.b16 %v336, %v335
  %v346 = vpack.c.b16 %v338, %v337
  %v371 = vunpack.c.l.b16 %v33
  %v372 = vunpack.c.h.b16 %v33
  %v373 = vunpack.c.l.b16 %v34
  %v374 = vunpack.c.h.b16 %v34
  %v375 = vunpack.c.l.b16 %v35
  %v376 = vunpack.c.h.b16 %v35
  %v377 = vunpack.c.l.b16 %v36
  %v378 = vunpack.c.h.b16 %v36
  %v379 = vunpack.c.l.b16 %v37
  %v380 = vunpack.c.h.b16 %v37
  %v381 = vunpack.c.l.b16 %v38
  %v382 = vunpack.c.h.b16 %v38
  %v383 = vunpack.c.l.b16 %v39
  %v384 = vunpack.c.h.b16 %v39
  %v385 = vunpack.c.l.b16 %v40
  %v386 = vunpack.c.h.b16 %v40
  %v387 = vunpack.c.l.b16 %v41
  %v388 = vunpack.c.h.b16 %v41
  %v389 = vunpack.c.l.b16 %v42
  %v390 = vunpack.c.h.b16 %v42
  %v391 = vunpack.c.l.b16 %v43
  %v392 = vunpack.c.h.b16 %v43
  %v393 = vunpack.c.l.b16 %v44
  %v394 = vunpack.c.h.b16 %v44
  %v395 = vunpack.c.l.b16 %v45
  %v396 = vunpack.c.h.b16 %v45
  %v397 = vunpack.c.l.b16 %v46
  %v398 = vunpack.c.h.b16 %v46
  %v399 = vunpack.c.l.b16 %v47
  %v400 = vunpack.c.h.b16 %v47
  %v401 = vunpack.c.l.b16 %v48
  %v402 = vunpack.c.h.b16 %v48
  %v403 = vpack.c.b16 %v373, %v371
  %v404 = vpack.c.b16 %v374, %v372
  %v405 = vpack.c.b16 %v377, %v375
  %v406 = vpack.c.b16 %v378, %v376
  %v407 = vpack.c.b16 %v381, %v379
  %v408 = vpack.c.b16 %v382, %v380
  %v409 = vpack.c.b16 %v385, %v383
  %v410 = vpack.c.b16 %v386, %v384
  %v411 = vpack.c.b16 %v389, %v387
  %v412 = vpack.c.b16 %v390, %v388
  %v413 = vpack.c.b16 %v393, %v391
  %v414 = vpack.c.b16 %v394, %v392
  %v415 = vpack.c.b16 %v397, %v395
  %v416 = vpack.c.b16 %v398, %v396
  %v417 = vpack.c.b16 %v401, %v399
  %v418 = vpack.c.b16 %v402, %v400
  %435 = vmatpush.bf16.msra.mxu0 %v417
  %436 = vmatpush.bf16.msra.mxu0 %v415
  %437 = vmatpush.bf16.msra.mxu0 %v413
  %438 = vmatpush.bf16.msra.mxu0 %v411
  %439 = vmatpush.bf16.msra.mxu0 %v409
  %440 = vmatpush.bf16.msra.mxu0 %v407
  %441 = vmatpush.bf16.msra.mxu0 %v405
  %442 = vmatpush.bf16.msra.mxu0 %v403
  %443 = vmatmul.bf16.gmra.mxu0 %v339
  %v444 = vpop.f32.mrf.mxu0
  %v445 = vadd.f32 %v219, %v444
  %v446 = vpop.f32.mrf.mxu0
  %v447 = vadd.f32 %v221, %v446
  %448 = vmatmul.bf16.gmra.mxu0 %v340
  %v449 = vpop.f32.mrf.mxu0
  %v450 = vadd.f32 %v224, %v449
  %v451 = vpop.f32.mrf.mxu0
  %v452 = vadd.f32 %v226, %v451
  %453 = vmatmul.bf16.gmra.mxu0 %v341
  %v454 = vpop.f32.mrf.mxu0
  %v455 = vadd.f32 %v229, %v454
  %v456 = vpop.f32.mrf.mxu0
  %v457 = vadd.f32 %v231, %v456
  %458 = vmatmul.bf16.gmra.mxu0 %v342
  %v459 = vpop.f32.mrf.mxu0
  %v460 = vadd.f32 %v234, %v459
  %v461 = vpop.f32.mrf.mxu0
  %v462 = vadd.f32 %v236, %v461
  %463 = vmatmul.bf16.gmra.mxu0 %v343
  %v464 = vpop.f32.mrf.mxu0
  %v465 = vadd.f32 %v239, %v464
  %v466 = vpop.f32.mrf.mxu0
  %v467 = vadd.f32 %v241, %v466
  %468 = vmatmul.bf16.gmra.mxu0 %v344
  %v469 = vpop.f32.mrf.mxu0
  %v470 = vadd.f32 %v244, %v469
  %v471 = vpop.f32.mrf.mxu0
  %v472 = vadd.f32 %v246, %v471
  %473 = vmatmul.bf16.gmra.mxu0 %v345
  %v474 = vpop.f32.mrf.mxu0
  %v475 = vadd.f32 %v249, %v474
  %v476 = vpop.f32.mrf.mxu0
  %v477 = vadd.f32 %v251, %v476
  %478 = vmatmul.bf16.gmra.mxu0 %v346
  %v479 = vpop.f32.mrf.mxu0
  %v480 = vadd.f32 %v254, %v479
  %v481 = vpop.f32.mrf.mxu0
  %v482 = vadd.f32 %v256, %v481
  %483 = vdwg.mxu0
  %484 = vmatpush.bf16.msra.mxu0 %v418
  %485 = vmatpush.bf16.msra.mxu0 %v416
  %486 = vmatpush.bf16.msra.mxu0 %v414
  %487 = vmatpush.bf16.msra.mxu0 %v412
  %488 = vmatpush.bf16.msra.mxu0 %v410
  %489 = vmatpush.bf16.msra.mxu0 %v408
  %490 = vmatpush.bf16.msra.mxu0 %v406
  %491 = vmatpush.bf16.msra.mxu0 %v404
  %492 = vmatmul.bf16.gmra.mxu0 %v339
  %v493 = vpop.f32.mrf.mxu0
  %v494 = vadd.f32 %v268, %v493
  %v495 = vpop.f32.mrf.mxu0
  %v496 = vadd.f32 %v270, %v495
  %497 = vmatmul.bf16.gmra.mxu0 %v340
  %v498 = vpop.f32.mrf.mxu0
  %v499 = vadd.f32 %v273, %v498
  %v500 = vpop.f32.mrf.mxu0
  %v501 = vadd.f32 %v275, %v500
  %502 = vmatmul.bf16.gmra.mxu0 %v341
  %v503 = vpop.f32.mrf.mxu0
  %v504 = vadd.f32 %v278, %v503
  %v505 = vpop.f32.mrf.mxu0
  %v506 = vadd.f32 %v280, %v505
  %507 = vmatmul.bf16.gmra.mxu0 %v342
  %v508 = vpop.f32.mrf.mxu0
  %v509 = vadd.f32 %v283, %v508
  %v510 = vpop.f32.mrf.mxu0
  %v511 = vadd.f32 %v285, %v510
  %512 = vmatmul.bf16.gmra.mxu0 %v343
  %v513 = vpop.f32.mrf.mxu0
  %v514 = vadd.f32 %v288, %v513
  %v515 = vpop.f32.mrf.mxu0
  %v516 = vadd.f32 %v290, %v515
  %517 = vmatmul.bf16.gmra.mxu0 %v344
  %v518 = vpop.f32.mrf.mxu0
  %v519 = vadd.f32 %v293, %v518
  %v520 = vpop.f32.mrf.mxu0
  %v521 = vadd.f32 %v295, %v520
  %522 = vmatmul.bf16.gmra.mxu0 %v345
  %v523 = vpop.f32.mrf.mxu0
  %v524 = vadd.f32 %v298, %v523
  %v525 = vpop.f32.mrf.mxu0
  %v526 = vadd.f32 %v300, %v525
  %527 = vmatmul.bf16.gmra.mxu0 %v346
  %v528 = vpop.f32.mrf.mxu0
  %v529 = vadd.f32 %v303, %v528
  %v530 = vpop.f32.mrf.mxu0
  %v531 = vadd.f32 %v305, %v530
  %532 = vdwg.mxu0
  %v533 = vpack.c.bf16 %v494, %v445
  %v534 = vpack.c.bf16 %v496, %v447
  %v535 = vpack.c.bf16 %v499, %v450
  %v536 = vpack.c.bf16 %v501, %v452
  %v537 = vpack.c.bf16 %v504, %v455
  %v538 = vpack.c.bf16 %v506, %v457
  %v539 = vpack.c.bf16 %v509, %v460
  %v540 = vpack.c.bf16 %v511, %v462
  %v541 = vpack.c.bf16 %v514, %v465
  %v542 = vpack.c.bf16 %v516, %v467
  %v543 = vpack.c.bf16 %v519, %v470
  %v544 = vpack.c.bf16 %v521, %v472
  %v545 = vpack.c.bf16 %v524, %v475
  %v546 = vpack.c.bf16 %v526, %v477
  %v547 = vpack.c.bf16 %v529, %v480
  %v548 = vpack.c.bf16 %v531, %v482
  %549 = vst [vmem:[%s4] sm:$0xff] %v533
  %550 = vst [vmem:[%s4 + $0x8] sm:$0xff] %v534
  %551 = vst [vmem:[%s4 + $0x10] sm:$0xff] %v535
  %552 = vst [vmem:[%s4 + $0x18] sm:$0xff] %v536
  %553 = vst [vmem:[%s4 + $0x20] sm:$0xff] %v537
  %554 = vst [vmem:[%s4 + $0x28] sm:$0xff] %v538
  %555 = vst [vmem:[%s4 + $0x30] sm:$0xff] %v539
  %556 = vst [vmem:[%s4 + $0x38] sm:$0xff] %v540
  %557 = vst [vmem:[%s4 + $0x40] sm:$0xff] %v541
  %558 = vst [vmem:[%s4 + $0x48] sm:$0xff] %v542
  %559 = vst [vmem:[%s4 + $0x50] sm:$0xff] %v543
  %560 = vst [vmem:[%s4 + $0x58] sm:$0xff] %v544
  %561 = vst [vmem:[%s4 + $0x60] sm:$0xff] %v545
  %562 = vst [vmem:[%s4 + $0x68] sm:$0xff] %v546
  %563 = vst [vmem:[%s4 + $0x70] sm:$0xff] %v547
  %564 = vst [vmem:[%s4 + $0x78] sm:$0xff] %v548
  // Predicated region
  $region18: #{_lambda_.6} parent=0 // pred_check
    _
  $region19: #{_lambda_.6} parent=0 // pred_check_branch
    %566 = sbr.rel (0) target = $region21
  $region20: #{_lambda_.6} parent=0 // pred_region
    _
  $region21: #{_lambda_.6} parent=0 // pred_fallthru
    _
  // Predicated region
  $region22: #{_lambda_.6} parent=0 // pred_check
    _
  $region23: #{_lambda_.6} parent=0 // pred_check_branch
    %568 = sbr.rel (0) target = $region25
  $region24: #{_lambda_.6} parent=0 // pred_region
    _
  $region25: #{_lambda_.6} parent=0 // pred_fallthru
    _

// kernel: _lambda_.7
$region0: #{_lambda_.7}
  #allocation0 [shape = 'u32[]', space=smem, size = 0x4, offset = 0x4, fixed_abs, tag = 'smem constant byte address 0x4 - core index']
  #allocation1 [shape = 'u32[72,128]{1,0:T(1,128)}', space=vmem, size = 0x9000, scoped, tag = 'internal scratch']
  #allocation2 [shape = 'f32[8,256]{1,0:T(8,128)}', space=vmem, size = 0x2000, scoped, tag = 'scratch operand']
  %s0 = inlined_call_operand.vmem [shape: s32[1,128], index: 0, kind: input, shape index: {}]
  %s1 = inlined_call_operand.vmem [shape: f32[8,1], index: 1, kind: input, shape index: {}]
  %s2 = inlined_call_operand.vmem [shape: bf16[128,256], index: 2, kind: input, shape index: {}]
  %s3 = inlined_call_operand.vmem [shape: bf16[8,128], index: 3, kind: input, shape index: {}]
  %s4 = inlined_call_operand.vmem [shape: f32[1,256], index: 4, kind: input, shape index: {}]
  %s5 = inlined_call_operand.vmem [shape: bf16[128,256], index: 5, kind: input, shape index: {}]
  %s6 = inlined_call_operand.vmem [shape: bf16[256,256], index: 6, kind: input, shape index: {}]
  %s7 = inlined_call_operand.vmem [shape: f32[1,256], index: 7, kind: input, shape index: {}]
  %s8 = inlined_call_operand.vmem [shape: bf16[8,256], index: 8, kind: output, shape index: {}]
  %s9 = sld [smem:[#allocation0]]
  $region50: #{_lambda_.7} parent=0
    _
  %s11 = ssub.s32 1, %s9
  %s12 = scalar_select 0, %s11, %s9
  // Predicated region
  $region2: #{_lambda_.7} parent=0 // pred_check
    _
  $region3: #{_lambda_.7} parent=0 // pred_check_branch
    %14 = sbr.rel (0) target = $region5
  $region4: #{_lambda_.7} parent=0 // pred_region
    _
  $region5: #{_lambda_.7} parent=0 // pred_fallthru
    _
  // Predicated region
  $region6: #{_lambda_.7} parent=0 // pred_check
    _
  $region7: #{_lambda_.7} parent=0 // pred_check_branch
    %16 = sbr.rel (0) target = $region9
  $region8: #{_lambda_.7} parent=0 // pred_region
    _
  $region9: #{_lambda_.7} parent=0 // pred_fallthru
    _
  // Predicated region
  $region10: #{_lambda_.7} parent=0 // pred_check
    _
  $region11: #{_lambda_.7} parent=0 // pred_check_branch
    %18 = sbr.rel (0) target = $region13
  $region12: #{_lambda_.7} parent=0 // pred_region
    _
  $region13: #{_lambda_.7} parent=0 // pred_fallthru
    _
  // Predicated region
  $region14: #{_lambda_.7} parent=0 // pred_check
    _
  $region15: #{_lambda_.7} parent=0 // pred_check_branch
    %20 = sbr.rel (0) target = $region17
  $region16: #{_lambda_.7} parent=0 // pred_region
    _
  $region17: #{_lambda_.7} parent=0 // pred_fallthru
    _
  // Predicated region
  $region18: #{_lambda_.7} parent=0 // pred_check
    _
  $region19: #{_lambda_.7} parent=0 // pred_check_branch
    %22 = sbr.rel (0) target = $region21
  $region20: #{_lambda_.7} parent=0 // pred_region
    _
  $region21: #{_lambda_.7} parent=0 // pred_fallthru
    _
  // Predicated region
  $region22: #{_lambda_.7} parent=0 // pred_check
    _
  $region23: #{_lambda_.7} parent=0 // pred_check_branch
    %24 = sbr.rel (0) target = $region25
  $region24: #{_lambda_.7} parent=0 // pred_region
    _
  $region25: #{_lambda_.7} parent=0 // pred_fallthru
    _
  // Predicated region
  $region26: #{_lambda_.7} parent=0 // pred_check
    _
  $region27: #{_lambda_.7} parent=0 // pred_check_branch
    %26 = sbr.rel (0) target = $region29
  $region28: #{_lambda_.7} parent=0 // pred_region
    _
  $region29: #{_lambda_.7} parent=0 // pred_fallthru
    _
  // Predicated region
  $region30: #{_lambda_.7} parent=0 // pred_check
    _
  $region31: #{_lambda_.7} parent=0 // pred_check_branch
    %28 = sbr.rel (0) target = $region33
  $region32: #{_lambda_.7} parent=0 // pred_region
    _
  $region33: #{_lambda_.7} parent=0 // pred_fallthru
    _
  %p29 = scmp.eq.s32.totalorder 0, 0
  // Predicated region
  $region34: #{_lambda_.7} parent=0 // pred_check
    %p30 = pneg %p29
  $region35: #{_lambda_.7} parent=0 // pred_check_branch
    %32 = sbr.rel (%p30) target = $region37
  $region36: #{_lambda_.7} parent=0 // pred_region
    %33 = vst [vmem:[#allocation2] sm:$0xff] 0.0
    %34 = vst [vmem:[#allocation2 + $0x8] sm:$0xff] 0.0
  $region37: #{_lambda_.7} parent=0 // pred_fallthru
    _
  %s35 = smul.u32 0, 8
  %v36 = vlaneseq
  %v37 = vshrl.u32 %v36, 7
  %v38 = vstv %s35
  %v39 = vadd.s32 %v38, %v37
  %v40 = vld [vmem:[%s0] sm:$0x1]
  %v41 = vperm.slane %v40, 0
  %vm42 = vcmp.eq.s32.totalorder %v39, %v41
  %v43 = vsel %vm42, 1, 0
  %v44 = vcvt.s32.f32 %v43
  %v45 = vpack.c.bf16 %v44, %v44
  %v46 = vld [vmem:[#allocation2] sm:$0xff]
  %v47 = vld [vmem:[#allocation2 + $0x8] sm:$0xff]
  %v48 = vld [vmem:[%s2] sm:$0xff]
  %v49 = vld [vmem:[%s2 + $0x8] sm:$0xff]
  %v50 = vld [vmem:[%s2 + $0x10] sm:$0xff]
  %v51 = vld [vmem:[%s2 + $0x18] sm:$0xff]
  %v52 = vld [vmem:[%s2 + $0x20] sm:$0xff]
  %v53 = vld [vmem:[%s2 + $0x28] sm:$0xff]
  %v54 = vld [vmem:[%s2 + $0x30] sm:$0xff]
  %v55 = vld [vmem:[%s2 + $0x38] sm:$0xff]
  %v56 = vld [vmem:[%s2 + $0x40] sm:$0xff]
  %v57 = vld [vmem:[%s2 + $0x48] sm:$0xff]
  %v58 = vld [vmem:[%s2 + $0x50] sm:$0xff]
  %v59 = vld [vmem:[%s2 + $0x58] sm:$0xff]
  %v60 = vld [vmem:[%s2 + $0x60] sm:$0xff]
  %v61 = vld [vmem:[%s2 + $0x68] sm:$0xff]
  %v62 = vld [vmem:[%s2 + $0x70] sm:$0xff]
  %v63 = vld [vmem:[%s2 + $0x78] sm:$0xff]
  %v80 = vunpack.c.l.b16 %v48
  %v81 = vunpack.c.h.b16 %v48
  %v82 = vunpack.c.l.b16 %v49
  %v83 = vunpack.c.h.b16 %v49
  %v84 = vunpack.c.l.b16 %v50
  %v85 = vunpack.c.h.b16 %v50
  %v86 = vunpack.c.l.b16 %v51
  %v87 = vunpack.c.h.b16 %v51
  %v88 = vunpack.c.l.b16 %v52
  %v89 = vunpack.c.h.b16 %v52
  %v90 = vunpack.c.l.b16 %v53
  %v91 = vunpack.c.h.b16 %v53
  %v92 = vunpack.c.l.b16 %v54
  %v93 = vunpack.c.h.b16 %v54
  %v94 = vunpack.c.l.b16 %v55
  %v95 = vunpack.c.h.b16 %v55
  %v96 = vunpack.c.l.b16 %v56
  %v97 = vunpack.c.h.b16 %v56
  %v98 = vunpack.c.l.b16 %v57
  %v99 = vunpack.c.h.b16 %v57
  %v100 = vunpack.c.l.b16 %v58
  %v101 = vunpack.c.h.b16 %v58
  %v102 = vunpack.c.l.b16 %v59
  %v103 = vunpack.c.h.b16 %v59
  %v104 = vunpack.c.l.b16 %v60
  %v105 = vunpack.c.h.b16 %v60
  %v106 = vunpack.c.l.b16 %v61
  %v107 = vunpack.c.h.b16 %v61
  %v108 = vunpack.c.l.b16 %v62
  %v109 = vunpack.c.h.b16 %v62
  %v110 = vunpack.c.l.b16 %v63
  %v111 = vunpack.c.h.b16 %v63
  %v112 = vpack.c.b16 %v82, %v80
  %v113 = vpack.c.b16 %v83, %v81
  %v114 = vpack.c.b16 %v86, %v84
  %v115 = vpack.c.b16 %v87, %v85
  %v116 = vpack.c.b16 %v90, %v88
  %v117 = vpack.c.b16 %v91, %v89
  %v118 = vpack.c.b16 %v94, %v92
  %v119 = vpack.c.b16 %v95, %v93
  %v120 = vpack.c.b16 %v98, %v96
  %v121 = vpack.c.b16 %v99, %v97
  %v122 = vpack.c.b16 %v102, %v100
  %v123 = vpack.c.b16 %v103, %v101
  %v124 = vpack.c.b16 %v106, %v104
  %v125 = vpack.c.b16 %v107, %v105
  %v126 = vpack.c.b16 %v110, %v108
  %v127 = vpack.c.b16 %v111, %v109
  %144 = vmatpush.bf16.msra.mxu0 %v126
  %145 = vmatpush.bf16.msra.mxu0 %v124
  %146 = vmatpush.bf16.msra.mxu0 %v122
  %147 = vmatpush.bf16.msra.mxu0 %v120
  %148 = vmatpush.bf16.msra.mxu0 %v118
  %149 = vmatpush.bf16.msra.mxu0 %v116
  %150 = vmatpush.bf16.msra.mxu0 %v114
  %151 = vmatpush.bf16.msra.mxu0 %v112
  %152 = vmatmul.bf16.gmra.mxu0 %v45
  %v153 = vpop.f32.mrf.mxu0
  %v154 = vadd.f32 0.0, %v153
  %v155 = vpop.f32.mrf.mxu0
  %156 = vdwg.mxu0
  %157 = vmatpush.bf16.msra.mxu0 %v127
  %158 = vmatpush.bf16.msra.mxu0 %v125
  %159 = vmatpush.bf16.msra.mxu0 %v123
  %160 = vmatpush.bf16.msra.mxu0 %v121
  %161 = vmatpush.bf16.msra.mxu0 %v119
  %162 = vmatpush.bf16.msra.mxu0 %v117
  %163 = vmatpush.bf16.msra.mxu0 %v115
  %164 = vmatpush.bf16.msra.mxu0 %v113
  %165 = vmatmul.bf16.gmra.mxu0 %v45
  %v166 = vpop.f32.mrf.mxu0
  %v167 = vadd.f32 0.0, %v166
  %v168 = vpop.f32.mrf.mxu0
  %169 = vdwg.mxu0
  %v170 = vadd.f32 %v46, %v154
  %v171 = vadd.f32 %v47, %v167
  %172 = vst [vmem:[#allocation2] sm:$0xff] %v170
  %173 = vst [vmem:[#allocation2 + $0x8] sm:$0xff] %v171
  // Predicated region
  $region38: #{_lambda_.7} parent=0 // pred_check
    %p174 = pneg %p29
  $region39: #{_lambda_.7} parent=0 // pred_check_branch
    %176 = sbr.rel (%p174) target = $region41
  $region40: #{_lambda_.7} parent=0 // pred_region
    %v177 = vld [vmem:[%s1] sm:$0xff]
    %vm178 = vcmp.gt.f32.partialorder %v177, 0.0
    %v179 = vsel %vm178, 1, 0
    %v180 = vcvt.s32.f32 %v179
    %v181 = vld [vmem:[#allocation2] sm:$0xff]
    %v182 = vld [vmem:[#allocation2 + $0x8] sm:$0xff]
    %184 = vset.pattern.permute.xlu0 0
    %185 = vperm.xlu0 %184, %v177
    %v186 = vpop.permute.xlu0 %185
    %v188 = vmul.f32 %v181, %v186
    %v189 = vmul.f32 %v182, %v186
    %v190 = vld [vmem:[%s4] sm:$0x3]
    %v192 = vperm.slane %v190, 0
    %v193 = vperm.slane %v190, 1
    %197 = vset.pattern.permute.xlu0 0
    %198 = vperm.xlu0 %197, %v180
    %v199 = vpop.permute.xlu0 %198
    %v201 = vmul.f32 %v192, %v199
    %v202 = vmul.f32 %v193, %v199
    %v203 = vadd.f32 %v188, %v201
    %v204 = vadd.f32 %v189, %v202
    %v205 = vld [vmem:[%s3] sm:$0xf]
    %v206 = vld [vmem:[%s5] sm:$0xff]
    %v207 = vld [vmem:[%s5 + $0x8] sm:$0xff]
    %v208 = vld [vmem:[%s5 + $0x10] sm:$0xff]
    %v209 = vld [vmem:[%s5 + $0x18] sm:$0xff]
    %v210 = vld [vmem:[%s5 + $0x20] sm:$0xff]
    %v211 = vld [vmem:[%s5 + $0x28] sm:$0xff]
    %v212 = vld [vmem:[%s5 + $0x30] sm:$0xff]
    %v213 = vld [vmem:[%s5 + $0x38] sm:$0xff]
    %v214 = vld [vmem:[%s5 + $0x40] sm:$0xff]
    %v215 = vld [vmem:[%s5 + $0x48] sm:$0xff]
    %v216 = vld [vmem:[%s5 + $0x50] sm:$0xff]
    %v217 = vld [vmem:[%s5 + $0x58] sm:$0xff]
    %v218 = vld [vmem:[%s5 + $0x60] sm:$0xff]
    %v219 = vld [vmem:[%s5 + $0x68] sm:$0xff]
    %v220 = vld [vmem:[%s5 + $0x70] sm:$0xff]
    %v221 = vld [vmem:[%s5 + $0x78] sm:$0xff]
    %v222 = vpack.c.bf16 %v203, %v203
    %v223 = vpack.c.bf16 %v204, %v204
    %v224 = vld [vmem:[%s6] sm:$0xff]
    %v225 = vld [vmem:[%s6 + $0x8] sm:$0xff]
    %v226 = vld [vmem:[%s6 + $0x10] sm:$0xff]
    %v227 = vld [vmem:[%s6 + $0x18] sm:$0xff]
    %v228 = vld [vmem:[%s6 + $0x20] sm:$0xff]
    %v229 = vld [vmem:[%s6 + $0x28] sm:$0xff]
    %v230 = vld [vmem:[%s6 + $0x30] sm:$0xff]
    %v231 = vld [vmem:[%s6 + $0x38] sm:$0xff]
    %v232 = vld [vmem:[%s6 + $0x40] sm:$0xff]
    %v233 = vld [vmem:[%s6 + $0x48] sm:$0xff]
    %v234 = vld [vmem:[%s6 + $0x50] sm:$0xff]
    %v235 = vld [vmem:[%s6 + $0x58] sm:$0xff]
    %v236 = vld [vmem:[%s6 + $0x60] sm:$0xff]
    %v237 = vld [vmem:[%s6 + $0x68] sm:$0xff]
    %v238 = vld [vmem:[%s6 + $0x70] sm:$0xff]
    %v239 = vld [vmem:[%s6 + $0x78] sm:$0xff]
    %v240 = vld [vmem:[%s6 + $0x80] sm:$0xff]
    %v241 = vld [vmem:[%s6 + $0x88] sm:$0xff]
    %v242 = vld [vmem:[%s6 + $0x90] sm:$0xff]
    %v243 = vld [vmem:[%s6 + $0x98] sm:$0xff]
    %v244 = vld [vmem:[%s6 + $0xa0] sm:$0xff]
    %v245 = vld [vmem:[%s6 + $0xa8] sm:$0xff]
    %v246 = vld [vmem:[%s6 + $0xb0] sm:$0xff]
    %v247 = vld [vmem:[%s6 + $0xb8] sm:$0xff]
    %v248 = vld [vmem:[%s6 + $0xc0] sm:$0xff]
    %v249 = vld [vmem:[%s6 + $0xc8] sm:$0xff]
    %v250 = vld [vmem:[%s6 + $0xd0] sm:$0xff]
    %v251 = vld [vmem:[%s6 + $0xd8] sm:$0xff]
    %v252 = vld [vmem:[%s6 + $0xe0] sm:$0xff]
    %v253 = vld [vmem:[%s6 + $0xe8] sm:$0xff]
    %v254 = vld [vmem:[%s6 + $0xf0] sm:$0xff]
    %v255 = vld [vmem:[%s6 + $0xf8] sm:$0xff]
    %v288 = vunpack.c.l.b16 %v224
    %v289 = vunpack.c.h.b16 %v224
    %v290 = vunpack.c.l.b16 %v225
    %v291 = vunpack.c.h.b16 %v225
    %v292 = vunpack.c.l.b16 %v226
    %v293 = vunpack.c.h.b16 %v226
    %v294 = vunpack.c.l.b16 %v227
    %v295 = vunpack.c.h.b16 %v227
    %v296 = vunpack.c.l.b16 %v228
    %v297 = vunpack.c.h.b16 %v228
    %v298 = vunpack.c.l.b16 %v229
    %v299 = vunpack.c.h.b16 %v229
    %v300 = vunpack.c.l.b16 %v230
    %v301 = vunpack.c.h.b16 %v230
    %v302 = vunpack.c.l.b16 %v231
    %v303 = vunpack.c.h.b16 %v231
    %v304 = vunpack.c.l.b16 %v232
    %v305 = vunpack.c.h.b16 %v232
    %v306 = vunpack.c.l.b16 %v233
    %v307 = vunpack.c.h.b16 %v233
    %v308 = vunpack.c.l.b16 %v234
    %v309 = vunpack.c.h.b16 %v234
    %v310 = vunpack.c.l.b16 %v235
    %v311 = vunpack.c.h.b16 %v235
    %v312 = vunpack.c.l.b16 %v236
    %v313 = vunpack.c.h.b16 %v236
    %v314 = vunpack.c.l.b16 %v237
    %v315 = vunpack.c.h.b16 %v237
    %v316 = vunpack.c.l.b16 %v238
    %v317 = vunpack.c.h.b16 %v238
    %v318 = vunpack.c.l.b16 %v239
    %v319 = vunpack.c.h.b16 %v239
    %v320 = vunpack.c.l.b16 %v240
    %v321 = vunpack.c.h.b16 %v240
    %v322 = vunpack.c.l.b16 %v241
    %v323 = vunpack.c.h.b16 %v241
    %v324 = vunpack.c.l.b16 %v242
    %v325 = vunpack.c.h.b16 %v242
    %v326 = vunpack.c.l.b16 %v243
    %v327 = vunpack.c.h.b16 %v243
    %v328 = vunpack.c.l.b16 %v244
    %v329 = vunpack.c.h.b16 %v244
    %v330 = vunpack.c.l.b16 %v245
    %v331 = vunpack.c.h.b16 %v245
    %v332 = vunpack.c.l.b16 %v246
    %v333 = vunpack.c.h.b16 %v246
    %v334 = vunpack.c.l.b16 %v247
    %v335 = vunpack.c.h.b16 %v247
    %v336 = vunpack.c.l.b16 %v248
    %v337 = vunpack.c.h.b16 %v248
    %v338 = vunpack.c.l.b16 %v249
    %v339 = vunpack.c.h.b16 %v249
    %v340 = vunpack.c.l.b16 %v250
    %v341 = vunpack.c.h.b16 %v250
    %v342 = vunpack.c.l.b16 %v251
    %v343 = vunpack.c.h.b16 %v251
    %v344 = vunpack.c.l.b16 %v252
    %v345 = vunpack.c.h.b16 %v252
    %v346 = vunpack.c.l.b16 %v253
    %v347 = vunpack.c.h.b16 %v253
    %v348 = vunpack.c.l.b16 %v254
    %v349 = vunpack.c.h.b16 %v254
    %v350 = vunpack.c.l.b16 %v255
    %v351 = vunpack.c.h.b16 %v255
    %v352 = vpack.c.b16 %v290, %v288
    %v353 = vpack.c.b16 %v291, %v289
    %v354 = vpack.c.b16 %v294, %v292
    %v355 = vpack.c.b16 %v295, %v293
    %v356 = vpack.c.b16 %v298, %v296
    %v357 = vpack.c.b16 %v299, %v297
    %v358 = vpack.c.b16 %v302, %v300
    %v359 = vpack.c.b16 %v303, %v301
    %v360 = vpack.c.b16 %v306, %v304
    %v361 = vpack.c.b16 %v307, %v305
    %v362 = vpack.c.b16 %v310, %v308
    %v363 = vpack.c.b16 %v311, %v309
    %v364 = vpack.c.b16 %v314, %v312
    %v365 = vpack.c.b16 %v315, %v313
    %v366 = vpack.c.b16 %v318, %v316
    %v367 = vpack.c.b16 %v319, %v317
    %v368 = vpack.c.b16 %v322, %v320
    %v369 = vpack.c.b16 %v323, %v321
    %v370 = vpack.c.b16 %v326, %v324
    %v371 = vpack.c.b16 %v327, %v325
    %v372 = vpack.c.b16 %v330, %v328
    %v373 = vpack.c.b16 %v331, %v329
    %v374 = vpack.c.b16 %v334, %v332
    %v375 = vpack.c.b16 %v335, %v333
    %v376 = vpack.c.b16 %v338, %v336
    %v377 = vpack.c.b16 %v339, %v337
    %v378 = vpack.c.b16 %v342, %v340
    %v379 = vpack.c.b16 %v343, %v341
    %v380 = vpack.c.b16 %v346, %v344
    %v381 = vpack.c.b16 %v347, %v345
    %v382 = vpack.c.b16 %v350, %v348
    %v383 = vpack.c.b16 %v351, %v349
    %416 = vmatpush.bf16.msra.mxu0 %v366
    %417 = vmatpush.bf16.msra.mxu0 %v364
    %418 = vmatpush.bf16.msra.mxu0 %v362
    %419 = vmatpush.bf16.msra.mxu0 %v360
    %420 = vmatpush.bf16.msra.mxu0 %v358
    %421 = vmatpush.bf16.msra.mxu0 %v356
    %422 = vmatpush.bf16.msra.mxu0 %v354
    %423 = vmatpush.bf16.msra.mxu0 %v352
    %424 = vmatmul.bf16.gmra.mxu0 %v222
    %v425 = vpop.f32.mrf.mxu0
    %v426 = vadd.f32 0.0, %v425
    %v427 = vpop.f32.mrf.mxu0
    %428 = vdwg.mxu0
    %429 = vmatpush.bf16.msra.mxu0 %v382
    %430 = vmatpush.bf16.msra.mxu0 %v380
    %431 = vmatpush.bf16.msra.mxu0 %v378
    %432 = vmatpush.bf16.msra.mxu0 %v376
    %433 = vmatpush.bf16.msra.mxu0 %v374
    %434 = vmatpush.bf16.msra.mxu0 %v372
    %435 = vmatpush.bf16.msra.mxu0 %v370
    %436 = vmatpush.bf16.msra.mxu0 %v368
    %437 = vmatmul.bf16.gmra.mxu0 %v223
    %v438 = vpop.f32.mrf.mxu0
    %v439 = vadd.f32 %v426, %v438
    %v440 = vpop.f32.mrf.mxu0
    %441 = vdwg.mxu0
    %442 = vmatpush.bf16.msra.mxu0 %v367
    %443 = vmatpush.bf16.msra.mxu0 %v365
    %444 = vmatpush.bf16.msra.mxu0 %v363
    %445 = vmatpush.bf16.msra.mxu0 %v361
    %446 = vmatpush.bf16.msra.mxu0 %v359
    %447 = vmatpush.bf16.msra.mxu0 %v357
    %448 = vmatpush.bf16.msra.mxu0 %v355
    %449 = vmatpush.bf16.msra.mxu0 %v353
    %450 = vmatmul.bf16.gmra.mxu0 %v222
    %v451 = vpop.f32.mrf.mxu0
    %v452 = vadd.f32 0.0, %v451
    %v453 = vpop.f32.mrf.mxu0
    %454 = vdwg.mxu0
    %455 = vmatpush.bf16.msra.mxu0 %v383
    %456 = vmatpush.bf16.msra.mxu0 %v381
    %457 = vmatpush.bf16.msra.mxu0 %v379
    %458 = vmatpush.bf16.msra.mxu0 %v377
    %459 = vmatpush.bf16.msra.mxu0 %v375
    %460 = vmatpush.bf16.msra.mxu0 %v373
    %461 = vmatpush.bf16.msra.mxu0 %v371
    %462 = vmatpush.bf16.msra.mxu0 %v369
    %463 = vmatmul.bf16.gmra.mxu0 %v223
    %v464 = vpop.f32.mrf.mxu0
    %v465 = vadd.f32 %v452, %v464
    %v466 = vpop.f32.mrf.mxu0
    %467 = vdwg.mxu0
    %v484 = vunpack.c.l.b16 %v206
    %v485 = vunpack.c.h.b16 %v206
    %v486 = vunpack.c.l.b16 %v207
    %v487 = vunpack.c.h.b16 %v207
    %v488 = vunpack.c.l.b16 %v208
    %v489 = vunpack.c.h.b16 %v208
    %v490 = vunpack.c.l.b16 %v209
    %v491 = vunpack.c.h.b16 %v209
    %v492 = vunpack.c.l.b16 %v210
    %v493 = vunpack.c.h.b16 %v210
    %v494 = vunpack.c.l.b16 %v211
    %v495 = vunpack.c.h.b16 %v211
    %v496 = vunpack.c.l.b16 %v212
    %v497 = vunpack.c.h.b16 %v212
    %v498 = vunpack.c.l.b16 %v213
    %v499 = vunpack.c.h.b16 %v213
    %v500 = vunpack.c.l.b16 %v214
    %v501 = vunpack.c.h.b16 %v214
    %v502 = vunpack.c.l.b16 %v215
    %v503 = vunpack.c.h.b16 %v215
    %v504 = vunpack.c.l.b16 %v216
    %v505 = vunpack.c.h.b16 %v216
    %v506 = vunpack.c.l.b16 %v217
    %v507 = vunpack.c.h.b16 %v217
    %v508 = vunpack.c.l.b16 %v218
    %v509 = vunpack.c.h.b16 %v218
    %v510 = vunpack.c.l.b16 %v219
    %v511 = vunpack.c.h.b16 %v219
    %v512 = vunpack.c.l.b16 %v220
    %v513 = vunpack.c.h.b16 %v220
    %v514 = vunpack.c.l.b16 %v221
    %v515 = vunpack.c.h.b16 %v221
    %v516 = vpack.c.b16 %v486, %v484
    %v517 = vpack.c.b16 %v487, %v485
    %v518 = vpack.c.b16 %v490, %v488
    %v519 = vpack.c.b16 %v491, %v489
    %v520 = vpack.c.b16 %v494, %v492
    %v521 = vpack.c.b16 %v495, %v493
    %v522 = vpack.c.b16 %v498, %v496
    %v523 = vpack.c.b16 %v499, %v497
    %v524 = vpack.c.b16 %v502, %v500
    %v525 = vpack.c.b16 %v503, %v501
    %v526 = vpack.c.b16 %v506, %v504
    %v527 = vpack.c.b16 %v507, %v505
    %v528 = vpack.c.b16 %v510, %v508
    %v529 = vpack.c.b16 %v511, %v509
    %v530 = vpack.c.b16 %v514, %v512
    %v531 = vpack.c.b16 %v515, %v513
    %548 = vmatpush.bf16.msra.mxu0 %v530
    %549 = vmatpush.bf16.msra.mxu0 %v528
    %550 = vmatpush.bf16.msra.mxu0 %v526
    %551 = vmatpush.bf16.msra.mxu0 %v524
    %552 = vmatpush.bf16.msra.mxu0 %v522
    %553 = vmatpush.bf16.msra.mxu0 %v520
    %554 = vmatpush.bf16.msra.mxu0 %v518
    %555 = vmatpush.bf16.msra.mxu0 %v516
    %556 = vmatmul.bf16.gmra.mxu0 %v205
    %v557 = vpop.f32.mrf.mxu0
    %v558 = vadd.f32 %v439, %v557
    %v559 = vpop.f32.mrf.mxu0
    %560 = vdwg.mxu0
    %561 = vmatpush.bf16.msra.mxu0 %v531
    %562 = vmatpush.bf16.msra.mxu0 %v529
    %563 = vmatpush.bf16.msra.mxu0 %v527
    %564 = vmatpush.bf16.msra.mxu0 %v525
    %565 = vmatpush.bf16.msra.mxu0 %v523
    %566 = vmatpush.bf16.msra.mxu0 %v521
    %567 = vmatpush.bf16.msra.mxu0 %v519
    %568 = vmatpush.bf16.msra.mxu0 %v517
    %569 = vmatmul.bf16.gmra.mxu0 %v205
    %v570 = vpop.f32.mrf.mxu0
    %v571 = vadd.f32 %v465, %v570
    %v572 = vpop.f32.mrf.mxu0
    %573 = vdwg.mxu0
    %v574 = vld [vmem:[%s7] sm:$0x3]
    %v576 = vperm.slane %v574, 0
    %v577 = vperm.slane %v574, 1
    %v580 = vadd.f32 %v558, %v576
    %v581 = vadd.f32 %v571, %v577
    %v582 = vmax.f32 %v580, 0.0
    %v583 = vmax.f32 %v581, 0.0
    %v584 = vpack.c.bf16 %v583, %v582
    %585 = vst [vmem:[%s8] sm:$0xff] %v584
  $region41: #{_lambda_.7} parent=0 // pred_fallthru
    _
  // Predicated region
  $region42: #{_lambda_.7} parent=0 // pred_check
    _
  $region43: #{_lambda_.7} parent=0 // pred_check_branch
    %587 = sbr.rel (0) target = $region45
  $region44: #{_lambda_.7} parent=0 // pred_region
    _
  $region45: #{_lambda_.7} parent=0 // pred_fallthru
    _
  // Predicated region
  $region46: #{_lambda_.7} parent=0 // pred_check
    _
  $region47: #{_lambda_.7} parent=0 // pred_check_branch
    %589 = sbr.rel (0) target = $region49
  $region48: #{_lambda_.7} parent=0 // pred_region
    _
  $region49: #{_lambda_.7} parent=0 // pred_fallthru
    _

// kernel: _lambda_.8
$region0: #{_lambda_.8}
  #allocation0 [shape = 'u32[]', space=smem, size = 0x4, offset = 0x4, fixed_abs, tag = 'smem constant byte address 0x4 - core index']
  #allocation1 [shape = 'u32[72,128]{1,0:T(1,128)}', space=vmem, size = 0x9000, scoped, tag = 'internal scratch']
  %s0 = inlined_call_operand.vmem [shape: bf16[128,256], index: 0, kind: input, shape index: {}]
  %s1 = inlined_call_operand.vmem [shape: bf16[128,128], index: 1, kind: input, shape index: {}]
  %s2 = inlined_call_operand.vmem [shape: bf16[256,256], index: 2, kind: input, shape index: {}]
  %s3 = inlined_call_operand.vmem [shape: bf16[128,256], index: 3, kind: input, shape index: {}]
  %s4 = inlined_call_operand.vmem [shape: bf16[128,256], index: 4, kind: output, shape index: {}]
  %s5 = sld [smem:[#allocation0]]
  $region26: #{_lambda_.8} parent=0
    _
  %s7 = ssub.s32 1, %s5
  %s8 = scalar_select 0, %s7, %s5
  // Predicated region
  $region2: #{_lambda_.8} parent=0 // pred_check
    _
  $region3: #{_lambda_.8} parent=0 // pred_check_branch
    %10 = sbr.rel (0) target = $region5
  $region4: #{_lambda_.8} parent=0 // pred_region
    _
  $region5: #{_lambda_.8} parent=0 // pred_fallthru
    _
  // Predicated region
  $region6: #{_lambda_.8} parent=0 // pred_check
    _
  $region7: #{_lambda_.8} parent=0 // pred_check_branch
    %12 = sbr.rel (0) target = $region9
  $region8: #{_lambda_.8} parent=0 // pred_region
    _
  $region9: #{_lambda_.8} parent=0 // pred_fallthru
    _
  // Predicated region
  $region10: #{_lambda_.8} parent=0 // pred_check
    _
  $region11: #{_lambda_.8} parent=0 // pred_check_branch
    %14 = sbr.rel (0) target = $region13
  $region12: #{_lambda_.8} parent=0 // pred_region
    _
  $region13: #{_lambda_.8} parent=0 // pred_fallthru
    _
  // Predicated region
  $region14: #{_lambda_.8} parent=0 // pred_check
    _
  $region15: #{_lambda_.8} parent=0 // pred_check_branch
    %16 = sbr.rel (0) target = $region17
  $region16: #{_lambda_.8} parent=0 // pred_region
    _
  $region17: #{_lambda_.8} parent=0 // pred_fallthru
    _
  %v17 = vld [vmem:[%s0] sm:$0xff]
  %v18 = vld [vmem:[%s0 + $0x8] sm:$0xff]
  %v19 = vld [vmem:[%s0 + $0x10] sm:$0xff]
  %v20 = vld [vmem:[%s0 + $0x18] sm:$0xff]
  %v21 = vld [vmem:[%s0 + $0x20] sm:$0xff]
  %v22 = vld [vmem:[%s0 + $0x28] sm:$0xff]
  %v23 = vld [vmem:[%s0 + $0x30] sm:$0xff]
  %v24 = vld [vmem:[%s0 + $0x38] sm:$0xff]
  %v25 = vld [vmem:[%s0 + $0x40] sm:$0xff]
  %v26 = vld [vmem:[%s0 + $0x48] sm:$0xff]
  %v27 = vld [vmem:[%s0 + $0x50] sm:$0xff]
  %v28 = vld [vmem:[%s0 + $0x58] sm:$0xff]
  %v29 = vld [vmem:[%s0 + $0x60] sm:$0xff]
  %v30 = vld [vmem:[%s0 + $0x68] sm:$0xff]
  %v31 = vld [vmem:[%s0 + $0x70] sm:$0xff]
  %v32 = vld [vmem:[%s0 + $0x78] sm:$0xff]
  %v33 = vld [vmem:[%s2] sm:$0xff]
  %v34 = vld [vmem:[%s2 + $0x8] sm:$0xff]
  %v35 = vld [vmem:[%s2 + $0x10] sm:$0xff]
  %v36 = vld [vmem:[%s2 + $0x18] sm:$0xff]
  %v37 = vld [vmem:[%s2 + $0x20] sm:$0xff]
  %v38 = vld [vmem:[%s2 + $0x28] sm:$0xff]
  %v39 = vld [vmem:[%s2 + $0x30] sm:$0xff]
  %v40 = vld [vmem:[%s2 + $0x38] sm:$0xff]
  %v41 = vld [vmem:[%s2 + $0x40] sm:$0xff]
  %v42 = vld [vmem:[%s2 + $0x48] sm:$0xff]
  %v43 = vld [vmem:[%s2 + $0x50] sm:$0xff]
  %v44 = vld [vmem:[%s2 + $0x58] sm:$0xff]
  %v45 = vld [vmem:[%s2 + $0x60] sm:$0xff]
  %v46 = vld [vmem:[%s2 + $0x68] sm:$0xff]
  %v47 = vld [vmem:[%s2 + $0x70] sm:$0xff]
  %v48 = vld [vmem:[%s2 + $0x78] sm:$0xff]
  %v49 = vld [vmem:[%s2 + $0x80] sm:$0xff]
  %v50 = vld [vmem:[%s2 + $0x88] sm:$0xff]
  %v51 = vld [vmem:[%s2 + $0x90] sm:$0xff]
  %v52 = vld [vmem:[%s2 + $0x98] sm:$0xff]
  %v53 = vld [vmem:[%s2 + $0xa0] sm:$0xff]
  %v54 = vld [vmem:[%s2 + $0xa8] sm:$0xff]
  %v55 = vld [vmem:[%s2 + $0xb0] sm:$0xff]
  %v56 = vld [vmem:[%s2 + $0xb8] sm:$0xff]
  %v57 = vld [vmem:[%s2 + $0xc0] sm:$0xff]
  %v58 = vld [vmem:[%s2 + $0xc8] sm:$0xff]
  %v59 = vld [vmem:[%s2 + $0xd0] sm:$0xff]
  %v60 = vld [vmem:[%s2 + $0xd8] sm:$0xff]
  %v61 = vld [vmem:[%s2 + $0xe0] sm:$0xff]
  %v62 = vld [vmem:[%s2 + $0xe8] sm:$0xff]
  %v63 = vld [vmem:[%s2 + $0xf0] sm:$0xff]
  %v64 = vld [vmem:[%s2 + $0xf8] sm:$0xff]
  %v65 = vld [vmem:[%s1] sm:$0xf]
  %v66 = vld [vmem:[%s1 + $0x4] sm:$0xf]
  %v67 = vld [vmem:[%s1 + $0x8] sm:$0xf]
  %v68 = vld [vmem:[%s1 + $0xc] sm:$0xf]
  %v69 = vld [vmem:[%s1 + $0x10] sm:$0xf]
  %v70 = vld [vmem:[%s1 + $0x14] sm:$0xf]
  %v71 = vld [vmem:[%s1 + $0x18] sm:$0xf]
  %v72 = vld [vmem:[%s1 + $0x1c] sm:$0xf]
  %v73 = vld [vmem:[%s1 + $0x20] sm:$0xf]
  %v74 = vld [vmem:[%s1 + $0x24] sm:$0xf]
  %v75 = vld [vmem:[%s1 + $0x28] sm:$0xf]
  %v76 = vld [vmem:[%s1 + $0x2c] sm:$0xf]
  %v77 = vld [vmem:[%s1 + $0x30] sm:$0xf]
  %v78 = vld [vmem:[%s1 + $0x34] sm:$0xf]
  %v79 = vld [vmem:[%s1 + $0x38] sm:$0xf]
  %v80 = vld [vmem:[%s1 + $0x3c] sm:$0xf]
  %v81 = vld [vmem:[%s3] sm:$0xff]
  %v82 = vld [vmem:[%s3 + $0x8] sm:$0xff]
  %v83 = vld [vmem:[%s3 + $0x10] sm:$0xff]
  %v84 = vld [vmem:[%s3 + $0x18] sm:$0xff]
  %v85 = vld [vmem:[%s3 + $0x20] sm:$0xff]
  %v86 = vld [vmem:[%s3 + $0x28] sm:$0xff]
  %v87 = vld [vmem:[%s3 + $0x30] sm:$0xff]
  %v88 = vld [vmem:[%s3 + $0x38] sm:$0xff]
  %v89 = vld [vmem:[%s3 + $0x40] sm:$0xff]
  %v90 = vld [vmem:[%s3 + $0x48] sm:$0xff]
  %v91 = vld [vmem:[%s3 + $0x50] sm:$0xff]
  %v92 = vld [vmem:[%s3 + $0x58] sm:$0xff]
  %v93 = vld [vmem:[%s3 + $0x60] sm:$0xff]
  %v94 = vld [vmem:[%s3 + $0x68] sm:$0xff]
  %v95 = vld [vmem:[%s3 + $0x70] sm:$0xff]
  %v96 = vld [vmem:[%s3 + $0x78] sm:$0xff]
  %v113 = vunpack.c.l.b16 %v65
  %v114 = vunpack.c.l.b16 %v66
  %v115 = vunpack.c.l.b16 %v67
  %v116 = vunpack.c.l.b16 %v68
  %v117 = vunpack.c.l.b16 %v69
  %v118 = vunpack.c.l.b16 %v70
  %v119 = vunpack.c.l.b16 %v71
  %v120 = vunpack.c.l.b16 %v72
  %v121 = vunpack.c.l.b16 %v73
  %v122 = vunpack.c.l.b16 %v74
  %v123 = vunpack.c.l.b16 %v75
  %v124 = vunpack.c.l.b16 %v76
  %v125 = vunpack.c.l.b16 %v77
  %v126 = vunpack.c.l.b16 %v78
  %v127 = vunpack.c.l.b16 %v79
  %v128 = vunpack.c.l.b16 %v80
  %v129 = vpack.c.b16 %v114, %v113
  %v130 = vpack.c.b16 %v116, %v115
  %v131 = vpack.c.b16 %v118, %v117
  %v132 = vpack.c.b16 %v120, %v119
  %v133 = vpack.c.b16 %v122, %v121
  %v134 = vpack.c.b16 %v124, %v123
  %v135 = vpack.c.b16 %v126, %v125
  %v136 = vpack.c.b16 %v128, %v127
  %v161 = vunpack.c.l.b16 %v81
  %v162 = vunpack.c.h.b16 %v81
  %v163 = vunpack.c.l.b16 %v82
  %v164 = vunpack.c.h.b16 %v82
  %v165 = vunpack.c.l.b16 %v83
  %v166 = vunpack.c.h.b16 %v83
  %v167 = vunpack.c.l.b16 %v84
  %v168 = vunpack.c.h.b16 %v84
  %v169 = vunpack.c.l.b16 %v85
  %v170 = vunpack.c.h.b16 %v85
  %v171 = vunpack.c.l.b16 %v86
  %v172 = vunpack.c.h.b16 %v86
  %v173 = vunpack.c.l.b16 %v87
  %v174 = vunpack.c.h.b16 %v87
  %v175 = vunpack.c.l.b16 %v88
  %v176 = vunpack.c.h.b16 %v88
  %v177 = vunpack.c.l.b16 %v89
  %v178 = vunpack.c.h.b16 %v89
  %v179 = vunpack.c.l.b16 %v90
  %v180 = vunpack.c.h.b16 %v90
  %v181 = vunpack.c.l.b16 %v91
  %v182 = vunpack.c.h.b16 %v91
  %v183 = vunpack.c.l.b16 %v92
  %v184 = vunpack.c.h.b16 %v92
  %v185 = vunpack.c.l.b16 %v93
  %v186 = vunpack.c.h.b16 %v93
  %v187 = vunpack.c.l.b16 %v94
  %v188 = vunpack.c.h.b16 %v94
  %v189 = vunpack.c.l.b16 %v95
  %v190 = vunpack.c.h.b16 %v95
  %v191 = vunpack.c.l.b16 %v96
  %v192 = vunpack.c.h.b16 %v96
  %v193 = vpack.c.b16 %v163, %v161
  %v194 = vpack.c.b16 %v164, %v162
  %v195 = vpack.c.b16 %v167, %v165
  %v196 = vpack.c.b16 %v168, %v166
  %v197 = vpack.c.b16 %v171, %v169
  %v198 = vpack.c.b16 %v172, %v170
  %v199 = vpack.c.b16 %v175, %v173
  %v200 = vpack.c.b16 %v176, %v174
  %v201 = vpack.c.b16 %v179, %v177
  %v202 = vpack.c.b16 %v180, %v178
  %v203 = vpack.c.b16 %v183, %v181
  %v204 = vpack.c.b16 %v184, %v182
  %v205 = vpack.c.b16 %v187, %v185
  %v206 = vpack.c.b16 %v188, %v186
  %v207 = vpack.c.b16 %v191, %v189
  %v208 = vpack.c.b16 %v192, %v190
  %225 = vmatpush.bf16.msra.mxu0 %v207
  %226 = vmatpush.bf16.msra.mxu0 %v205
  %227 = vmatpush.bf16.msra.mxu0 %v203
  %228 = vmatpush.bf16.msra.mxu0 %v201
  %229 = vmatpush.bf16.msra.mxu0 %v199
  %230 = vmatpush.bf16.msra.mxu0 %v197
  %231 = vmatpush.bf16.msra.mxu0 %v195
  %232 = vmatpush.bf16.msra.mxu0 %v193
  %233 = vmatmul.bf16.gmra.mxu0 %v129
  %v234 = vpop.f32.mrf.mxu0
  %v235 = vadd.f32 0.0, %v234
  %v236 = vpop.f32.mrf.mxu0
  %v237 = vadd.f32 0.0, %v236
  %238 = vmatmul.bf16.gmra.mxu0 %v130
  %v239 = vpop.f32.mrf.mxu0
  %v240 = vadd.f32 0.0, %v239
  %v241 = vpop.f32.mrf.mxu0
  %v242 = vadd.f32 0.0, %v241
  %243 = vmatmul.bf16.gmra.mxu0 %v131
  %v244 = vpop.f32.mrf.mxu0
  %v245 = vadd.f32 0.0, %v244
  %v246 = vpop.f32.mrf.mxu0
  %v247 = vadd.f32 0.0, %v246
  %248 = vmatmul.bf16.gmra.mxu0 %v132
  %v249 = vpop.f32.mrf.mxu0
  %v250 = vadd.f32 0.0, %v249
  %v251 = vpop.f32.mrf.mxu0
  %v252 = vadd.f32 0.0, %v251
  %253 = vmatmul.bf16.gmra.mxu0 %v133
  %v254 = vpop.f32.mrf.mxu0
  %v255 = vadd.f32 0.0, %v254
  %v256 = vpop.f32.mrf.mxu0
  %v257 = vadd.f32 0.0, %v256
  %258 = vmatmul.bf16.gmra.mxu0 %v134
  %v259 = vpop.f32.mrf.mxu0
  %v260 = vadd.f32 0.0, %v259
  %v261 = vpop.f32.mrf.mxu0
  %v262 = vadd.f32 0.0, %v261
  %263 = vmatmul.bf16.gmra.mxu0 %v135
  %v264 = vpop.f32.mrf.mxu0
  %v265 = vadd.f32 0.0, %v264
  %v266 = vpop.f32.mrf.mxu0
  %v267 = vadd.f32 0.0, %v266
  %268 = vmatmul.bf16.gmra.mxu0 %v136
  %v269 = vpop.f32.mrf.mxu0
  %v270 = vadd.f32 0.0, %v269
  %v271 = vpop.f32.mrf.mxu0
  %v272 = vadd.f32 0.0, %v271
  %273 = vdwg.mxu0
  %274 = vmatpush.bf16.msra.mxu0 %v208
  %275 = vmatpush.bf16.msra.mxu0 %v206
  %276 = vmatpush.bf16.msra.mxu0 %v204
  %277 = vmatpush.bf16.msra.mxu0 %v202
  %278 = vmatpush.bf16.msra.mxu0 %v200
  %279 = vmatpush.bf16.msra.mxu0 %v198
  %280 = vmatpush.bf16.msra.mxu0 %v196
  %281 = vmatpush.bf16.msra.mxu0 %v194
  %282 = vmatmul.bf16.gmra.mxu0 %v129
  %v283 = vpop.f32.mrf.mxu0
  %v284 = vadd.f32 0.0, %v283
  %v285 = vpop.f32.mrf.mxu0
  %v286 = vadd.f32 0.0, %v285
  %287 = vmatmul.bf16.gmra.mxu0 %v130
  %v288 = vpop.f32.mrf.mxu0
  %v289 = vadd.f32 0.0, %v288
  %v290 = vpop.f32.mrf.mxu0
  %v291 = vadd.f32 0.0, %v290
  %292 = vmatmul.bf16.gmra.mxu0 %v131
  %v293 = vpop.f32.mrf.mxu0
  %v294 = vadd.f32 0.0, %v293
  %v295 = vpop.f32.mrf.mxu0
  %v296 = vadd.f32 0.0, %v295
  %297 = vmatmul.bf16.gmra.mxu0 %v132
  %v298 = vpop.f32.mrf.mxu0
  %v299 = vadd.f32 0.0, %v298
  %v300 = vpop.f32.mrf.mxu0
  %v301 = vadd.f32 0.0, %v300
  %302 = vmatmul.bf16.gmra.mxu0 %v133
  %v303 = vpop.f32.mrf.mxu0
  %v304 = vadd.f32 0.0, %v303
  %v305 = vpop.f32.mrf.mxu0
  %v306 = vadd.f32 0.0, %v305
  %307 = vmatmul.bf16.gmra.mxu0 %v134
  %v308 = vpop.f32.mrf.mxu0
  %v309 = vadd.f32 0.0, %v308
  %v310 = vpop.f32.mrf.mxu0
  %v311 = vadd.f32 0.0, %v310
  %312 = vmatmul.bf16.gmra.mxu0 %v135
  %v313 = vpop.f32.mrf.mxu0
  %v314 = vadd.f32 0.0, %v313
  %v315 = vpop.f32.mrf.mxu0
  %v316 = vadd.f32 0.0, %v315
  %317 = vmatmul.bf16.gmra.mxu0 %v136
  %v318 = vpop.f32.mrf.mxu0
  %v319 = vadd.f32 0.0, %v318
  %v320 = vpop.f32.mrf.mxu0
  %v321 = vadd.f32 0.0, %v320
  %322 = vdwg.mxu0
  %v339 = vunpack.c.l.b16 %v17
  %v340 = vunpack.c.h.b16 %v17
  %v341 = vunpack.c.l.b16 %v18
  %v342 = vunpack.c.h.b16 %v18
  %v343 = vunpack.c.l.b16 %v19
  %v344 = vunpack.c.h.b16 %v19
  %v345 = vunpack.c.l.b16 %v20
  %v346 = vunpack.c.h.b16 %v20
  %v347 = vunpack.c.l.b16 %v21
  %v348 = vunpack.c.h.b16 %v21
  %v349 = vunpack.c.l.b16 %v22
  %v350 = vunpack.c.h.b16 %v22
  %v351 = vunpack.c.l.b16 %v23
  %v352 = vunpack.c.h.b16 %v23
  %v353 = vunpack.c.l.b16 %v24
  %v354 = vunpack.c.h.b16 %v24
  %v355 = vunpack.c.l.b16 %v25
  %v356 = vunpack.c.h.b16 %v25
  %v357 = vunpack.c.l.b16 %v26
  %v358 = vunpack.c.h.b16 %v26
  %v359 = vunpack.c.l.b16 %v27
  %v360 = vunpack.c.h.b16 %v27
  %v361 = vunpack.c.l.b16 %v28
  %v362 = vunpack.c.h.b16 %v28
  %v363 = vunpack.c.l.b16 %v29
  %v364 = vunpack.c.h.b16 %v29
  %v365 = vunpack.c.l.b16 %v30
  %v366 = vunpack.c.h.b16 %v30
  %v367 = vunpack.c.l.b16 %v31
  %v368 = vunpack.c.h.b16 %v31
  %v369 = vunpack.c.l.b16 %v32
  %v370 = vunpack.c.h.b16 %v32
  %v371 = vpack.c.b16 %v341, %v339
  %v372 = vpack.c.b16 %v342, %v340
  %v373 = vpack.c.b16 %v345, %v343
  %v374 = vpack.c.b16 %v346, %v344
  %v375 = vpack.c.b16 %v349, %v347
  %v376 = vpack.c.b16 %v350, %v348
  %v377 = vpack.c.b16 %v353, %v351
  %v378 = vpack.c.b16 %v354, %v352
  %v379 = vpack.c.b16 %v357, %v355
  %v380 = vpack.c.b16 %v358, %v356
  %v381 = vpack.c.b16 %v361, %v359
  %v382 = vpack.c.b16 %v362, %v360
  %v383 = vpack.c.b16 %v365, %v363
  %v384 = vpack.c.b16 %v366, %v364
  %v385 = vpack.c.b16 %v369, %v367
  %v386 = vpack.c.b16 %v370, %v368
  %v435 = vunpack.c.l.b16 %v33
  %v436 = vunpack.c.h.b16 %v33
  %v437 = vunpack.c.l.b16 %v34
  %v438 = vunpack.c.h.b16 %v34
  %v439 = vunpack.c.l.b16 %v35
  %v440 = vunpack.c.h.b16 %v35
  %v441 = vunpack.c.l.b16 %v36
  %v442 = vunpack.c.h.b16 %v36
  %v443 = vunpack.c.l.b16 %v37
  %v444 = vunpack.c.h.b16 %v37
  %v445 = vunpack.c.l.b16 %v38
  %v446 = vunpack.c.h.b16 %v38
  %v447 = vunpack.c.l.b16 %v39
  %v448 = vunpack.c.h.b16 %v39
  %v449 = vunpack.c.l.b16 %v40
  %v450 = vunpack.c.h.b16 %v40
  %v451 = vunpack.c.l.b16 %v41
  %v452 = vunpack.c.h.b16 %v41
  %v453 = vunpack.c.l.b16 %v42
  %v454 = vunpack.c.h.b16 %v42
  %v455 = vunpack.c.l.b16 %v43
  %v456 = vunpack.c.h.b16 %v43
  %v457 = vunpack.c.l.b16 %v44
  %v458 = vunpack.c.h.b16 %v44
  %v459 = vunpack.c.l.b16 %v45
  %v460 = vunpack.c.h.b16 %v45
  %v461 = vunpack.c.l.b16 %v46
  %v462 = vunpack.c.h.b16 %v46
  %v463 = vunpack.c.l.b16 %v47
  %v464 = vunpack.c.h.b16 %v47
  %v465 = vunpack.c.l.b16 %v48
  %v466 = vunpack.c.h.b16 %v48
  %v467 = vunpack.c.l.b16 %v49
  %v468 = vunpack.c.h.b16 %v49
  %v469 = vunpack.c.l.b16 %v50
  %v470 = vunpack.c.h.b16 %v50
  %v471 = vunpack.c.l.b16 %v51
  %v472 = vunpack.c.h.b16 %v51
  %v473 = vunpack.c.l.b16 %v52
  %v474 = vunpack.c.h.b16 %v52
  %v475 = vunpack.c.l.b16 %v53
  %v476 = vunpack.c.h.b16 %v53
  %v477 = vunpack.c.l.b16 %v54
  %v478 = vunpack.c.h.b16 %v54
  %v479 = vunpack.c.l.b16 %v55
  %v480 = vunpack.c.h.b16 %v55
  %v481 = vunpack.c.l.b16 %v56
  %v482 = vunpack.c.h.b16 %v56
  %v483 = vunpack.c.l.b16 %v57
  %v484 = vunpack.c.h.b16 %v57
  %v485 = vunpack.c.l.b16 %v58
  %v486 = vunpack.c.h.b16 %v58
  %v487 = vunpack.c.l.b16 %v59
  %v488 = vunpack.c.h.b16 %v59
  %v489 = vunpack.c.l.b16 %v60
  %v490 = vunpack.c.h.b16 %v60
  %v491 = vunpack.c.l.b16 %v61
  %v492 = vunpack.c.h.b16 %v61
  %v493 = vunpack.c.l.b16 %v62
  %v494 = vunpack.c.h.b16 %v62
  %v495 = vunpack.c.l.b16 %v63
  %v496 = vunpack.c.h.b16 %v63
  %v497 = vunpack.c.l.b16 %v64
  %v498 = vunpack.c.h.b16 %v64
  %v499 = vpack.c.b16 %v437, %v435
  %v500 = vpack.c.b16 %v438, %v436
  %v501 = vpack.c.b16 %v441, %v439
  %v502 = vpack.c.b16 %v442, %v440
  %v503 = vpack.c.b16 %v445, %v443
  %v504 = vpack.c.b16 %v446, %v444
  %v505 = vpack.c.b16 %v449, %v447
  %v506 = vpack.c.b16 %v450, %v448
  %v507 = vpack.c.b16 %v453, %v451
  %v508 = vpack.c.b16 %v454, %v452
  %v509 = vpack.c.b16 %v457, %v455
  %v510 = vpack.c.b16 %v458, %v456
  %v511 = vpack.c.b16 %v461, %v459
  %v512 = vpack.c.b16 %v462, %v460
  %v513 = vpack.c.b16 %v465, %v463
  %v514 = vpack.c.b16 %v466, %v464
  %v515 = vpack.c.b16 %v469, %v467
  %v516 = vpack.c.b16 %v470, %v468
  %v517 = vpack.c.b16 %v473, %v471
  %v518 = vpack.c.b16 %v474, %v472
  %v519 = vpack.c.b16 %v477, %v475
  %v520 = vpack.c.b16 %v478, %v476
  %v521 = vpack.c.b16 %v481, %v479
  %v522 = vpack.c.b16 %v482, %v480
  %v523 = vpack.c.b16 %v485, %v483
  %v524 = vpack.c.b16 %v486, %v484
  %v525 = vpack.c.b16 %v489, %v487
  %v526 = vpack.c.b16 %v490, %v488
  %v527 = vpack.c.b16 %v493, %v491
  %v528 = vpack.c.b16 %v494, %v492
  %v529 = vpack.c.b16 %v497, %v495
  %v530 = vpack.c.b16 %v498, %v496
  %563 = vmatpush.bf16.msra.mxu0 %v513
  %564 = vmatpush.bf16.msra.mxu0 %v511
  %565 = vmatpush.bf16.msra.mxu0 %v509
  %566 = vmatpush.bf16.msra.mxu0 %v507
  %567 = vmatpush.bf16.msra.mxu0 %v505
  %568 = vmatpush.bf16.msra.mxu0 %v503
  %569 = vmatpush.bf16.msra.mxu0 %v501
  %570 = vmatpush.bf16.msra.mxu0 %v499
  %571 = vmatmul.bf16.gmra.mxu0 %v371
  %v572 = vpop.f32.mrf.mxu0
  %v573 = vadd.f32 %v235, %v572
  %v574 = vpop.f32.mrf.mxu0
  %v575 = vadd.f32 %v237, %v574
  %576 = vmatmul.bf16.gmra.mxu0 %v373
  %v577 = vpop.f32.mrf.mxu0
  %v578 = vadd.f32 %v240, %v577
  %v579 = vpop.f32.mrf.mxu0
  %v580 = vadd.f32 %v242, %v579
  %581 = vmatmul.bf16.gmra.mxu0 %v375
  %v582 = vpop.f32.mrf.mxu0
  %v583 = vadd.f32 %v245, %v582
  %v584 = vpop.f32.mrf.mxu0
  %v585 = vadd.f32 %v247, %v584
  %586 = vmatmul.bf16.gmra.mxu0 %v377
  %v587 = vpop.f32.mrf.mxu0
  %v588 = vadd.f32 %v250, %v587
  %v589 = vpop.f32.mrf.mxu0
  %v590 = vadd.f32 %v252, %v589
  %591 = vmatmul.bf16.gmra.mxu0 %v379
  %v592 = vpop.f32.mrf.mxu0
  %v593 = vadd.f32 %v255, %v592
  %v594 = vpop.f32.mrf.mxu0
  %v595 = vadd.f32 %v257, %v594
  %596 = vmatmul.bf16.gmra.mxu0 %v381
  %v597 = vpop.f32.mrf.mxu0
  %v598 = vadd.f32 %v260, %v597
  %v599 = vpop.f32.mrf.mxu0
  %v600 = vadd.f32 %v262, %v599
  %601 = vmatmul.bf16.gmra.mxu0 %v383
  %v602 = vpop.f32.mrf.mxu0
  %v603 = vadd.f32 %v265, %v602
  %v604 = vpop.f32.mrf.mxu0
  %v605 = vadd.f32 %v267, %v604
  %606 = vmatmul.bf16.gmra.mxu0 %v385
  %v607 = vpop.f32.mrf.mxu0
  %v608 = vadd.f32 %v270, %v607
  %v609 = vpop.f32.mrf.mxu0
  %v610 = vadd.f32 %v272, %v609
  %611 = vdwg.mxu0
  %612 = vmatpush.bf16.msra.mxu0 %v529
  %613 = vmatpush.bf16.msra.mxu0 %v527
  %614 = vmatpush.bf16.msra.mxu0 %v525
  %615 = vmatpush.bf16.msra.mxu0 %v523
  %616 = vmatpush.bf16.msra.mxu0 %v521
  %617 = vmatpush.bf16.msra.mxu0 %v519
  %618 = vmatpush.bf16.msra.mxu0 %v517
  %619 = vmatpush.bf16.msra.mxu0 %v515
  %620 = vmatmul.bf16.gmra.mxu0 %v372
  %v621 = vpop.f32.mrf.mxu0
  %v622 = vadd.f32 %v573, %v621
  %v623 = vpop.f32.mrf.mxu0
  %v624 = vadd.f32 %v575, %v623
  %625 = vmatmul.bf16.gmra.mxu0 %v374
  %v626 = vpop.f32.mrf.mxu0
  %v627 = vadd.f32 %v578, %v626
  %v628 = vpop.f32.mrf.mxu0
  %v629 = vadd.f32 %v580, %v628
  %630 = vmatmul.bf16.gmra.mxu0 %v376
  %v631 = vpop.f32.mrf.mxu0
  %v632 = vadd.f32 %v583, %v631
  %v633 = vpop.f32.mrf.mxu0
  %v634 = vadd.f32 %v585, %v633
  %635 = vmatmul.bf16.gmra.mxu0 %v378
  %v636 = vpop.f32.mrf.mxu0
  %v637 = vadd.f32 %v588, %v636
  %v638 = vpop.f32.mrf.mxu0
  %v639 = vadd.f32 %v590, %v638
  %640 = vmatmul.bf16.gmra.mxu0 %v380
  %v641 = vpop.f32.mrf.mxu0
  %v642 = vadd.f32 %v593, %v641
  %v643 = vpop.f32.mrf.mxu0
  %v644 = vadd.f32 %v595, %v643
  %645 = vmatmul.bf16.gmra.mxu0 %v382
  %v646 = vpop.f32.mrf.mxu0
  %v647 = vadd.f32 %v598, %v646
  %v648 = vpop.f32.mrf.mxu0
  %v649 = vadd.f32 %v600, %v648
  %650 = vmatmul.bf16.gmra.mxu0 %v384
  %v651 = vpop.f32.mrf.mxu0
  %v652 = vadd.f32 %v603, %v651
  %v653 = vpop.f32.mrf.mxu0
  %v654 = vadd.f32 %v605, %v653
  %655 = vmatmul.bf16.gmra.mxu0 %v386
  %v656 = vpop.f32.mrf.mxu0
  %v657 = vadd.f32 %v608, %v656
  %v658 = vpop.f32.mrf.mxu0
  %v659 = vadd.f32 %v610, %v658
  %660 = vdwg.mxu0
  %661 = vmatpush.bf16.msra.mxu0 %v514
  %662 = vmatpush.bf16.msra.mxu0 %v512
  %663 = vmatpush.bf16.msra.mxu0 %v510
  %664 = vmatpush.bf16.msra.mxu0 %v508
  %665 = vmatpush.bf16.msra.mxu0 %v506
  %666 = vmatpush.bf16.msra.mxu0 %v504
  %667 = vmatpush.bf16.msra.mxu0 %v502
  %668 = vmatpush.bf16.msra.mxu0 %v500
  %669 = vmatmul.bf16.gmra.mxu0 %v371
  %v670 = vpop.f32.mrf.mxu0
  %v671 = vadd.f32 %v284, %v670
  %v672 = vpop.f32.mrf.mxu0
  %v673 = vadd.f32 %v286, %v672
  %674 = vmatmul.bf16.gmra.mxu0 %v373
  %v675 = vpop.f32.mrf.mxu0
  %v676 = vadd.f32 %v289, %v675
  %v677 = vpop.f32.mrf.mxu0
  %v678 = vadd.f32 %v291, %v677
  %679 = vmatmul.bf16.gmra.mxu0 %v375
  %v680 = vpop.f32.mrf.mxu0
  %v681 = vadd.f32 %v294, %v680
  %v682 = vpop.f32.mrf.mxu0
  %v683 = vadd.f32 %v296, %v682
  %684 = vmatmul.bf16.gmra.mxu0 %v377
  %v685 = vpop.f32.mrf.mxu0
  %v686 = vadd.f32 %v299, %v685
  %v687 = vpop.f32.mrf.mxu0
  %v688 = vadd.f32 %v301, %v687
  %689 = vmatmul.bf16.gmra.mxu0 %v379
  %v690 = vpop.f32.mrf.mxu0
  %v691 = vadd.f32 %v304, %v690
  %v692 = vpop.f32.mrf.mxu0
  %v693 = vadd.f32 %v306, %v692
  %694 = vmatmul.bf16.gmra.mxu0 %v381
  %v695 = vpop.f32.mrf.mxu0
  %v696 = vadd.f32 %v309, %v695
  %v697 = vpop.f32.mrf.mxu0
  %v698 = vadd.f32 %v311, %v697
  %699 = vmatmul.bf16.gmra.mxu0 %v383
  %v700 = vpop.f32.mrf.mxu0
  %v701 = vadd.f32 %v314, %v700
  %v702 = vpop.f32.mrf.mxu0
  %v703 = vadd.f32 %v316, %v702
  %704 = vmatmul.bf16.gmra.mxu0 %v385
  %v705 = vpop.f32.mrf.mxu0
  %v706 = vadd.f32 %v319, %v705
  %v707 = vpop.f32.mrf.mxu0
  %v708 = vadd.f32 %v321, %v707
  %709 = vdwg.mxu0
  %710 = vmatpush.bf16.msra.mxu0 %v530
  %711 = vmatpush.bf16.msra.mxu0 %v528
  %712 = vmatpush.bf16.msra.mxu0 %v526
  %713 = vmatpush.bf16.msra.mxu0 %v524
  %714 = vmatpush.bf16.msra.mxu0 %v522
  %715 = vmatpush.bf16.msra.mxu0 %v520
  %716 = vmatpush.bf16.msra.mxu0 %v518
  %717 = vmatpush.bf16.msra.mxu0 %v516
  %718 = vmatmul.bf16.gmra.mxu0 %v372
  %v719 = vpop.f32.mrf.mxu0
  %v720 = vadd.f32 %v671, %v719
  %v721 = vpop.f32.mrf.mxu0
  %v722 = vadd.f32 %v673, %v721
  %723 = vmatmul.bf16.gmra.mxu0 %v374
  %v724 = vpop.f32.mrf.mxu0
  %v725 = vadd.f32 %v676, %v724
  %v726 = vpop.f32.mrf.mxu0
  %v727 = vadd.f32 %v678, %v726
  %728 = vmatmul.bf16.gmra.mxu0 %v376
  %v729 = vpop.f32.mrf.mxu0
  %v730 = vadd.f32 %v681, %v729
  %v731 = vpop.f32.mrf.mxu0
  %v732 = vadd.f32 %v683, %v731
  %733 = vmatmul.bf16.gmra.mxu0 %v378
  %v734 = vpop.f32.mrf.mxu0
  %v735 = vadd.f32 %v686, %v734
  %v736 = vpop.f32.mrf.mxu0
  %v737 = vadd.f32 %v688, %v736
  %738 = vmatmul.bf16.gmra.mxu0 %v380
  %v739 = vpop.f32.mrf.mxu0
  %v740 = vadd.f32 %v691, %v739
  %v741 = vpop.f32.mrf.mxu0
  %v742 = vadd.f32 %v693, %v741
  %743 = vmatmul.bf16.gmra.mxu0 %v382
  %v744 = vpop.f32.mrf.mxu0
  %v745 = vadd.f32 %v696, %v744
  %v746 = vpop.f32.mrf.mxu0
  %v747 = vadd.f32 %v698, %v746
  %748 = vmatmul.bf16.gmra.mxu0 %v384
  %v749 = vpop.f32.mrf.mxu0
  %v750 = vadd.f32 %v701, %v749
  %v751 = vpop.f32.mrf.mxu0
  %v752 = vadd.f32 %v703, %v751
  %753 = vmatmul.bf16.gmra.mxu0 %v386
  %v754 = vpop.f32.mrf.mxu0
  %v755 = vadd.f32 %v706, %v754
  %v756 = vpop.f32.mrf.mxu0
  %v757 = vadd.f32 %v708, %v756
  %758 = vdwg.mxu0
  %v759 = vpack.c.bf16 %v720, %v622
  %v760 = vpack.c.bf16 %v722, %v624
  %v761 = vpack.c.bf16 %v725, %v627
  %v762 = vpack.c.bf16 %v727, %v629
  %v763 = vpack.c.bf16 %v730, %v632
  %v764 = vpack.c.bf16 %v732, %v634
  %v765 = vpack.c.bf16 %v735, %v637
  %v766 = vpack.c.bf16 %v737, %v639
  %v767 = vpack.c.bf16 %v740, %v642
  %v768 = vpack.c.bf16 %v742, %v644
  %v769 = vpack.c.bf16 %v745, %v647
  %v770 = vpack.c.bf16 %v747, %v649
  %v771 = vpack.c.bf16 %v750, %v652
  %v772 = vpack.c.bf16 %v752, %v654
  %v773 = vpack.c.bf16 %v755, %v657
  %v774 = vpack.c.bf16 %v757, %v659
  %775 = vst [vmem:[%s4] sm:$0xff] %v759
  %776 = vst [vmem:[%s4 + $0x8] sm:$0xff] %v760
  %777 = vst [vmem:[%s4 + $0x10] sm:$0xff] %v761
  %778 = vst [vmem:[%s4 + $0x18] sm:$0xff] %v762
  %779 = vst [vmem:[%s4 + $0x20] sm:$0xff] %v763
  %780 = vst [vmem:[%s4 + $0x28] sm:$0xff] %v764
  %781 = vst [vmem:[%s4 + $0x30] sm:$0xff] %v765
  %782 = vst [vmem:[%s4 + $0x38] sm:$0xff] %v766
  %783 = vst [vmem:[%s4 + $0x40] sm:$0xff] %v767
  %784 = vst [vmem:[%s4 + $0x48] sm:$0xff] %v768
  %785 = vst [vmem:[%s4 + $0x50] sm:$0xff] %v769
  %786 = vst [vmem:[%s4 + $0x58] sm:$0xff] %v770
  %787 = vst [vmem:[%s4 + $0x60] sm:$0xff] %v771
  %788 = vst [vmem:[%s4 + $0x68] sm:$0xff] %v772
  %789 = vst [vmem:[%s4 + $0x70] sm:$0xff] %v773
  %790 = vst [vmem:[%s4 + $0x78] sm:$0xff] %v774
  // Predicated region
  $region18: #{_lambda_.8} parent=0 // pred_check
    _
  $region19: #{_lambda_.8} parent=0 // pred_check_branch
    %792 = sbr.rel (0) target = $region21
  $region20: #{_lambda_.8} parent=0 // pred_region
    _
  $region21: #{_lambda_.8} parent=0 // pred_fallthru
    _
  // Predicated region
  $region22: #{_lambda_.8} parent=0 // pred_check
    _
  $region23: #{_lambda_.8} parent=0 // pred_check_branch
    %794 = sbr.rel (0) target = $region25
  $region24: #{_lambda_.8} parent=0 // pred_region
    _
  $region25: #{_lambda_.8} parent=0 // pred_fallthru
    _

// kernel: _lambda_.10
$region0: #{_lambda_.10}
  #allocation0 [shape = 'u32[]', space=smem, size = 0x4, offset = 0x4, fixed_abs, tag = 'smem constant byte address 0x4 - core index']
  #allocation1 [shape = 'u32[72,128]{1,0:T(1,128)}', space=vmem, size = 0x9000, scoped, tag = 'internal scratch']
  %s0 = inlined_call_operand.vmem [shape: bf16[128,256], index: 0, kind: input, shape index: {}]
  %s1 = inlined_call_operand.vmem [shape: bf16[128,128], index: 1, kind: input, shape index: {}]
  %s2 = inlined_call_operand.vmem [shape: bf16[256,128], index: 2, kind: input, shape index: {}]
  %s3 = inlined_call_operand.vmem [shape: bf16[128,128], index: 3, kind: input, shape index: {}]
  %s4 = inlined_call_operand.vmem [shape: bf16[128,128], index: 4, kind: output, shape index: {}]
  %s5 = sld [smem:[#allocation0]]
  $region26: #{_lambda_.10} parent=0
    _
  %s7 = ssub.s32 1, %s5
  %s8 = scalar_select 0, %s7, %s5
  // Predicated region
  $region2: #{_lambda_.10} parent=0 // pred_check
    _
  $region3: #{_lambda_.10} parent=0 // pred_check_branch
    %10 = sbr.rel (0) target = $region5
  $region4: #{_lambda_.10} parent=0 // pred_region
    _
  $region5: #{_lambda_.10} parent=0 // pred_fallthru
    _
  // Predicated region
  $region6: #{_lambda_.10} parent=0 // pred_check
    _
  $region7: #{_lambda_.10} parent=0 // pred_check_branch
    %12 = sbr.rel (0) target = $region9
  $region8: #{_lambda_.10} parent=0 // pred_region
    _
  $region9: #{_lambda_.10} parent=0 // pred_fallthru
    _
  // Predicated region
  $region10: #{_lambda_.10} parent=0 // pred_check
    _
  $region11: #{_lambda_.10} parent=0 // pred_check_branch
    %14 = sbr.rel (0) target = $region13
  $region12: #{_lambda_.10} parent=0 // pred_region
    _
  $region13: #{_lambda_.10} parent=0 // pred_fallthru
    _
  // Predicated region
  $region14: #{_lambda_.10} parent=0 // pred_check
    _
  $region15: #{_lambda_.10} parent=0 // pred_check_branch
    %16 = sbr.rel (0) target = $region17
  $region16: #{_lambda_.10} parent=0 // pred_region
    _
  $region17: #{_lambda_.10} parent=0 // pred_fallthru
    _
  %v17 = vld [vmem:[%s0] sm:$0xff]
  %v18 = vld [vmem:[%s0 + $0x8] sm:$0xff]
  %v19 = vld [vmem:[%s0 + $0x10] sm:$0xff]
  %v20 = vld [vmem:[%s0 + $0x18] sm:$0xff]
  %v21 = vld [vmem:[%s0 + $0x20] sm:$0xff]
  %v22 = vld [vmem:[%s0 + $0x28] sm:$0xff]
  %v23 = vld [vmem:[%s0 + $0x30] sm:$0xff]
  %v24 = vld [vmem:[%s0 + $0x38] sm:$0xff]
  %v25 = vld [vmem:[%s0 + $0x40] sm:$0xff]
  %v26 = vld [vmem:[%s0 + $0x48] sm:$0xff]
  %v27 = vld [vmem:[%s0 + $0x50] sm:$0xff]
  %v28 = vld [vmem:[%s0 + $0x58] sm:$0xff]
  %v29 = vld [vmem:[%s0 + $0x60] sm:$0xff]
  %v30 = vld [vmem:[%s0 + $0x68] sm:$0xff]
  %v31 = vld [vmem:[%s0 + $0x70] sm:$0xff]
  %v32 = vld [vmem:[%s0 + $0x78] sm:$0xff]
  %v33 = vld [vmem:[%s2] sm:$0xf]
  %v34 = vld [vmem:[%s2 + $0x4] sm:$0xf]
  %v35 = vld [vmem:[%s2 + $0x8] sm:$0xf]
  %v36 = vld [vmem:[%s2 + $0xc] sm:$0xf]
  %v37 = vld [vmem:[%s2 + $0x10] sm:$0xf]
  %v38 = vld [vmem:[%s2 + $0x14] sm:$0xf]
  %v39 = vld [vmem:[%s2 + $0x18] sm:$0xf]
  %v40 = vld [vmem:[%s2 + $0x1c] sm:$0xf]
  %v41 = vld [vmem:[%s2 + $0x20] sm:$0xf]
  %v42 = vld [vmem:[%s2 + $0x24] sm:$0xf]
  %v43 = vld [vmem:[%s2 + $0x28] sm:$0xf]
  %v44 = vld [vmem:[%s2 + $0x2c] sm:$0xf]
  %v45 = vld [vmem:[%s2 + $0x30] sm:$0xf]
  %v46 = vld [vmem:[%s2 + $0x34] sm:$0xf]
  %v47 = vld [vmem:[%s2 + $0x38] sm:$0xf]
  %v48 = vld [vmem:[%s2 + $0x3c] sm:$0xf]
  %v49 = vld [vmem:[%s2 + $0x40] sm:$0xf]
  %v50 = vld [vmem:[%s2 + $0x44] sm:$0xf]
  %v51 = vld [vmem:[%s2 + $0x48] sm:$0xf]
  %v52 = vld [vmem:[%s2 + $0x4c] sm:$0xf]
  %v53 = vld [vmem:[%s2 + $0x50] sm:$0xf]
  %v54 = vld [vmem:[%s2 + $0x54] sm:$0xf]
  %v55 = vld [vmem:[%s2 + $0x58] sm:$0xf]
  %v56 = vld [vmem:[%s2 + $0x5c] sm:$0xf]
  %v57 = vld [vmem:[%s2 + $0x60] sm:$0xf]
  %v58 = vld [vmem:[%s2 + $0x64] sm:$0xf]
  %v59 = vld [vmem:[%s2 + $0x68] sm:$0xf]
  %v60 = vld [vmem:[%s2 + $0x6c] sm:$0xf]
  %v61 = vld [vmem:[%s2 + $0x70] sm:$0xf]
  %v62 = vld [vmem:[%s2 + $0x74] sm:$0xf]
  %v63 = vld [vmem:[%s2 + $0x78] sm:$0xf]
  %v64 = vld [vmem:[%s2 + $0x7c] sm:$0xf]
  %v65 = vld [vmem:[%s1] sm:$0xf]
  %v66 = vld [vmem:[%s1 + $0x4] sm:$0xf]
  %v67 = vld [vmem:[%s1 + $0x8] sm:$0xf]
  %v68 = vld [vmem:[%s1 + $0xc] sm:$0xf]
  %v69 = vld [vmem:[%s1 + $0x10] sm:$0xf]
  %v70 = vld [vmem:[%s1 + $0x14] sm:$0xf]
  %v71 = vld [vmem:[%s1 + $0x18] sm:$0xf]
  %v72 = vld [vmem:[%s1 + $0x1c] sm:$0xf]
  %v73 = vld [vmem:[%s1 + $0x20] sm:$0xf]
  %v74 = vld [vmem:[%s1 + $0x24] sm:$0xf]
  %v75 = vld [vmem:[%s1 + $0x28] sm:$0xf]
  %v76 = vld [vmem:[%s1 + $0x2c] sm:$0xf]
  %v77 = vld [vmem:[%s1 + $0x30] sm:$0xf]
  %v78 = vld [vmem:[%s1 + $0x34] sm:$0xf]
  %v79 = vld [vmem:[%s1 + $0x38] sm:$0xf]
  %v80 = vld [vmem:[%s1 + $0x3c] sm:$0xf]
  %v81 = vld [vmem:[%s3] sm:$0xf]
  %v82 = vld [vmem:[%s3 + $0x4] sm:$0xf]
  %v83 = vld [vmem:[%s3 + $0x8] sm:$0xf]
  %v84 = vld [vmem:[%s3 + $0xc] sm:$0xf]
  %v85 = vld [vmem:[%s3 + $0x10] sm:$0xf]
  %v86 = vld [vmem:[%s3 + $0x14] sm:$0xf]
  %v87 = vld [vmem:[%s3 + $0x18] sm:$0xf]
  %v88 = vld [vmem:[%s3 + $0x1c] sm:$0xf]
  %v89 = vld [vmem:[%s3 + $0x20] sm:$0xf]
  %v90 = vld [vmem:[%s3 + $0x24] sm:$0xf]
  %v91 = vld [vmem:[%s3 + $0x28] sm:$0xf]
  %v92 = vld [vmem:[%s3 + $0x2c] sm:$0xf]
  %v93 = vld [vmem:[%s3 + $0x30] sm:$0xf]
  %v94 = vld [vmem:[%s3 + $0x34] sm:$0xf]
  %v95 = vld [vmem:[%s3 + $0x38] sm:$0xf]
  %v96 = vld [vmem:[%s3 + $0x3c] sm:$0xf]
  %v113 = vunpack.c.l.b16 %v65
  %v114 = vunpack.c.l.b16 %v66
  %v115 = vunpack.c.l.b16 %v67
  %v116 = vunpack.c.l.b16 %v68
  %v117 = vunpack.c.l.b16 %v69
  %v118 = vunpack.c.l.b16 %v70
  %v119 = vunpack.c.l.b16 %v71
  %v120 = vunpack.c.l.b16 %v72
  %v121 = vunpack.c.l.b16 %v73
  %v122 = vunpack.c.l.b16 %v74
  %v123 = vunpack.c.l.b16 %v75
  %v124 = vunpack.c.l.b16 %v76
  %v125 = vunpack.c.l.b16 %v77
  %v126 = vunpack.c.l.b16 %v78
  %v127 = vunpack.c.l.b16 %v79
  %v128 = vunpack.c.l.b16 %v80
  %v129 = vpack.c.b16 %v114, %v113
  %v130 = vpack.c.b16 %v116, %v115
  %v131 = vpack.c.b16 %v118, %v117
  %v132 = vpack.c.b16 %v120, %v119
  %v133 = vpack.c.b16 %v122, %v121
  %v134 = vpack.c.b16 %v124, %v123
  %v135 = vpack.c.b16 %v126, %v125
  %v136 = vpack.c.b16 %v128, %v127
  %v161 = vunpack.c.l.b16 %v81
  %v162 = vunpack.c.l.b16 %v82
  %v163 = vunpack.c.l.b16 %v83
  %v164 = vunpack.c.l.b16 %v84
  %v165 = vunpack.c.l.b16 %v85
  %v166 = vunpack.c.l.b16 %v86
  %v167 = vunpack.c.l.b16 %v87
  %v168 = vunpack.c.l.b16 %v88
  %v169 = vunpack.c.l.b16 %v89
  %v170 = vunpack.c.l.b16 %v90
  %v171 = vunpack.c.l.b16 %v91
  %v172 = vunpack.c.l.b16 %v92
  %v173 = vunpack.c.l.b16 %v93
  %v174 = vunpack.c.l.b16 %v94
  %v175 = vunpack.c.l.b16 %v95
  %v176 = vunpack.c.l.b16 %v96
  %v177 = vpack.c.b16 %v162, %v161
  %v178 = vpack.c.b16 %v164, %v163
  %v179 = vpack.c.b16 %v166, %v165
  %v180 = vpack.c.b16 %v168, %v167
  %v181 = vpack.c.b16 %v170, %v169
  %v182 = vpack.c.b16 %v172, %v171
  %v183 = vpack.c.b16 %v174, %v173
  %v184 = vpack.c.b16 %v176, %v175
  %193 = vmatpush.bf16.msra.mxu0 %v184
  %194 = vmatpush.bf16.msra.mxu0 %v183
  %195 = vmatpush.bf16.msra.mxu0 %v182
  %196 = vmatpush.bf16.msra.mxu0 %v181
  %197 = vmatpush.bf16.msra.mxu0 %v180
  %198 = vmatpush.bf16.msra.mxu0 %v179
  %199 = vmatpush.bf16.msra.mxu0 %v178
  %200 = vmatpush.bf16.msra.mxu0 %v177
  %201 = vmatmul.bf16.gmra.mxu0 %v129
  %v202 = vpop.f32.mrf.mxu0
  %v203 = vadd.f32 0.0, %v202
  %v204 = vpop.f32.mrf.mxu0
  %v205 = vadd.f32 0.0, %v204
  %206 = vmatmul.bf16.gmra.mxu0 %v130
  %v207 = vpop.f32.mrf.mxu0
  %v208 = vadd.f32 0.0, %v207
  %v209 = vpop.f32.mrf.mxu0
  %v210 = vadd.f32 0.0, %v209
  %211 = vmatmul.bf16.gmra.mxu0 %v131
  %v212 = vpop.f32.mrf.mxu0
  %v213 = vadd.f32 0.0, %v212
  %v214 = vpop.f32.mrf.mxu0
  %v215 = vadd.f32 0.0, %v214
  %216 = vmatmul.bf16.gmra.mxu0 %v132
  %v217 = vpop.f32.mrf.mxu0
  %v218 = vadd.f32 0.0, %v217
  %v219 = vpop.f32.mrf.mxu0
  %v220 = vadd.f32 0.0, %v219
  %221 = vmatmul.bf16.gmra.mxu0 %v133
  %v222 = vpop.f32.mrf.mxu0
  %v223 = vadd.f32 0.0, %v222
  %v224 = vpop.f32.mrf.mxu0
  %v225 = vadd.f32 0.0, %v224
  %226 = vmatmul.bf16.gmra.mxu0 %v134
  %v227 = vpop.f32.mrf.mxu0
  %v228 = vadd.f32 0.0, %v227
  %v229 = vpop.f32.mrf.mxu0
  %v230 = vadd.f32 0.0, %v229
  %231 = vmatmul.bf16.gmra.mxu0 %v135
  %v232 = vpop.f32.mrf.mxu0
  %v233 = vadd.f32 0.0, %v232
  %v234 = vpop.f32.mrf.mxu0
  %v235 = vadd.f32 0.0, %v234
  %236 = vmatmul.bf16.gmra.mxu0 %v136
  %v237 = vpop.f32.mrf.mxu0
  %v238 = vadd.f32 0.0, %v237
  %v239 = vpop.f32.mrf.mxu0
  %v240 = vadd.f32 0.0, %v239
  %241 = vdwg.mxu0
  %v258 = vunpack.c.l.b16 %v17
  %v259 = vunpack.c.h.b16 %v17
  %v260 = vunpack.c.l.b16 %v18
  %v261 = vunpack.c.h.b16 %v18
  %v262 = vunpack.c.l.b16 %v19
  %v263 = vunpack.c.h.b16 %v19
  %v264 = vunpack.c.l.b16 %v20
  %v265 = vunpack.c.h.b16 %v20
  %v266 = vunpack.c.l.b16 %v21
  %v267 = vunpack.c.h.b16 %v21
  %v268 = vunpack.c.l.b16 %v22
  %v269 = vunpack.c.h.b16 %v22
  %v270 = vunpack.c.l.b16 %v23
  %v271 = vunpack.c.h.b16 %v23
  %v272 = vunpack.c.l.b16 %v24
  %v273 = vunpack.c.h.b16 %v24
  %v274 = vunpack.c.l.b16 %v25
  %v275 = vunpack.c.h.b16 %v25
  %v276 = vunpack.c.l.b16 %v26
  %v277 = vunpack.c.h.b16 %v26
  %v278 = vunpack.c.l.b16 %v27
  %v279 = vunpack.c.h.b16 %v27
  %v280 = vunpack.c.l.b16 %v28
  %v281 = vunpack.c.h.b16 %v28
  %v282 = vunpack.c.l.b16 %v29
  %v283 = vunpack.c.h.b16 %v29
  %v284 = vunpack.c.l.b16 %v30
  %v285 = vunpack.c.h.b16 %v30
  %v286 = vunpack.c.l.b16 %v31
  %v287 = vunpack.c.h.b16 %v31
  %v288 = vunpack.c.l.b16 %v32
  %v289 = vunpack.c.h.b16 %v32
  %v290 = vpack.c.b16 %v260, %v258
  %v291 = vpack.c.b16 %v261, %v259
  %v292 = vpack.c.b16 %v264, %v262
  %v293 = vpack.c.b16 %v265, %v263
  %v294 = vpack.c.b16 %v268, %v266
  %v295 = vpack.c.b16 %v269, %v267
  %v296 = vpack.c.b16 %v272, %v270
  %v297 = vpack.c.b16 %v273, %v271
  %v298 = vpack.c.b16 %v276, %v274
  %v299 = vpack.c.b16 %v277, %v275
  %v300 = vpack.c.b16 %v280, %v278
  %v301 = vpack.c.b16 %v281, %v279
  %v302 = vpack.c.b16 %v284, %v282
  %v303 = vpack.c.b16 %v285, %v283
  %v304 = vpack.c.b16 %v288, %v286
  %v305 = vpack.c.b16 %v289, %v287
  %v354 = vunpack.c.l.b16 %v33
  %v355 = vunpack.c.l.b16 %v34
  %v356 = vunpack.c.l.b16 %v35
  %v357 = vunpack.c.l.b16 %v36
  %v358 = vunpack.c.l.b16 %v37
  %v359 = vunpack.c.l.b16 %v38
  %v360 = vunpack.c.l.b16 %v39
  %v361 = vunpack.c.l.b16 %v40
  %v362 = vunpack.c.l.b16 %v41
  %v363 = vunpack.c.l.b16 %v42
  %v364 = vunpack.c.l.b16 %v43
  %v365 = vunpack.c.l.b16 %v44
  %v366 = vunpack.c.l.b16 %v45
  %v367 = vunpack.c.l.b16 %v46
  %v368 = vunpack.c.l.b16 %v47
  %v369 = vunpack.c.l.b16 %v48
  %v370 = vunpack.c.l.b16 %v49
  %v371 = vunpack.c.l.b16 %v50
  %v372 = vunpack.c.l.b16 %v51
  %v373 = vunpack.c.l.b16 %v52
  %v374 = vunpack.c.l.b16 %v53
  %v375 = vunpack.c.l.b16 %v54
  %v376 = vunpack.c.l.b16 %v55
  %v377 = vunpack.c.l.b16 %v56
  %v378 = vunpack.c.l.b16 %v57
  %v379 = vunpack.c.l.b16 %v58
  %v380 = vunpack.c.l.b16 %v59
  %v381 = vunpack.c.l.b16 %v60
  %v382 = vunpack.c.l.b16 %v61
  %v383 = vunpack.c.l.b16 %v62
  %v384 = vunpack.c.l.b16 %v63
  %v385 = vunpack.c.l.b16 %v64
  %v386 = vpack.c.b16 %v355, %v354
  %v387 = vpack.c.b16 %v357, %v356
  %v388 = vpack.c.b16 %v359, %v358
  %v389 = vpack.c.b16 %v361, %v360
  %v390 = vpack.c.b16 %v363, %v362
  %v391 = vpack.c.b16 %v365, %v364
  %v392 = vpack.c.b16 %v367, %v366
  %v393 = vpack.c.b16 %v369, %v368
  %v394 = vpack.c.b16 %v371, %v370
  %v395 = vpack.c.b16 %v373, %v372
  %v396 = vpack.c.b16 %v375, %v374
  %v397 = vpack.c.b16 %v377, %v376
  %v398 = vpack.c.b16 %v379, %v378
  %v399 = vpack.c.b16 %v381, %v380
  %v400 = vpack.c.b16 %v383, %v382
  %v401 = vpack.c.b16 %v385, %v384
  %418 = vmatpush.bf16.msra.mxu0 %v393
  %419 = vmatpush.bf16.msra.mxu0 %v392
  %420 = vmatpush.bf16.msra.mxu0 %v391
  %421 = vmatpush.bf16.msra.mxu0 %v390
  %422 = vmatpush.bf16.msra.mxu0 %v389
  %423 = vmatpush.bf16.msra.mxu0 %v388
  %424 = vmatpush.bf16.msra.mxu0 %v387
  %425 = vmatpush.bf16.msra.mxu0 %v386
  %426 = vmatmul.bf16.gmra.mxu0 %v290
  %v427 = vpop.f32.mrf.mxu0
  %v428 = vadd.f32 %v203, %v427
  %v429 = vpop.f32.mrf.mxu0
  %v430 = vadd.f32 %v205, %v429
  %431 = vmatmul.bf16.gmra.mxu0 %v292
  %v432 = vpop.f32.mrf.mxu0
  %v433 = vadd.f32 %v208, %v432
  %v434 = vpop.f32.mrf.mxu0
  %v435 = vadd.f32 %v210, %v434
  %436 = vmatmul.bf16.gmra.mxu0 %v294
  %v437 = vpop.f32.mrf.mxu0
  %v438 = vadd.f32 %v213, %v437
  %v439 = vpop.f32.mrf.mxu0
  %v440 = vadd.f32 %v215, %v439
  %441 = vmatmul.bf16.gmra.mxu0 %v296
  %v442 = vpop.f32.mrf.mxu0
  %v443 = vadd.f32 %v218, %v442
  %v444 = vpop.f32.mrf.mxu0
  %v445 = vadd.f32 %v220, %v444
  %446 = vmatmul.bf16.gmra.mxu0 %v298
  %v447 = vpop.f32.mrf.mxu0
  %v448 = vadd.f32 %v223, %v447
  %v449 = vpop.f32.mrf.mxu0
  %v450 = vadd.f32 %v225, %v449
  %451 = vmatmul.bf16.gmra.mxu0 %v300
  %v452 = vpop.f32.mrf.mxu0
  %v453 = vadd.f32 %v228, %v452
  %v454 = vpop.f32.mrf.mxu0
  %v455 = vadd.f32 %v230, %v454
  %456 = vmatmul.bf16.gmra.mxu0 %v302
  %v457 = vpop.f32.mrf.mxu0
  %v458 = vadd.f32 %v233, %v457
  %v459 = vpop.f32.mrf.mxu0
  %v460 = vadd.f32 %v235, %v459
  %461 = vmatmul.bf16.gmra.mxu0 %v304
  %v462 = vpop.f32.mrf.mxu0
  %v463 = vadd.f32 %v238, %v462
  %v464 = vpop.f32.mrf.mxu0
  %v465 = vadd.f32 %v240, %v464
  %466 = vdwg.mxu0
  %467 = vmatpush.bf16.msra.mxu0 %v401
  %468 = vmatpush.bf16.msra.mxu0 %v400
  %469 = vmatpush.bf16.msra.mxu0 %v399
  %470 = vmatpush.bf16.msra.mxu0 %v398
  %471 = vmatpush.bf16.msra.mxu0 %v397
  %472 = vmatpush.bf16.msra.mxu0 %v396
  %473 = vmatpush.bf16.msra.mxu0 %v395
  %474 = vmatpush.bf16.msra.mxu0 %v394
  %475 = vmatmul.bf16.gmra.mxu0 %v291
  %v476 = vpop.f32.mrf.mxu0
  %v477 = vadd.f32 %v428, %v476
  %v478 = vpop.f32.mrf.mxu0
  %v479 = vadd.f32 %v430, %v478
  %480 = vmatmul.bf16.gmra.mxu0 %v293
  %v481 = vpop.f32.mrf.mxu0
  %v482 = vadd.f32 %v433, %v481
  %v483 = vpop.f32.mrf.mxu0
  %v484 = vadd.f32 %v435, %v483
  %485 = vmatmul.bf16.gmra.mxu0 %v295
  %v486 = vpop.f32.mrf.mxu0
  %v487 = vadd.f32 %v438, %v486
  %v488 = vpop.f32.mrf.mxu0
  %v489 = vadd.f32 %v440, %v488
  %490 = vmatmul.bf16.gmra.mxu0 %v297
  %v491 = vpop.f32.mrf.mxu0
  %v492 = vadd.f32 %v443, %v491
  %v493 = vpop.f32.mrf.mxu0
  %v494 = vadd.f32 %v445, %v493
  %495 = vmatmul.bf16.gmra.mxu0 %v299
  %v496 = vpop.f32.mrf.mxu0
  %v497 = vadd.f32 %v448, %v496
  %v498 = vpop.f32.mrf.mxu0
  %v499 = vadd.f32 %v450, %v498
  %500 = vmatmul.bf16.gmra.mxu0 %v301
  %v501 = vpop.f32.mrf.mxu0
  %v502 = vadd.f32 %v453, %v501
  %v503 = vpop.f32.mrf.mxu0
  %v504 = vadd.f32 %v455, %v503
  %505 = vmatmul.bf16.gmra.mxu0 %v303
  %v506 = vpop.f32.mrf.mxu0
  %v507 = vadd.f32 %v458, %v506
  %v508 = vpop.f32.mrf.mxu0
  %v509 = vadd.f32 %v460, %v508
  %510 = vmatmul.bf16.gmra.mxu0 %v305
  %v511 = vpop.f32.mrf.mxu0
  %v512 = vadd.f32 %v463, %v511
  %v513 = vpop.f32.mrf.mxu0
  %v514 = vadd.f32 %v465, %v513
  %515 = vdwg.mxu0
  %v516 = vpack.c.bf16 %v477, %v477
  %v517 = vpack.c.bf16 %v479, %v479
  %v518 = vpack.c.bf16 %v482, %v482
  %v519 = vpack.c.bf16 %v484, %v484
  %v520 = vpack.c.bf16 %v487, %v487
  %v521 = vpack.c.bf16 %v489, %v489
  %v522 = vpack.c.bf16 %v492, %v492
  %v523 = vpack.c.bf16 %v494, %v494
  %v524 = vpack.c.bf16 %v497, %v497
  %v525 = vpack.c.bf16 %v499, %v499
  %v526 = vpack.c.bf16 %v502, %v502
  %v527 = vpack.c.bf16 %v504, %v504
  %v528 = vpack.c.bf16 %v507, %v507
  %v529 = vpack.c.bf16 %v509, %v509
  %v530 = vpack.c.bf16 %v512, %v512
  %v531 = vpack.c.bf16 %v514, %v514
  %532 = vst [vmem:[%s4] sm:$0xf] %v516
  %533 = vst [vmem:[%s4 + $0x4] sm:$0xf] %v517
  %534 = vst [vmem:[%s4 + $0x8] sm:$0xf] %v518
  %535 = vst [vmem:[%s4 + $0xc] sm:$0xf] %v519
  %536 = vst [vmem:[%s4 + $0x10] sm:$0xf] %v520
  %537 = vst [vmem:[%s4 + $0x14] sm:$0xf] %v521
  %538 = vst [vmem:[%s4 + $0x18] sm:$0xf] %v522
  %539 = vst [vmem:[%s4 + $0x1c] sm:$0xf] %v523
  %540 = vst [vmem:[%s4 + $0x20] sm:$0xf] %v524
  %541 = vst [vmem:[%s4 + $0x24] sm:$0xf] %v525
  %542 = vst [vmem:[%s4 + $0x28] sm:$0xf] %v526
  %543 = vst [vmem:[%s4 + $0x2c] sm:$0xf] %v527
  %544 = vst [vmem:[%s4 + $0x30] sm:$0xf] %v528
  %545 = vst [vmem:[%s4 + $0x34] sm:$0xf] %v529
  %546 = vst [vmem:[%s4 + $0x38] sm:$0xf] %v530
  %547 = vst [vmem:[%s4 + $0x3c] sm:$0xf] %v531
  // Predicated region
  $region18: #{_lambda_.10} parent=0 // pred_check
    _
  $region19: #{_lambda_.10} parent=0 // pred_check_branch
    %549 = sbr.rel (0) target = $region21
  $region20: #{_lambda_.10} parent=0 // pred_region
    _
  $region21: #{_lambda_.10} parent=0 // pred_fallthru
    _
  // Predicated region
  $region22: #{_lambda_.10} parent=0 // pred_check
    _
  $region23: #{_lambda_.10} parent=0 // pred_check_branch
    %551 = sbr.rel (0) target = $region25
  $region24: #{_lambda_.10} parent=0 // pred_region
    _
  $region25: #{_lambda_.10} parent=0 // pred_fallthru
    _

// kernel: _lambda_.9
$region0: #{_lambda_.9}
  #allocation0 [shape = 'u32[]', space=smem, size = 0x4, offset = 0x4, fixed_abs, tag = 'smem constant byte address 0x4 - core index']
  #allocation1 [shape = 'u32[72,128]{1,0:T(1,128)}', space=vmem, size = 0x9000, scoped, tag = 'internal scratch']
  #allocation2 [shape = 'f32[8,256]{1,0:T(8,128)}', space=vmem, size = 0x2000, scoped, tag = 'scratch operand']
  %s0 = inlined_call_operand.vmem [shape: s32[1,128], index: 0, kind: input, shape index: {}]
  %s1 = inlined_call_operand.vmem [shape: f32[8,1], index: 1, kind: input, shape index: {}]
  %s2 = inlined_call_operand.vmem [shape: bf16[128,256], index: 2, kind: input, shape index: {}]
  %s3 = inlined_call_operand.vmem [shape: bf16[8,256], index: 3, kind: input, shape index: {}]
  %s4 = inlined_call_operand.vmem [shape: f32[1,256], index: 4, kind: input, shape index: {}]
  %s5 = inlined_call_operand.vmem [shape: bf16[256,256], index: 5, kind: input, shape index: {}]
  %s6 = inlined_call_operand.vmem [shape: bf16[256,256], index: 6, kind: input, shape index: {}]
  %s7 = inlined_call_operand.vmem [shape: f32[1,256], index: 7, kind: input, shape index: {}]
  %s8 = inlined_call_operand.vmem [shape: bf16[8,256], index: 8, kind: output, shape index: {}]
  %s9 = sld [smem:[#allocation0]]
  $region50: #{_lambda_.9} parent=0
    _
  %s11 = ssub.s32 1, %s9
  %s12 = scalar_select 0, %s11, %s9
  // Predicated region
  $region2: #{_lambda_.9} parent=0 // pred_check
    _
  $region3: #{_lambda_.9} parent=0 // pred_check_branch
    %14 = sbr.rel (0) target = $region5
  $region4: #{_lambda_.9} parent=0 // pred_region
    _
  $region5: #{_lambda_.9} parent=0 // pred_fallthru
    _
  // Predicated region
  $region6: #{_lambda_.9} parent=0 // pred_check
    _
  $region7: #{_lambda_.9} parent=0 // pred_check_branch
    %16 = sbr.rel (0) target = $region9
  $region8: #{_lambda_.9} parent=0 // pred_region
    _
  $region9: #{_lambda_.9} parent=0 // pred_fallthru
    _
  // Predicated region
  $region10: #{_lambda_.9} parent=0 // pred_check
    _
  $region11: #{_lambda_.9} parent=0 // pred_check_branch
    %18 = sbr.rel (0) target = $region13
  $region12: #{_lambda_.9} parent=0 // pred_region
    _
  $region13: #{_lambda_.9} parent=0 // pred_fallthru
    _
  // Predicated region
  $region14: #{_lambda_.9} parent=0 // pred_check
    _
  $region15: #{_lambda_.9} parent=0 // pred_check_branch
    %20 = sbr.rel (0) target = $region17
  $region16: #{_lambda_.9} parent=0 // pred_region
    _
  $region17: #{_lambda_.9} parent=0 // pred_fallthru
    _
  // Predicated region
  $region18: #{_lambda_.9} parent=0 // pred_check
    _
  $region19: #{_lambda_.9} parent=0 // pred_check_branch
    %22 = sbr.rel (0) target = $region21
  $region20: #{_lambda_.9} parent=0 // pred_region
    _
  $region21: #{_lambda_.9} parent=0 // pred_fallthru
    _
  // Predicated region
  $region22: #{_lambda_.9} parent=0 // pred_check
    _
  $region23: #{_lambda_.9} parent=0 // pred_check_branch
    %24 = sbr.rel (0) target = $region25
  $region24: #{_lambda_.9} parent=0 // pred_region
    _
  $region25: #{_lambda_.9} parent=0 // pred_fallthru
    _
  // Predicated region
  $region26: #{_lambda_.9} parent=0 // pred_check
    _
  $region27: #{_lambda_.9} parent=0 // pred_check_branch
    %26 = sbr.rel (0) target = $region29
  $region28: #{_lambda_.9} parent=0 // pred_region
    _
  $region29: #{_lambda_.9} parent=0 // pred_fallthru
    _
  // Predicated region
  $region30: #{_lambda_.9} parent=0 // pred_check
    _
  $region31: #{_lambda_.9} parent=0 // pred_check_branch
    %28 = sbr.rel (0) target = $region33
  $region32: #{_lambda_.9} parent=0 // pred_region
    _
  $region33: #{_lambda_.9} parent=0 // pred_fallthru
    _
  %p29 = scmp.eq.s32.totalorder 0, 0
  // Predicated region
  $region34: #{_lambda_.9} parent=0 // pred_check
    %p30 = pneg %p29
  $region35: #{_lambda_.9} parent=0 // pred_check_branch
    %32 = sbr.rel (%p30) target = $region37
  $region36: #{_lambda_.9} parent=0 // pred_region
    %33 = vst [vmem:[#allocation2] sm:$0xff] 0.0
    %34 = vst [vmem:[#allocation2 + $0x8] sm:$0xff] 0.0
  $region37: #{_lambda_.9} parent=0 // pred_fallthru
    _
  %s35 = smul.u32 0, 8
  %v36 = vlaneseq
  %v37 = vshrl.u32 %v36, 7
  %v38 = vstv %s35
  %v39 = vadd.s32 %v38, %v37
  %v40 = vld [vmem:[%s0] sm:$0x1]
  %v41 = vperm.slane %v40, 0
  %vm42 = vcmp.eq.s32.totalorder %v39, %v41
  %v43 = vsel %vm42, 1, 0
  %v44 = vcvt.s32.f32 %v43
  %v45 = vpack.c.bf16 %v44, %v44
  %v46 = vld [vmem:[#allocation2] sm:$0xff]
  %v47 = vld [vmem:[#allocation2 + $0x8] sm:$0xff]
  %v48 = vld [vmem:[%s2] sm:$0xff]
  %v49 = vld [vmem:[%s2 + $0x8] sm:$0xff]
  %v50 = vld [vmem:[%s2 + $0x10] sm:$0xff]
  %v51 = vld [vmem:[%s2 + $0x18] sm:$0xff]
  %v52 = vld [vmem:[%s2 + $0x20] sm:$0xff]
  %v53 = vld [vmem:[%s2 + $0x28] sm:$0xff]
  %v54 = vld [vmem:[%s2 + $0x30] sm:$0xff]
  %v55 = vld [vmem:[%s2 + $0x38] sm:$0xff]
  %v56 = vld [vmem:[%s2 + $0x40] sm:$0xff]
  %v57 = vld [vmem:[%s2 + $0x48] sm:$0xff]
  %v58 = vld [vmem:[%s2 + $0x50] sm:$0xff]
  %v59 = vld [vmem:[%s2 + $0x58] sm:$0xff]
  %v60 = vld [vmem:[%s2 + $0x60] sm:$0xff]
  %v61 = vld [vmem:[%s2 + $0x68] sm:$0xff]
  %v62 = vld [vmem:[%s2 + $0x70] sm:$0xff]
  %v63 = vld [vmem:[%s2 + $0x78] sm:$0xff]
  %v80 = vunpack.c.l.b16 %v48
  %v81 = vunpack.c.h.b16 %v48
  %v82 = vunpack.c.l.b16 %v49
  %v83 = vunpack.c.h.b16 %v49
  %v84 = vunpack.c.l.b16 %v50
  %v85 = vunpack.c.h.b16 %v50
  %v86 = vunpack.c.l.b16 %v51
  %v87 = vunpack.c.h.b16 %v51
  %v88 = vunpack.c.l.b16 %v52
  %v89 = vunpack.c.h.b16 %v52
  %v90 = vunpack.c.l.b16 %v53
  %v91 = vunpack.c.h.b16 %v53
  %v92 = vunpack.c.l.b16 %v54
  %v93 = vunpack.c.h.b16 %v54
  %v94 = vunpack.c.l.b16 %v55
  %v95 = vunpack.c.h.b16 %v55
  %v96 = vunpack.c.l.b16 %v56
  %v97 = vunpack.c.h.b16 %v56
  %v98 = vunpack.c.l.b16 %v57
  %v99 = vunpack.c.h.b16 %v57
  %v100 = vunpack.c.l.b16 %v58
  %v101 = vunpack.c.h.b16 %v58
  %v102 = vunpack.c.l.b16 %v59
  %v103 = vunpack.c.h.b16 %v59
  %v104 = vunpack.c.l.b16 %v60
  %v105 = vunpack.c.h.b16 %v60
  %v106 = vunpack.c.l.b16 %v61
  %v107 = vunpack.c.h.b16 %v61
  %v108 = vunpack.c.l.b16 %v62
  %v109 = vunpack.c.h.b16 %v62
  %v110 = vunpack.c.l.b16 %v63
  %v111 = vunpack.c.h.b16 %v63
  %v112 = vpack.c.b16 %v82, %v80
  %v113 = vpack.c.b16 %v83, %v81
  %v114 = vpack.c.b16 %v86, %v84
  %v115 = vpack.c.b16 %v87, %v85
  %v116 = vpack.c.b16 %v90, %v88
  %v117 = vpack.c.b16 %v91, %v89
  %v118 = vpack.c.b16 %v94, %v92
  %v119 = vpack.c.b16 %v95, %v93
  %v120 = vpack.c.b16 %v98, %v96
  %v121 = vpack.c.b16 %v99, %v97
  %v122 = vpack.c.b16 %v102, %v100
  %v123 = vpack.c.b16 %v103, %v101
  %v124 = vpack.c.b16 %v106, %v104
  %v125 = vpack.c.b16 %v107, %v105
  %v126 = vpack.c.b16 %v110, %v108
  %v127 = vpack.c.b16 %v111, %v109
  %144 = vmatpush.bf16.msra.mxu0 %v126
  %145 = vmatpush.bf16.msra.mxu0 %v124
  %146 = vmatpush.bf16.msra.mxu0 %v122
  %147 = vmatpush.bf16.msra.mxu0 %v120
  %148 = vmatpush.bf16.msra.mxu0 %v118
  %149 = vmatpush.bf16.msra.mxu0 %v116
  %150 = vmatpush.bf16.msra.mxu0 %v114
  %151 = vmatpush.bf16.msra.mxu0 %v112
  %152 = vmatmul.bf16.gmra.mxu0 %v45
  %v153 = vpop.f32.mrf.mxu0
  %v154 = vadd.f32 0.0, %v153
  %v155 = vpop.f32.mrf.mxu0
  %156 = vdwg.mxu0
  %157 = vmatpush.bf16.msra.mxu0 %v127
  %158 = vmatpush.bf16.msra.mxu0 %v125
  %159 = vmatpush.bf16.msra.mxu0 %v123
  %160 = vmatpush.bf16.msra.mxu0 %v121
  %161 = vmatpush.bf16.msra.mxu0 %v119
  %162 = vmatpush.bf16.msra.mxu0 %v117
  %163 = vmatpush.bf16.msra.mxu0 %v115
  %164 = vmatpush.bf16.msra.mxu0 %v113
  %165 = vmatmul.bf16.gmra.mxu0 %v45
  %v166 = vpop.f32.mrf.mxu0
  %v167 = vadd.f32 0.0, %v166
  %v168 = vpop.f32.mrf.mxu0
  %169 = vdwg.mxu0
  %v170 = vadd.f32 %v46, %v154
  %v171 = vadd.f32 %v47, %v167
  %172 = vst [vmem:[#allocation2] sm:$0xff] %v170
  %173 = vst [vmem:[#allocation2 + $0x8] sm:$0xff] %v171
  // Predicated region
  $region38: #{_lambda_.9} parent=0 // pred_check
    %p174 = pneg %p29
  $region39: #{_lambda_.9} parent=0 // pred_check_branch
    %176 = sbr.rel (%p174) target = $region41
  $region40: #{_lambda_.9} parent=0 // pred_region
    %v177 = vld [vmem:[%s1] sm:$0xff]
    %vm178 = vcmp.gt.f32.partialorder %v177, 0.0
    %v179 = vsel %vm178, 1, 0
    %v180 = vcvt.s32.f32 %v179
    %v181 = vld [vmem:[#allocation2] sm:$0xff]
    %v182 = vld [vmem:[#allocation2 + $0x8] sm:$0xff]
    %184 = vset.pattern.permute.xlu0 0
    %185 = vperm.xlu0 %184, %v177
    %v186 = vpop.permute.xlu0 %185
    %v188 = vmul.f32 %v181, %v186
    %v189 = vmul.f32 %v182, %v186
    %v190 = vld [vmem:[%s4] sm:$0x3]
    %v192 = vperm.slane %v190, 0
    %v193 = vperm.slane %v190, 1
    %197 = vset.pattern.permute.xlu0 0
    %198 = vperm.xlu0 %197, %v180
    %v199 = vpop.permute.xlu0 %198
    %v201 = vmul.f32 %v192, %v199
    %v202 = vmul.f32 %v193, %v199
    %v203 = vadd.f32 %v188, %v201
    %v204 = vadd.f32 %v189, %v202
    %v205 = vld [vmem:[%s3] sm:$0xff]
    %v206 = vld [vmem:[%s5] sm:$0xff]
    %v207 = vld [vmem:[%s5 + $0x8] sm:$0xff]
    %v208 = vld [vmem:[%s5 + $0x10] sm:$0xff]
    %v209 = vld [vmem:[%s5 + $0x18] sm:$0xff]
    %v210 = vld [vmem:[%s5 + $0x20] sm:$0xff]
    %v211 = vld [vmem:[%s5 + $0x28] sm:$0xff]
    %v212 = vld [vmem:[%s5 + $0x30] sm:$0xff]
    %v213 = vld [vmem:[%s5 + $0x38] sm:$0xff]
    %v214 = vld [vmem:[%s5 + $0x40] sm:$0xff]
    %v215 = vld [vmem:[%s5 + $0x48] sm:$0xff]
    %v216 = vld [vmem:[%s5 + $0x50] sm:$0xff]
    %v217 = vld [vmem:[%s5 + $0x58] sm:$0xff]
    %v218 = vld [vmem:[%s5 + $0x60] sm:$0xff]
    %v219 = vld [vmem:[%s5 + $0x68] sm:$0xff]
    %v220 = vld [vmem:[%s5 + $0x70] sm:$0xff]
    %v221 = vld [vmem:[%s5 + $0x78] sm:$0xff]
    %v222 = vld [vmem:[%s5 + $0x80] sm:$0xff]
    %v223 = vld [vmem:[%s5 + $0x88] sm:$0xff]
    %v224 = vld [vmem:[%s5 + $0x90] sm:$0xff]
    %v225 = vld [vmem:[%s5 + $0x98] sm:$0xff]
    %v226 = vld [vmem:[%s5 + $0xa0] sm:$0xff]
    %v227 = vld [vmem:[%s5 + $0xa8] sm:$0xff]
    %v228 = vld [vmem:[%s5 + $0xb0] sm:$0xff]
    %v229 = vld [vmem:[%s5 + $0xb8] sm:$0xff]
    %v230 = vld [vmem:[%s5 + $0xc0] sm:$0xff]
    %v231 = vld [vmem:[%s5 + $0xc8] sm:$0xff]
    %v232 = vld [vmem:[%s5 + $0xd0] sm:$0xff]
    %v233 = vld [vmem:[%s5 + $0xd8] sm:$0xff]
    %v234 = vld [vmem:[%s5 + $0xe0] sm:$0xff]
    %v235 = vld [vmem:[%s5 + $0xe8] sm:$0xff]
    %v236 = vld [vmem:[%s5 + $0xf0] sm:$0xff]
    %v237 = vld [vmem:[%s5 + $0xf8] sm:$0xff]
    %v238 = vpack.c.bf16 %v203, %v203
    %v239 = vpack.c.bf16 %v204, %v204
    %v240 = vld [vmem:[%s6] sm:$0xff]
    %v241 = vld [vmem:[%s6 + $0x8] sm:$0xff]
    %v242 = vld [vmem:[%s6 + $0x10] sm:$0xff]
    %v243 = vld [vmem:[%s6 + $0x18] sm:$0xff]
    %v244 = vld [vmem:[%s6 + $0x20] sm:$0xff]
    %v245 = vld [vmem:[%s6 + $0x28] sm:$0xff]
    %v246 = vld [vmem:[%s6 + $0x30] sm:$0xff]
    %v247 = vld [vmem:[%s6 + $0x38] sm:$0xff]
    %v248 = vld [vmem:[%s6 + $0x40] sm:$0xff]
    %v249 = vld [vmem:[%s6 + $0x48] sm:$0xff]
    %v250 = vld [vmem:[%s6 + $0x50] sm:$0xff]
    %v251 = vld [vmem:[%s6 + $0x58] sm:$0xff]
    %v252 = vld [vmem:[%s6 + $0x60] sm:$0xff]
    %v253 = vld [vmem:[%s6 + $0x68] sm:$0xff]
    %v254 = vld [vmem:[%s6 + $0x70] sm:$0xff]
    %v255 = vld [vmem:[%s6 + $0x78] sm:$0xff]
    %v256 = vld [vmem:[%s6 + $0x80] sm:$0xff]
    %v257 = vld [vmem:[%s6 + $0x88] sm:$0xff]
    %v258 = vld [vmem:[%s6 + $0x90] sm:$0xff]
    %v259 = vld [vmem:[%s6 + $0x98] sm:$0xff]
    %v260 = vld [vmem:[%s6 + $0xa0] sm:$0xff]
    %v261 = vld [vmem:[%s6 + $0xa8] sm:$0xff]
    %v262 = vld [vmem:[%s6 + $0xb0] sm:$0xff]
    %v263 = vld [vmem:[%s6 + $0xb8] sm:$0xff]
    %v264 = vld [vmem:[%s6 + $0xc0] sm:$0xff]
    %v265 = vld [vmem:[%s6 + $0xc8] sm:$0xff]
    %v266 = vld [vmem:[%s6 + $0xd0] sm:$0xff]
    %v267 = vld [vmem:[%s6 + $0xd8] sm:$0xff]
    %v268 = vld [vmem:[%s6 + $0xe0] sm:$0xff]
    %v269 = vld [vmem:[%s6 + $0xe8] sm:$0xff]
    %v270 = vld [vmem:[%s6 + $0xf0] sm:$0xff]
    %v271 = vld [vmem:[%s6 + $0xf8] sm:$0xff]
    %v304 = vunpack.c.l.b16 %v240
    %v305 = vunpack.c.h.b16 %v240
    %v306 = vunpack.c.l.b16 %v241
    %v307 = vunpack.c.h.b16 %v241
    %v308 = vunpack.c.l.b16 %v242
    %v309 = vunpack.c.h.b16 %v242
    %v310 = vunpack.c.l.b16 %v243
    %v311 = vunpack.c.h.b16 %v243
    %v312 = vunpack.c.l.b16 %v244
    %v313 = vunpack.c.h.b16 %v244
    %v314 = vunpack.c.l.b16 %v245
    %v315 = vunpack.c.h.b16 %v245
    %v316 = vunpack.c.l.b16 %v246
    %v317 = vunpack.c.h.b16 %v246
    %v318 = vunpack.c.l.b16 %v247
    %v319 = vunpack.c.h.b16 %v247
    %v320 = vunpack.c.l.b16 %v248
    %v321 = vunpack.c.h.b16 %v248
    %v322 = vunpack.c.l.b16 %v249
    %v323 = vunpack.c.h.b16 %v249
    %v324 = vunpack.c.l.b16 %v250
    %v325 = vunpack.c.h.b16 %v250
    %v326 = vunpack.c.l.b16 %v251
    %v327 = vunpack.c.h.b16 %v251
    %v328 = vunpack.c.l.b16 %v252
    %v329 = vunpack.c.h.b16 %v252
    %v330 = vunpack.c.l.b16 %v253
    %v331 = vunpack.c.h.b16 %v253
    %v332 = vunpack.c.l.b16 %v254
    %v333 = vunpack.c.h.b16 %v254
    %v334 = vunpack.c.l.b16 %v255
    %v335 = vunpack.c.h.b16 %v255
    %v336 = vunpack.c.l.b16 %v256
    %v337 = vunpack.c.h.b16 %v256
    %v338 = vunpack.c.l.b16 %v257
    %v339 = vunpack.c.h.b16 %v257
    %v340 = vunpack.c.l.b16 %v258
    %v341 = vunpack.c.h.b16 %v258
    %v342 = vunpack.c.l.b16 %v259
    %v343 = vunpack.c.h.b16 %v259
    %v344 = vunpack.c.l.b16 %v260
    %v345 = vunpack.c.h.b16 %v260
    %v346 = vunpack.c.l.b16 %v261
    %v347 = vunpack.c.h.b16 %v261
    %v348 = vunpack.c.l.b16 %v262
    %v349 = vunpack.c.h.b16 %v262
    %v350 = vunpack.c.l.b16 %v263
    %v351 = vunpack.c.h.b16 %v263
    %v352 = vunpack.c.l.b16 %v264
    %v353 = vunpack.c.h.b16 %v264
    %v354 = vunpack.c.l.b16 %v265
    %v355 = vunpack.c.h.b16 %v265
    %v356 = vunpack.c.l.b16 %v266
    %v357 = vunpack.c.h.b16 %v266
    %v358 = vunpack.c.l.b16 %v267
    %v359 = vunpack.c.h.b16 %v267
    %v360 = vunpack.c.l.b16 %v268
    %v361 = vunpack.c.h.b16 %v268
    %v362 = vunpack.c.l.b16 %v269
    %v363 = vunpack.c.h.b16 %v269
    %v364 = vunpack.c.l.b16 %v270
    %v365 = vunpack.c.h.b16 %v270
    %v366 = vunpack.c.l.b16 %v271
    %v367 = vunpack.c.h.b16 %v271
    %v368 = vpack.c.b16 %v306, %v304
    %v369 = vpack.c.b16 %v307, %v305
    %v370 = vpack.c.b16 %v310, %v308
    %v371 = vpack.c.b16 %v311, %v309
    %v372 = vpack.c.b16 %v314, %v312
    %v373 = vpack.c.b16 %v315, %v313
    %v374 = vpack.c.b16 %v318, %v316
    %v375 = vpack.c.b16 %v319, %v317
    %v376 = vpack.c.b16 %v322, %v320
    %v377 = vpack.c.b16 %v323, %v321
    %v378 = vpack.c.b16 %v326, %v324
    %v379 = vpack.c.b16 %v327, %v325
    %v380 = vpack.c.b16 %v330, %v328
    %v381 = vpack.c.b16 %v331, %v329
    %v382 = vpack.c.b16 %v334, %v332
    %v383 = vpack.c.b16 %v335, %v333
    %v384 = vpack.c.b16 %v338, %v336
    %v385 = vpack.c.b16 %v339, %v337
    %v386 = vpack.c.b16 %v342, %v340
    %v387 = vpack.c.b16 %v343, %v341
    %v388 = vpack.c.b16 %v346, %v344
    %v389 = vpack.c.b16 %v347, %v345
    %v390 = vpack.c.b16 %v350, %v348
    %v391 = vpack.c.b16 %v351, %v349
    %v392 = vpack.c.b16 %v354, %v352
    %v393 = vpack.c.b16 %v355, %v353
    %v394 = vpack.c.b16 %v358, %v356
    %v395 = vpack.c.b16 %v359, %v357
    %v396 = vpack.c.b16 %v362, %v360
    %v397 = vpack.c.b16 %v363, %v361
    %v398 = vpack.c.b16 %v366, %v364
    %v399 = vpack.c.b16 %v367, %v365
    %432 = vmatpush.bf16.msra.mxu0 %v382
    %433 = vmatpush.bf16.msra.mxu0 %v380
    %434 = vmatpush.bf16.msra.mxu0 %v378
    %435 = vmatpush.bf16.msra.mxu0 %v376
    %436 = vmatpush.bf16.msra.mxu0 %v374
    %437 = vmatpush.bf16.msra.mxu0 %v372
    %438 = vmatpush.bf16.msra.mxu0 %v370
    %439 = vmatpush.bf16.msra.mxu0 %v368
    %440 = vmatmul.bf16.gmra.mxu0 %v238
    %v441 = vpop.f32.mrf.mxu0
    %v442 = vadd.f32 0.0, %v441
    %v443 = vpop.f32.mrf.mxu0
    %444 = vdwg.mxu0
    %445 = vmatpush.bf16.msra.mxu0 %v398
    %446 = vmatpush.bf16.msra.mxu0 %v396
    %447 = vmatpush.bf16.msra.mxu0 %v394
    %448 = vmatpush.bf16.msra.mxu0 %v392
    %449 = vmatpush.bf16.msra.mxu0 %v390
    %450 = vmatpush.bf16.msra.mxu0 %v388
    %451 = vmatpush.bf16.msra.mxu0 %v386
    %452 = vmatpush.bf16.msra.mxu0 %v384
    %453 = vmatmul.bf16.gmra.mxu0 %v239
    %v454 = vpop.f32.mrf.mxu0
    %v455 = vadd.f32 %v442, %v454
    %v456 = vpop.f32.mrf.mxu0
    %457 = vdwg.mxu0
    %458 = vmatpush.bf16.msra.mxu0 %v383
    %459 = vmatpush.bf16.msra.mxu0 %v381
    %460 = vmatpush.bf16.msra.mxu0 %v379
    %461 = vmatpush.bf16.msra.mxu0 %v377
    %462 = vmatpush.bf16.msra.mxu0 %v375
    %463 = vmatpush.bf16.msra.mxu0 %v373
    %464 = vmatpush.bf16.msra.mxu0 %v371
    %465 = vmatpush.bf16.msra.mxu0 %v369
    %466 = vmatmul.bf16.gmra.mxu0 %v238
    %v467 = vpop.f32.mrf.mxu0
    %v468 = vadd.f32 0.0, %v467
    %v469 = vpop.f32.mrf.mxu0
    %470 = vdwg.mxu0
    %471 = vmatpush.bf16.msra.mxu0 %v399
    %472 = vmatpush.bf16.msra.mxu0 %v397
    %473 = vmatpush.bf16.msra.mxu0 %v395
    %474 = vmatpush.bf16.msra.mxu0 %v393
    %475 = vmatpush.bf16.msra.mxu0 %v391
    %476 = vmatpush.bf16.msra.mxu0 %v389
    %477 = vmatpush.bf16.msra.mxu0 %v387
    %478 = vmatpush.bf16.msra.mxu0 %v385
    %479 = vmatmul.bf16.gmra.mxu0 %v239
    %v480 = vpop.f32.mrf.mxu0
    %v481 = vadd.f32 %v468, %v480
    %v482 = vpop.f32.mrf.mxu0
    %483 = vdwg.mxu0
    %v485 = vunpack.c.l.b16 %v205
    %v486 = vunpack.c.h.b16 %v205
    %v487 = vpack.c.b16 %v485, %v485
    %v488 = vpack.c.b16 %v486, %v486
    %v523 = vunpack.c.l.b16 %v206
    %v524 = vunpack.c.h.b16 %v206
    %v525 = vunpack.c.l.b16 %v207
    %v526 = vunpack.c.h.b16 %v207
    %v527 = vunpack.c.l.b16 %v208
    %v528 = vunpack.c.h.b16 %v208
    %v529 = vunpack.c.l.b16 %v209
    %v530 = vunpack.c.h.b16 %v209
    %v531 = vunpack.c.l.b16 %v210
    %v532 = vunpack.c.h.b16 %v210
    %v533 = vunpack.c.l.b16 %v211
    %v534 = vunpack.c.h.b16 %v211
    %v535 = vunpack.c.l.b16 %v212
    %v536 = vunpack.c.h.b16 %v212
    %v537 = vunpack.c.l.b16 %v213
    %v538 = vunpack.c.h.b16 %v213
    %v539 = vunpack.c.l.b16 %v214
    %v540 = vunpack.c.h.b16 %v214
    %v541 = vunpack.c.l.b16 %v215
    %v542 = vunpack.c.h.b16 %v215
    %v543 = vunpack.c.l.b16 %v216
    %v544 = vunpack.c.h.b16 %v216
    %v545 = vunpack.c.l.b16 %v217
    %v546 = vunpack.c.h.b16 %v217
    %v547 = vunpack.c.l.b16 %v218
    %v548 = vunpack.c.h.b16 %v218
    %v549 = vunpack.c.l.b16 %v219
    %v550 = vunpack.c.h.b16 %v219
    %v551 = vunpack.c.l.b16 %v220
    %v552 = vunpack.c.h.b16 %v220
    %v553 = vunpack.c.l.b16 %v221
    %v554 = vunpack.c.h.b16 %v221
    %v555 = vunpack.c.l.b16 %v222
    %v556 = vunpack.c.h.b16 %v222
    %v557 = vunpack.c.l.b16 %v223
    %v558 = vunpack.c.h.b16 %v223
    %v559 = vunpack.c.l.b16 %v224
    %v560 = vunpack.c.h.b16 %v224
    %v561 = vunpack.c.l.b16 %v225
    %v562 = vunpack.c.h.b16 %v225
    %v563 = vunpack.c.l.b16 %v226
    %v564 = vunpack.c.h.b16 %v226
    %v565 = vunpack.c.l.b16 %v227
    %v566 = vunpack.c.h.b16 %v227
    %v567 = vunpack.c.l.b16 %v228
    %v568 = vunpack.c.h.b16 %v228
    %v569 = vunpack.c.l.b16 %v229
    %v570 = vunpack.c.h.b16 %v229
    %v571 = vunpack.c.l.b16 %v230
    %v572 = vunpack.c.h.b16 %v230
    %v573 = vunpack.c.l.b16 %v231
    %v574 = vunpack.c.h.b16 %v231
    %v575 = vunpack.c.l.b16 %v232
    %v576 = vunpack.c.h.b16 %v232
    %v577 = vunpack.c.l.b16 %v233
    %v578 = vunpack.c.h.b16 %v233
    %v579 = vunpack.c.l.b16 %v234
    %v580 = vunpack.c.h.b16 %v234
    %v581 = vunpack.c.l.b16 %v235
    %v582 = vunpack.c.h.b16 %v235
    %v583 = vunpack.c.l.b16 %v236
    %v584 = vunpack.c.h.b16 %v236
    %v585 = vunpack.c.l.b16 %v237
    %v586 = vunpack.c.h.b16 %v237
    %v587 = vpack.c.b16 %v525, %v523
    %v588 = vpack.c.b16 %v526, %v524
    %v589 = vpack.c.b16 %v529, %v527
    %v590 = vpack.c.b16 %v530, %v528
    %v591 = vpack.c.b16 %v533, %v531
    %v592 = vpack.c.b16 %v534, %v532
    %v593 = vpack.c.b16 %v537, %v535
    %v594 = vpack.c.b16 %v538, %v536
    %v595 = vpack.c.b16 %v541, %v539
    %v596 = vpack.c.b16 %v542, %v540
    %v597 = vpack.c.b16 %v545, %v543
    %v598 = vpack.c.b16 %v546, %v544
    %v599 = vpack.c.b16 %v549, %v547
    %v600 = vpack.c.b16 %v550, %v548
    %v601 = vpack.c.b16 %v553, %v551
    %v602 = vpack.c.b16 %v554, %v552
    %v603 = vpack.c.b16 %v557, %v555
    %v604 = vpack.c.b16 %v558, %v556
    %v605 = vpack.c.b16 %v561, %v559
    %v606 = vpack.c.b16 %v562, %v560
    %v607 = vpack.c.b16 %v565, %v563
    %v608 = vpack.c.b16 %v566, %v564
    %v609 = vpack.c.b16 %v569, %v567
    %v610 = vpack.c.b16 %v570, %v568
    %v611 = vpack.c.b16 %v573, %v571
    %v612 = vpack.c.b16 %v574, %v572
    %v613 = vpack.c.b16 %v577, %v575
    %v614 = vpack.c.b16 %v578, %v576
    %v615 = vpack.c.b16 %v581, %v579
    %v616 = vpack.c.b16 %v582, %v580
    %v617 = vpack.c.b16 %v585, %v583
    %v618 = vpack.c.b16 %v586, %v584
    %651 = vmatpush.bf16.msra.mxu0 %v601
    %652 = vmatpush.bf16.msra.mxu0 %v599
    %653 = vmatpush.bf16.msra.mxu0 %v597
    %654 = vmatpush.bf16.msra.mxu0 %v595
    %655 = vmatpush.bf16.msra.mxu0 %v593
    %656 = vmatpush.bf16.msra.mxu0 %v591
    %657 = vmatpush.bf16.msra.mxu0 %v589
    %658 = vmatpush.bf16.msra.mxu0 %v587
    %659 = vmatmul.bf16.gmra.mxu0 %v487
    %v660 = vpop.f32.mrf.mxu0
    %v661 = vadd.f32 %v455, %v660
    %v662 = vpop.f32.mrf.mxu0
    %663 = vdwg.mxu0
    %664 = vmatpush.bf16.msra.mxu0 %v617
    %665 = vmatpush.bf16.msra.mxu0 %v615
    %666 = vmatpush.bf16.msra.mxu0 %v613
    %667 = vmatpush.bf16.msra.mxu0 %v611
    %668 = vmatpush.bf16.msra.mxu0 %v609
    %669 = vmatpush.bf16.msra.mxu0 %v607
    %670 = vmatpush.bf16.msra.mxu0 %v605
    %671 = vmatpush.bf16.msra.mxu0 %v603
    %672 = vmatmul.bf16.gmra.mxu0 %v488
    %v673 = vpop.f32.mrf.mxu0
    %v674 = vadd.f32 %v661, %v673
    %v675 = vpop.f32.mrf.mxu0
    %676 = vdwg.mxu0
    %677 = vmatpush.bf16.msra.mxu0 %v602
    %678 = vmatpush.bf16.msra.mxu0 %v600
    %679 = vmatpush.bf16.msra.mxu0 %v598
    %680 = vmatpush.bf16.msra.mxu0 %v596
    %681 = vmatpush.bf16.msra.mxu0 %v594
    %682 = vmatpush.bf16.msra.mxu0 %v592
    %683 = vmatpush.bf16.msra.mxu0 %v590
    %684 = vmatpush.bf16.msra.mxu0 %v588
    %685 = vmatmul.bf16.gmra.mxu0 %v487
    %v686 = vpop.f32.mrf.mxu0
    %v687 = vadd.f32 %v481, %v686
    %v688 = vpop.f32.mrf.mxu0
    %689 = vdwg.mxu0
    %690 = vmatpush.bf16.msra.mxu0 %v618
    %691 = vmatpush.bf16.msra.mxu0 %v616
    %692 = vmatpush.bf16.msra.mxu0 %v614
    %693 = vmatpush.bf16.msra.mxu0 %v612
    %694 = vmatpush.bf16.msra.mxu0 %v610
    %695 = vmatpush.bf16.msra.mxu0 %v608
    %696 = vmatpush.bf16.msra.mxu0 %v606
    %697 = vmatpush.bf16.msra.mxu0 %v604
    %698 = vmatmul.bf16.gmra.mxu0 %v488
    %v699 = vpop.f32.mrf.mxu0
    %v700 = vadd.f32 %v687, %v699
    %v701 = vpop.f32.mrf.mxu0
    %702 = vdwg.mxu0
    %v703 = vld [vmem:[%s7] sm:$0x3]
    %v705 = vperm.slane %v703, 0
    %v706 = vperm.slane %v703, 1
    %v709 = vadd.f32 %v674, %v705
    %v710 = vadd.f32 %v700, %v706
    %v711 = vmax.f32 %v709, 0.0
    %v712 = vmax.f32 %v710, 0.0
    %v713 = vpack.c.bf16 %v712, %v711
    %714 = vst [vmem:[%s8] sm:$0xff] %v713
  $region41: #{_lambda_.9} parent=0 // pred_fallthru
    _
  // Predicated region
  $region42: #{_lambda_.9} parent=0 // pred_check
    _
  $region43: #{_lambda_.9} parent=0 // pred_check_branch
    %716 = sbr.rel (0) target = $region45
  $region44: #{_lambda_.9} parent=0 // pred_region
    _
  $region45: #{_lambda_.9} parent=0 // pred_fallthru
    _
  // Predicated region
  $region46: #{_lambda_.9} parent=0 // pred_check
    _
  $region47: #{_lambda_.9} parent=0 // pred_check_branch
    %718 = sbr.rel (0) target = $region49
  $region48: #{_lambda_.9} parent=0 // pred_region
    _
  $region49: #{_lambda_.9} parent=0 // pred_fallthru
    _

// kernel: _lambda_.11
$region0: #{_lambda_.11}
  #allocation0 [shape = 'u32[]', space=smem, size = 0x4, offset = 0x4, fixed_abs, tag = 'smem constant byte address 0x4 - core index']
  #allocation1 [shape = 'u32[72,128]{1,0:T(1,128)}', space=vmem, size = 0x9000, scoped, tag = 'internal scratch']
  #allocation2 [shape = 'f32[8,128]{1,0:T(8,128)}', space=vmem, size = 0x1000, scoped, tag = 'scratch operand']
  %s0 = inlined_call_operand.vmem [shape: s32[1,128], index: 0, kind: input, shape index: {}]
  %s1 = inlined_call_operand.vmem [shape: f32[8,1], index: 1, kind: input, shape index: {}]
  %s2 = inlined_call_operand.vmem [shape: bf16[128,128], index: 2, kind: input, shape index: {}]
  %s3 = inlined_call_operand.vmem [shape: bf16[8,256], index: 3, kind: input, shape index: {}]
  %s4 = inlined_call_operand.vmem [shape: f32[1,128], index: 4, kind: input, shape index: {}]
  %s5 = inlined_call_operand.vmem [shape: bf16[256,128], index: 5, kind: input, shape index: {}]
  %s6 = inlined_call_operand.vmem [shape: bf16[128,128], index: 6, kind: input, shape index: {}]
  %s7 = inlined_call_operand.vmem [shape: f32[1,128], index: 7, kind: input, shape index: {}]
  %s8 = inlined_call_operand.hbm [shape: f32[8,128], index: 8, kind: output, shape index: {}]
  %s9 = sld [smem:[#allocation0]]
  $region50: #{_lambda_.11} parent=0
    _
  %s11 = ssub.s32 1, %s9
  %s12 = scalar_select 0, %s11, %s9
  $region1: #{_lambda_.11} parent=0
    #allocation3 [shape = 'u8[4096]{0}', space=vmem, size = 0x1000, scoped, tag = 'output window, operand 0, single buffered']
    #allocation4 [shape = 's32[1]{0}', space=sflag, size = 0x4, scoped, tag = 'scoped memory for _lambda_.11']
    %13 = vsyncpa [#allocation4], 0
    // Predicated region
    $region2: #{_lambda_.11} parent=1 // pred_check
      _
    $region3: #{_lambda_.11} parent=1 // pred_check_branch
      %15 = sbr.rel (0) target = $region5
    $region4: #{_lambda_.11} parent=1 // pred_region
      _
    $region5: #{_lambda_.11} parent=1 // pred_fallthru
      _
    // Predicated region
    $region6: #{_lambda_.11} parent=1 // pred_check
      _
    $region7: #{_lambda_.11} parent=1 // pred_check_branch
      %17 = sbr.rel (0) target = $region9
    $region8: #{_lambda_.11} parent=1 // pred_region
      _
    $region9: #{_lambda_.11} parent=1 // pred_fallthru
      _
    // Predicated region
    $region10: #{_lambda_.11} parent=1 // pred_check
      _
    $region11: #{_lambda_.11} parent=1 // pred_check_branch
      %19 = sbr.rel (0) target = $region13
    $region12: #{_lambda_.11} parent=1 // pred_region
      _
    $region13: #{_lambda_.11} parent=1 // pred_fallthru
      _
    // Predicated region
    $region14: #{_lambda_.11} parent=1 // pred_check
      _
    $region15: #{_lambda_.11} parent=1 // pred_check_branch
      %21 = sbr.rel (0) target = $region17
    $region16: #{_lambda_.11} parent=1 // pred_region
      _
    $region17: #{_lambda_.11} parent=1 // pred_fallthru
      _
    // Predicated region
    $region18: #{_lambda_.11} parent=1 // pred_check
      _
    $region19: #{_lambda_.11} parent=1 // pred_check_branch
      %23 = sbr.rel (0) target = $region21
    $region20: #{_lambda_.11} parent=1 // pred_region
      _
    $region21: #{_lambda_.11} parent=1 // pred_fallthru
      _
    // Predicated region
    $region22: #{_lambda_.11} parent=1 // pred_check
      _
    $region23: #{_lambda_.11} parent=1 // pred_check_branch
      %25 = sbr.rel (0) target = $region25
    $region24: #{_lambda_.11} parent=1 // pred_region
      _
    $region25: #{_lambda_.11} parent=1 // pred_fallthru
      _
    // Predicated region
    $region26: #{_lambda_.11} parent=1 // pred_check
      _
    $region27: #{_lambda_.11} parent=1 // pred_check_branch
      %27 = sbr.rel (0) target = $region29
    $region28: #{_lambda_.11} parent=1 // pred_region
      _
    $region29: #{_lambda_.11} parent=1 // pred_fallthru
      _
    // Predicated region
    $region30: #{_lambda_.11} parent=1 // pred_check
      _
    $region31: #{_lambda_.11} parent=1 // pred_check_branch
      %29 = sbr.rel (0) target = $region33
    $region32: #{_lambda_.11} parent=1 // pred_region
      _
    $region33: #{_lambda_.11} parent=1 // pred_fallthru
      _
    %p30 = scmp.eq.s32.totalorder 0, 0
    // Predicated region
    $region34: #{_lambda_.11} parent=1 // pred_check
      %p31 = pneg %p30
    $region35: #{_lambda_.11} parent=1 // pred_check_branch
      %33 = sbr.rel (%p31) target = $region37
    $region36: #{_lambda_.11} parent=1 // pred_region
      %34 = vst [vmem:[#allocation2] sm:$0xff] 0.0
    $region37: #{_lambda_.11} parent=1 // pred_fallthru
      _
    %s35 = smul.u32 0, 8
    %v36 = vlaneseq
    %v37 = vshrl.u32 %v36, 7
    %v38 = vstv %s35
    %v39 = vadd.s32 %v38, %v37
    %v40 = vld [vmem:[%s0] sm:$0x1]
    %v41 = vperm.slane %v40, 0
    %vm42 = vcmp.eq.s32.totalorder %v39, %v41
    %v43 = vsel %vm42, 1, 0
    %v44 = vcvt.s32.f32 %v43
    %v45 = vpack.c.bf16 %v44, %v44
    %v46 = vld [vmem:[#allocation2] sm:$0xff]
    %v47 = vld [vmem:[%s2] sm:$0xf]
    %v48 = vld [vmem:[%s2 + $0x4] sm:$0xf]
    %v49 = vld [vmem:[%s2 + $0x8] sm:$0xf]
    %v50 = vld [vmem:[%s2 + $0xc] sm:$0xf]
    %v51 = vld [vmem:[%s2 + $0x10] sm:$0xf]
    %v52 = vld [vmem:[%s2 + $0x14] sm:$0xf]
    %v53 = vld [vmem:[%s2 + $0x18] sm:$0xf]
    %v54 = vld [vmem:[%s2 + $0x1c] sm:$0xf]
    %v55 = vld [vmem:[%s2 + $0x20] sm:$0xf]
    %v56 = vld [vmem:[%s2 + $0x24] sm:$0xf]
    %v57 = vld [vmem:[%s2 + $0x28] sm:$0xf]
    %v58 = vld [vmem:[%s2 + $0x2c] sm:$0xf]
    %v59 = vld [vmem:[%s2 + $0x30] sm:$0xf]
    %v60 = vld [vmem:[%s2 + $0x34] sm:$0xf]
    %v61 = vld [vmem:[%s2 + $0x38] sm:$0xf]
    %v62 = vld [vmem:[%s2 + $0x3c] sm:$0xf]
    %v79 = vunpack.c.l.b16 %v47
    %v80 = vunpack.c.l.b16 %v48
    %v81 = vunpack.c.l.b16 %v49
    %v82 = vunpack.c.l.b16 %v50
    %v83 = vunpack.c.l.b16 %v51
    %v84 = vunpack.c.l.b16 %v52
    %v85 = vunpack.c.l.b16 %v53
    %v86 = vunpack.c.l.b16 %v54
    %v87 = vunpack.c.l.b16 %v55
    %v88 = vunpack.c.l.b16 %v56
    %v89 = vunpack.c.l.b16 %v57
    %v90 = vunpack.c.l.b16 %v58
    %v91 = vunpack.c.l.b16 %v59
    %v92 = vunpack.c.l.b16 %v60
    %v93 = vunpack.c.l.b16 %v61
    %v94 = vunpack.c.l.b16 %v62
    %v95 = vpack.c.b16 %v80, %v79
    %v96 = vpack.c.b16 %v82, %v81
    %v97 = vpack.c.b16 %v84, %v83
    %v98 = vpack.c.b16 %v86, %v85
    %v99 = vpack.c.b16 %v88, %v87
    %v100 = vpack.c.b16 %v90, %v89
    %v101 = vpack.c.b16 %v92, %v91
    %v102 = vpack.c.b16 %v94, %v93
    %111 = vmatpush.bf16.msra.mxu0 %v102
    %112 = vmatpush.bf16.msra.mxu0 %v101
    %113 = vmatpush.bf16.msra.mxu0 %v100
    %114 = vmatpush.bf16.msra.mxu0 %v99
    %115 = vmatpush.bf16.msra.mxu0 %v98
    %116 = vmatpush.bf16.msra.mxu0 %v97
    %117 = vmatpush.bf16.msra.mxu0 %v96
    %118 = vmatpush.bf16.msra.mxu0 %v95
    %119 = vmatmul.bf16.gmra.mxu0 %v45
    %v120 = vpop.f32.mrf.mxu0
    %v121 = vadd.f32 0.0, %v120
    %v122 = vpop.f32.mrf.mxu0
    %123 = vdwg.mxu0
    %v124 = vadd.f32 %v46, %v121
    %125 = vst [vmem:[#allocation2] sm:$0xff] %v124
    // Predicated region
    $region38: #{_lambda_.11} parent=1 // pred_check
      %p126 = pneg %p30
    $region39: #{_lambda_.11} parent=1 // pred_check_branch
      %128 = sbr.rel (%p126) target = $region41
    $region40: #{_lambda_.11} parent=1 // pred_region
      %v129 = vld [vmem:[%s1] sm:$0xff]
      %vm130 = vcmp.gt.f32.partialorder %v129, 0.0
      %v131 = vsel %vm130, 1, 0
      %v132 = vcvt.s32.f32 %v131
      %v133 = vld [vmem:[#allocation2] sm:$0xff]
      %135 = vset.pattern.permute.xlu0 0
      %136 = vperm.xlu0 %135, %v129
      %v137 = vpop.permute.xlu0 %136
      %v139 = vmul.f32 %v133, %v137
      %v140 = vld [vmem:[%s4] sm:$0x1]
      %v142 = vperm.slane %v140, 0
      %145 = vset.pattern.permute.xlu0 0
      %146 = vperm.xlu0 %145, %v132
      %v147 = vpop.permute.xlu0 %146
      %v149 = vmul.f32 %v142, %v147
      %v150 = vadd.f32 %v139, %v149
      %v151 = vld [vmem:[%s3] sm:$0xff]
      %v152 = vld [vmem:[%s5] sm:$0xf]
      %v153 = vld [vmem:[%s5 + $0x4] sm:$0xf]
      %v154 = vld [vmem:[%s5 + $0x8] sm:$0xf]
      %v155 = vld [vmem:[%s5 + $0xc] sm:$0xf]
      %v156 = vld [vmem:[%s5 + $0x10] sm:$0xf]
      %v157 = vld [vmem:[%s5 + $0x14] sm:$0xf]
      %v158 = vld [vmem:[%s5 + $0x18] sm:$0xf]
      %v159 = vld [vmem:[%s5 + $0x1c] sm:$0xf]
      %v160 = vld [vmem:[%s5 + $0x20] sm:$0xf]
      %v161 = vld [vmem:[%s5 + $0x24] sm:$0xf]
      %v162 = vld [vmem:[%s5 + $0x28] sm:$0xf]
      %v163 = vld [vmem:[%s5 + $0x2c] sm:$0xf]
      %v164 = vld [vmem:[%s5 + $0x30] sm:$0xf]
      %v165 = vld [vmem:[%s5 + $0x34] sm:$0xf]
      %v166 = vld [vmem:[%s5 + $0x38] sm:$0xf]
      %v167 = vld [vmem:[%s5 + $0x3c] sm:$0xf]
      %v168 = vld [vmem:[%s5 + $0x40] sm:$0xf]
      %v169 = vld [vmem:[%s5 + $0x44] sm:$0xf]
      %v170 = vld [vmem:[%s5 + $0x48] sm:$0xf]
      %v171 = vld [vmem:[%s5 + $0x4c] sm:$0xf]
      %v172 = vld [vmem:[%s5 + $0x50] sm:$0xf]
      %v173 = vld [vmem:[%s5 + $0x54] sm:$0xf]
      %v174 = vld [vmem:[%s5 + $0x58] sm:$0xf]
      %v175 = vld [vmem:[%s5 + $0x5c] sm:$0xf]
      %v176 = vld [vmem:[%s5 + $0x60] sm:$0xf]
      %v177 = vld [vmem:[%s5 + $0x64] sm:$0xf]
      %v178 = vld [vmem:[%s5 + $0x68] sm:$0xf]
      %v179 = vld [vmem:[%s5 + $0x6c] sm:$0xf]
      %v180 = vld [vmem:[%s5 + $0x70] sm:$0xf]
      %v181 = vld [vmem:[%s5 + $0x74] sm:$0xf]
      %v182 = vld [vmem:[%s5 + $0x78] sm:$0xf]
      %v183 = vld [vmem:[%s5 + $0x7c] sm:$0xf]
      %v184 = vpack.c.bf16 %v150, %v150
      %v185 = vld [vmem:[%s6] sm:$0xf]
      %v186 = vld [vmem:[%s6 + $0x4] sm:$0xf]
      %v187 = vld [vmem:[%s6 + $0x8] sm:$0xf]
      %v188 = vld [vmem:[%s6 + $0xc] sm:$0xf]
      %v189 = vld [vmem:[%s6 + $0x10] sm:$0xf]
      %v190 = vld [vmem:[%s6 + $0x14] sm:$0xf]
      %v191 = vld [vmem:[%s6 + $0x18] sm:$0xf]
      %v192 = vld [vmem:[%s6 + $0x1c] sm:$0xf]
      %v193 = vld [vmem:[%s6 + $0x20] sm:$0xf]
      %v194 = vld [vmem:[%s6 + $0x24] sm:$0xf]
      %v195 = vld [vmem:[%s6 + $0x28] sm:$0xf]
      %v196 = vld [vmem:[%s6 + $0x2c] sm:$0xf]
      %v197 = vld [vmem:[%s6 + $0x30] sm:$0xf]
      %v198 = vld [vmem:[%s6 + $0x34] sm:$0xf]
      %v199 = vld [vmem:[%s6 + $0x38] sm:$0xf]
      %v200 = vld [vmem:[%s6 + $0x3c] sm:$0xf]
      %v217 = vunpack.c.l.b16 %v185
      %v218 = vunpack.c.l.b16 %v186
      %v219 = vunpack.c.l.b16 %v187
      %v220 = vunpack.c.l.b16 %v188
      %v221 = vunpack.c.l.b16 %v189
      %v222 = vunpack.c.l.b16 %v190
      %v223 = vunpack.c.l.b16 %v191
      %v224 = vunpack.c.l.b16 %v192
      %v225 = vunpack.c.l.b16 %v193
      %v226 = vunpack.c.l.b16 %v194
      %v227 = vunpack.c.l.b16 %v195
      %v228 = vunpack.c.l.b16 %v196
      %v229 = vunpack.c.l.b16 %v197
      %v230 = vunpack.c.l.b16 %v198
      %v231 = vunpack.c.l.b16 %v199
      %v232 = vunpack.c.l.b16 %v200
      %v233 = vpack.c.b16 %v218, %v217
      %v234 = vpack.c.b16 %v220, %v219
      %v235 = vpack.c.b16 %v222, %v221
      %v236 = vpack.c.b16 %v224, %v223
      %v237 = vpack.c.b16 %v226, %v225
      %v238 = vpack.c.b16 %v228, %v227
      %v239 = vpack.c.b16 %v230, %v229
      %v240 = vpack.c.b16 %v232, %v231
      %249 = vmatpush.bf16.msra.mxu0 %v240
      %250 = vmatpush.bf16.msra.mxu0 %v239
      %251 = vmatpush.bf16.msra.mxu0 %v238
      %252 = vmatpush.bf16.msra.mxu0 %v237
      %253 = vmatpush.bf16.msra.mxu0 %v236
      %254 = vmatpush.bf16.msra.mxu0 %v235
      %255 = vmatpush.bf16.msra.mxu0 %v234
      %256 = vmatpush.bf16.msra.mxu0 %v233
      %257 = vmatmul.bf16.gmra.mxu0 %v184
      %v258 = vpop.f32.mrf.mxu0
      %v259 = vadd.f32 0.0, %v258
      %v260 = vpop.f32.mrf.mxu0
      %261 = vdwg.mxu0
      %v263 = vunpack.c.l.b16 %v151
      %v264 = vunpack.c.h.b16 %v151
      %v265 = vpack.c.b16 %v263, %v263
      %v266 = vpack.c.b16 %v264, %v264
      %v301 = vunpack.c.l.b16 %v152
      %v302 = vunpack.c.l.b16 %v153
      %v303 = vunpack.c.l.b16 %v154
      %v304 = vunpack.c.l.b16 %v155
      %v305 = vunpack.c.l.b16 %v156
      %v306 = vunpack.c.l.b16 %v157
      %v307 = vunpack.c.l.b16 %v158
      %v308 = vunpack.c.l.b16 %v159
      %v309 = vunpack.c.l.b16 %v160
      %v310 = vunpack.c.l.b16 %v161
      %v311 = vunpack.c.l.b16 %v162
      %v312 = vunpack.c.l.b16 %v163
      %v313 = vunpack.c.l.b16 %v164
      %v314 = vunpack.c.l.b16 %v165
      %v315 = vunpack.c.l.b16 %v166
      %v316 = vunpack.c.l.b16 %v167
      %v317 = vunpack.c.l.b16 %v168
      %v318 = vunpack.c.l.b16 %v169
      %v319 = vunpack.c.l.b16 %v170
      %v320 = vunpack.c.l.b16 %v171
      %v321 = vunpack.c.l.b16 %v172
      %v322 = vunpack.c.l.b16 %v173
      %v323 = vunpack.c.l.b16 %v174
      %v324 = vunpack.c.l.b16 %v175
      %v325 = vunpack.c.l.b16 %v176
      %v326 = vunpack.c.l.b16 %v177
      %v327 = vunpack.c.l.b16 %v178
      %v328 = vunpack.c.l.b16 %v179
      %v329 = vunpack.c.l.b16 %v180
      %v330 = vunpack.c.l.b16 %v181
      %v331 = vunpack.c.l.b16 %v182
      %v332 = vunpack.c.l.b16 %v183
      %v333 = vpack.c.b16 %v302, %v301
      %v334 = vpack.c.b16 %v304, %v303
      %v335 = vpack.c.b16 %v306, %v305
      %v336 = vpack.c.b16 %v308, %v307
      %v337 = vpack.c.b16 %v310, %v309
      %v338 = vpack.c.b16 %v312, %v311
      %v339 = vpack.c.b16 %v314, %v313
      %v340 = vpack.c.b16 %v316, %v315
      %v341 = vpack.c.b16 %v318, %v317
      %v342 = vpack.c.b16 %v320, %v319
      %v343 = vpack.c.b16 %v322, %v321
      %v344 = vpack.c.b16 %v324, %v323
      %v345 = vpack.c.b16 %v326, %v325
      %v346 = vpack.c.b16 %v328, %v327
      %v347 = vpack.c.b16 %v330, %v329
      %v348 = vpack.c.b16 %v332, %v331
      %365 = vmatpush.bf16.msra.mxu0 %v340
      %366 = vmatpush.bf16.msra.mxu0 %v339
      %367 = vmatpush.bf16.msra.mxu0 %v338
      %368 = vmatpush.bf16.msra.mxu0 %v337
      %369 = vmatpush.bf16.msra.mxu0 %v336
      %370 = vmatpush.bf16.msra.mxu0 %v335
      %371 = vmatpush.bf16.msra.mxu0 %v334
      %372 = vmatpush.bf16.msra.mxu0 %v333
      %373 = vmatmul.bf16.gmra.mxu0 %v265
      %v374 = vpop.f32.mrf.mxu0
      %v375 = vadd.f32 %v259, %v374
      %v376 = vpop.f32.mrf.mxu0
      %377 = vdwg.mxu0
      %378 = vmatpush.bf16.msra.mxu0 %v348
      %379 = vmatpush.bf16.msra.mxu0 %v347
      %380 = vmatpush.bf16.msra.mxu0 %v346
      %381 = vmatpush.bf16.msra.mxu0 %v345
      %382 = vmatpush.bf16.msra.mxu0 %v344
      %383 = vmatpush.bf16.msra.mxu0 %v343
      %384 = vmatpush.bf16.msra.mxu0 %v342
      %385 = vmatpush.bf16.msra.mxu0 %v341
      %386 = vmatmul.bf16.gmra.mxu0 %v266
      %v387 = vpop.f32.mrf.mxu0
      %v388 = vadd.f32 %v375, %v387
      %v389 = vpop.f32.mrf.mxu0
      %390 = vdwg.mxu0
      %v391 = vld [vmem:[%s7] sm:$0x1]
      %v393 = vperm.slane %v391, 0
      %v395 = vadd.f32 %v388, %v393
      %v396 = vmax.f32 %v395, 0.0
      %397 = vst [vmem:[#allocation3] sm:$0xff] %v396
    $region41: #{_lambda_.11} parent=1 // pred_fallthru
      _
    // Predicated region
    $region42: #{_lambda_.11} parent=1 // pred_check
      _
    $region43: #{_lambda_.11} parent=1 // pred_check_branch
      %399 = sbr.rel (0) target = $region45
    $region44: #{_lambda_.11} parent=1 // pred_region
      %401 = vsyncadd [#allocation4], 0
      %s403 = sshll.u32 [#allocation3], 4
      %s404 = int_to_ptr.vmem [resolvable:$true] %s403
      %s405 = sshll.u32 %s8, 4
      %s406 = int_to_ptr.hbm [resolvable:$true] %s405
      %408 = dma.vmem_to_hbm [thread:$0]  %s404, 128, %s406, [#allocation4]
    $region45: #{_lambda_.11} parent=1 // pred_fallthru
      _
    // Predicated region
    $region46: #{_lambda_.11} parent=1 // pred_check
      _
    $region47: #{_lambda_.11} parent=1 // pred_check_branch
      %410 = sbr.rel (0) target = $region49
    $region48: #{_lambda_.11} parent=1 // pred_region
      %412 = dma.done [#allocation4], 128
    $region49: #{_lambda_.11} parent=1 // pred_fallthru
      _
    %413 = vsyncpa [#allocation4], 1

</llo_original>
